<compile_context>
chip_gen: v7x
topology: tpu7x:2x2x1
jax: 0.10.0
libtpu: 0.0.40
codegen_flags: <defaults>
</compile_context>

<pallas_src>
import functools

import jax
import jax.numpy as jnp
from jax import lax
from jax.experimental import pallas as pl
from jax.experimental.pallas import tpu as pltpu
import numpy as np


def ecbam_kernel(x_ref, wmask3_ref, dwb_ref, spk_ref, spb_ref,
                 w1_ref, b1_ref, w2_ref, b2_ref, out_ref,
                 *, PB, C, H, W, use_matmul_7x7):
    HW = H * W
    x = x_ref[0]                                   # (PB*C, HW) f32, lane-dense

    def shift_flat(v, dy, dx):
        # value at flattened dest position p becomes the value at p + dy*W + dx
        s = dy * W + dx
        return pltpu.roll(v, shift=(-s) % HW, axis=1)

    # ---- depthwise 3x3 conv (groups=C), zero padding=1 ---------------------
    # weight * border-mask constants pre-folded in wrapper -> one FMA per tap.
    xc = wmask3_ref[4] * x + dwb_ref[...]          # centre tap + bias
    for dy in (-1, 0, 1):
        for dx in (-1, 0, 1):
            if dy == 0 and dx == 0:
                continue
            k = (dy + 1) * 3 + (dx + 1)
            xc = xc + wmask3_ref[k] * shift_flat(x, dy, dx)

    # ---- channel-wise mean / max maps, per packed image (in registers) -----
    avg_rows, max_rows = [], []
    for b in range(PB):
        blk = xc[b * C:(b + 1) * C]                # (C, HW), static slice
        avg_rows.append(jnp.mean(blk, axis=0, keepdims=True))
        max_rows.append(jnp.max(blk, axis=0, keepdims=True))
    maps_avg = avg_rows[0] if PB == 1 else jnp.concatenate(avg_rows, axis=0)
    maps_max = max_rows[0] if PB == 1 else jnp.concatenate(max_rows, axis=0)

    # ---- spatial attention: 7x7 conv over (mean, max) maps -----------------
    if use_matmul_7x7:
        # conv as two MXU matmuls against (HW, HW) banded matrices with the
        # 7x7 weights and zero padding baked in (no XLU rolls at all).
        sconv = (jnp.dot(maps_avg, spk_ref[0],
                         precision=jax.lax.Precision.HIGHEST,
                         preferred_element_type=jnp.float32) +
                 jnp.dot(maps_max, spk_ref[1],
                         precision=jax.lax.Precision.HIGHEST,
                         preferred_element_type=jnp.float32))      # (PB, HW)
    else:
        # fallback for large HW: 49 rolls + pre-folded weight*mask FMAs.
        # (If spills show up at very large HW, switch this unrolled loop to a
        #  lax.fori_loop with dynamic spk_ref[k] indexing to bound live ranges.)
        maps = jnp.concatenate([maps_avg, maps_max], axis=0)       # (2PB, HW)
        sacc = spk_ref[24] * maps                                  # centre tap
        for dy in range(-3, 4):
            for dx in range(-3, 4):
                if dy == 0 and dx == 0:
                    continue
                k = (dy + 3) * 7 + (dx + 3)
                sacc = sacc + spk_ref[k] * shift_flat(maps, dy, dx)
        sconv = sacc[0:PB] + sacc[PB:2 * PB]       # sum the 2 conv in-channels

    sa = jax.nn.sigmoid(sconv + spb_ref[0])        # (PB, HW)

    # ---- channel attention (tiny MLP on VPU) + combine, per packed image ---
    outs = []
    for b in range(PB):
        xcb = xc[b * C:(b + 1) * C]                # (C, HW)
        y = xcb * sa[b:b + 1]                      # x * spatial_att
        avg_c = jnp.mean(y, axis=1, keepdims=True)                 # (C, 1)
        max_c = jnp.max(y, axis=1, keepdims=True)                  # (C, 1)
        z1 = w1_ref[0] * avg_c + w1_ref[1] * max_c                 # (C, hidden)
        h = jnp.maximum(jnp.sum(z1, axis=0, keepdims=True) + b1_ref[...], 0.0)
        ca = jax.nn.sigmoid(jnp.sum(w2_ref[...] * h, axis=1, keepdims=True)
                            + b2_ref[...])                         # (C, 1)
        outs.append(y * ca)                        # = xc * (channel * spatial)
    out_val = outs[0] if PB == 1 else jnp.concatenate(outs, axis=0)
    out_ref[0] = out_val.astype(out_ref.dtype)     # single lane-dense store


def _pixel_coords(H, W):
    yy = jnp.repeat(jnp.arange(H, dtype=jnp.int32), W)
    xx = jnp.tile(jnp.arange(W, dtype=jnp.int32), H)
    return yy, xx


def _border_masks(H, W, r):
    """(K*K, HW) float32 destination-validity masks (zero 'SAME' padding)."""
    yy, xx = _pixel_coords(H, W)
    masks = []
    for dy in range(-r, r + 1):
        for dx in range(-r, r + 1):
            m = ((yy + dy >= 0) & (yy + dy <= H - 1) &
                 (xx + dx >= 0) & (xx + dx <= W - 1))
            masks.append(m.astype(jnp.float32))
    return jnp.stack(masks, axis=0)


def _conv_matrix(w2d, H, W):
    """(HW, HW) matrix M with M[q, p] = w2d[yq-yp+r, xq-xp+r] if |dy|,|dx|<=r
    else 0.  Right-multiplying a flattened map by M is the 'SAME' 2-D conv
    (zero padding is implicit: out-of-image sources simply do not exist)."""
    K = w2d.shape[0]
    r = K // 2
    yy, xx = _pixel_coords(H, W)
    dY = yy[:, None] - yy[None, :]                 # [q, p] = yq - yp
    dX = xx[:, None] - xx[None, :]
    inb = (jnp.abs(dY) <= r) & (jnp.abs(dX) <= r)
    iy = jnp.clip(dY + r, 0, K - 1)
    ix = jnp.clip(dX + r, 0, K - 1)
    return jnp.where(inb, w2d[iy, ix], 0.0).astype(jnp.float32)


def ecbam_pallas(x_nchw, params, *, batch_pack=None, use_matmul_7x7=None):
    dw_w, dw_b, sp_w, sp_b, w1, b1, w2, b2 = params
    B, C, H, W = x_nchw.shape
    hidden = w1.shape[0]
    HW = H * W

    if batch_pack is None:
        # pack 2 images into the 8 f32 sublanes when it still leaves >= 2
        # "parallel" grid steps (v7x has 2 TensorCores); on single-TC v5e/v6e
        # callers may force batch_pack=2 even for B == 2.
        batch_pack = 2 if (B % 2 == 0 and B >= 4) else 1
    PB = batch_pack
    assert B % PB == 0, "batch_pack must divide batch size"
    PC = PB * C

    if use_matmul_7x7 is None:
        # dense conv matrices cost 2*HW^2*4 bytes of VMEM constants; cap so
        # they stay small against v7x's 64 MiB physical VMEM.
        use_matmul_7x7 = HW <= 1024

    # lane-dense layout: NCHW -> (B/PB, PB*C, H*W) is a free contiguous reshape
    x3 = x_nchw.astype(jnp.float32).reshape(B // PB, PC, HW)

    # depthwise 3x3: fold per-tap weight and zero-padding mask into constants
    m3 = _border_masks(H, W, 1)                                    # (9, HW)
    w3 = dw_w.reshape(C, 9).astype(jnp.float32)                    # (C, 9)
    wmask3 = jnp.transpose(w3)[:, :, None] * m3[:, None, :]        # (9, C, HW)
    wmask3 = jnp.tile(wmask3, (1, PB, 1))                          # (9, PC, HW)
    dwb = jnp.tile(dw_b.reshape(C, 1).astype(jnp.float32), (PB, 1))

    # 7x7 spatial-attention conv parameters
    if use_matmul_7x7:
        k7a = _conv_matrix(sp_w[0, 0].astype(jnp.float32), H, W)
        k7m = _conv_matrix(sp_w[0, 1].astype(jnp.float32), H, W)
        spk = jnp.stack([k7a, k7m], axis=0)                        # (2, HW, HW)
    else:
        m7 = _border_masks(H, W, 3)                                # (49, HW)
        w7 = sp_w.reshape(2, 49).astype(jnp.float32)
        spk = jnp.transpose(w7)[:, :, None] * m7[:, None, :]       # (49, 2, HW)
        spk = jnp.repeat(spk, PB, axis=1)                          # (49,2PB,HW)
    spb = sp_b.reshape(1).astype(jnp.float32)

    # tiny channel-attention MLP (hidden = C // reduction_ratio)
    w1s = jnp.stack([jnp.transpose(w1[:, :C]),
                     jnp.transpose(w1[:, C:])], axis=0).astype(jnp.float32)
    b1r = b1.reshape(1, hidden).astype(jnp.float32)
    w2c = w2.astype(jnp.float32)                                   # (C, hidden)
    b2c = b2.reshape(C, 1).astype(jnp.float32)

    kernel = functools.partial(ecbam_kernel, PB=PB, C=C, H=H, W=W,
                               use_matmul_7x7=use_matmul_7x7)

    out3 = pl.pallas_call(
        kernel,
        out_shape=jax.ShapeDtypeStruct((B // PB, PC, HW), jnp.float32),
        grid=(B // PB,),
        in_specs=[
            pl.BlockSpec((1, PC, HW), lambda b: (b, 0, 0)),      # x (packed)
            pl.BlockSpec((9, PC, HW), lambda b: (0, 0, 0)),      # dw w*mask
            pl.BlockSpec((PC, 1), lambda b: (0, 0)),             # dw bias
            pl.BlockSpec(spk.shape, lambda b: (0, 0, 0)),        # 7x7 params
            pl.BlockSpec(memory_space=pltpu.MemorySpace.SMEM),   # 7x7 bias
            pl.BlockSpec((2, C, hidden), lambda b: (0, 0, 0)),   # fc1 (avg,max)
            pl.BlockSpec((1, hidden), lambda b: (0, 0)),         # fc1 bias
            pl.BlockSpec((C, hidden), lambda b: (0, 0)),         # fc2 weight
            pl.BlockSpec((C, 1), lambda b: (0, 0)),              # fc2 bias
        ],
        out_specs=pl.BlockSpec((1, PC, HW), lambda b: (b, 0, 0)),
        compiler_params=pltpu.CompilerParams(
            dimension_semantics=("parallel",)),    # batches across TCs on v7x
    )(x3, wmask3, dwb, spk, spb, w1s, b1r, w2c, b2c)

    return out3.reshape(B, C, H, W)


def ecbam_reference(x, params):
    """Pure-JAX reference (mirrors the PyTorch forward exactly, NCHW)."""
    dw_w, dw_b, sp_w, sp_b, w1, b1, w2, b2 = params
    B, C, H, W = x.shape
    xc = lax.conv_general_dilated(
        x, dw_w, (1, 1), 'SAME', feature_group_count=C,
        dimension_numbers=('NCHW', 'OIHW', 'NCHW')) + dw_b[None, :, None, None]
    avg_map = jnp.mean(xc, axis=1, keepdims=True)
    max_map = jnp.max(xc, axis=1, keepdims=True)
    comb = jnp.concatenate([avg_map, max_map], axis=1)
    sconv = lax.conv_general_dilated(
        comb, sp_w, (1, 1), 'SAME',
        dimension_numbers=('NCHW', 'OIHW', 'NCHW')) + sp_b[None, :, None, None]
    sa = jax.nn.sigmoid(sconv)
    y = xc * sa
    avg = jnp.mean(y, axis=(2, 3))
    mx = jnp.max(y, axis=(2, 3))
    combined = jnp.concatenate([avg, mx], axis=1)
    h = jax.nn.relu(combined @ w1.T + b1)
    ca = jax.nn.sigmoid(h @ w2.T + b2)
    att = ca[:, :, None, None] * sa
    return xc * att


if __name__ == "__main__":
    C, H, W = 4, 16, 16
    reduction_ratio = 2          # channels // reduction_ratio must be >= 1
    hidden = C // reduction_ratio

    key = jax.random.PRNGKey(0)
    ks = jax.random.split(key, 10)

    # deterministic synthetic parameters (shapes match nn.Module __init__)
    dw_w = 0.2 * jax.random.normal(ks[1], (C, 1, 3, 3), jnp.float32)   # Conv2d(C,C,3,groups=C)
    dw_b = 0.1 * jax.random.normal(ks[2], (C,), jnp.float32)
    sp_w = 0.1 * jax.random.normal(ks[3], (1, 2, 7, 7), jnp.float32)   # Conv2d(2,1,7)
    sp_b = 0.1 * jax.random.normal(ks[4], (1,), jnp.float32)
    w1 = 0.3 * jax.random.normal(ks[5], (hidden, 2 * C), jnp.float32)  # Linear(2C, hidden)
    b1 = 0.1 * jax.random.normal(ks[6], (hidden,), jnp.float32)
    w2 = 0.3 * jax.random.normal(ks[7], (C, hidden), jnp.float32)      # Linear(hidden, C)
    b2 = 0.1 * jax.random.normal(ks[8], (C,), jnp.float32)
    params = (dw_w, dw_b, sp_w, sp_b, w1, b1, w2, b2)

    x2 = jax.random.normal(ks[0], (2, C, H, W), jnp.float32)
    x4 = jax.random.normal(ks[9], (4, C, H, W), jnp.float32)

    # (1) B=2: grid=(2,) "parallel" (keeps both v7x TCs busy), MXU 7x7 path
    out2 = jax.block_until_ready(ecbam_pallas(x2, params))
    ref2 = jax.block_until_ready(ecbam_reference(x2, params))
    np.testing.assert_allclose(np.asarray(out2), np.asarray(ref2),
                               rtol=2e-4, atol=2e-4)

    # (2) B=4: two images packed per grid step (full 8 f32 sublanes), MXU path
    out4 = jax.block_until_ready(ecbam_pallas(x4, params))
    ref4 = jax.block_until_ready(ecbam_reference(x4, params))
    np.testing.assert_allclose(np.asarray(out4), np.asarray(ref4),
                               rtol=2e-4, atol=2e-4)

    # (3) weighted-mask roll fallback path (used when HW is too large for the
    #     dense conv-matrix trick) — verified at small HW for correctness.
    out2b = jax.block_until_ready(ecbam_pallas(x2, params, use_matmul_7x7=False))
    np.testing.assert_allclose(np.asarray(out2b), np.asarray(ref2),
                               rtol=2e-4, atol=2e-4)

    print("KERNEL_OK")
</pallas_src>

<mosaic_0001>
module attributes {stable_mosaic.version = 11 : i64} {
  func.func @ecbam_kernel(%arg0: i32, %arg1: memref<1x4x256xf32, #tpu.memory_space<vmem>>, %arg2: memref<9x4x256xf32, #tpu.memory_space<vmem>>, %arg3: memref<4x1xf32, #tpu.memory_space<vmem>>, %arg4: memref<2x256x256xf32, #tpu.memory_space<vmem>>, %arg5: memref<1xf32, #tpu.memory_space<smem>>, %arg6: memref<2x4x2xf32, #tpu.memory_space<vmem>>, %arg7: memref<1x2xf32, #tpu.memory_space<vmem>>, %arg8: memref<4x2xf32, #tpu.memory_space<vmem>>, %arg9: memref<4x1xf32, #tpu.memory_space<vmem>>, %arg10: memref<1x4x256xf32, #tpu.memory_space<vmem>>) attributes {dimension_semantics = [#tpu.dimension_semantics<parallel>], iteration_bounds = array<i64: 2>, scalar_prefetch = 0 : i64, scratch_operands = 0 : i64, tpu.core_type = #tpu.core_type<tc>, window_params = [{transform_indices = @transform_0, window_bounds = array<i64: 1, 4, 256>}, {pipeline_mode = #tpu.pipeline_mode<synchronous>, transform_indices = @transform_1, window_bounds = array<i64: 9, 4, 256>}, {pipeline_mode = #tpu.pipeline_mode<synchronous>, transform_indices = @transform_2, window_bounds = array<i64: 4, 1>}, {pipeline_mode = #tpu.pipeline_mode<synchronous>, transform_indices = @transform_3, window_bounds = array<i64: 2, 256, 256>}, {transform_indices = @transform_4, window_bounds = array<i64: 1>}, {pipeline_mode = #tpu.pipeline_mode<synchronous>, transform_indices = @transform_5, window_bounds = array<i64: 2, 4, 2>}, {pipeline_mode = #tpu.pipeline_mode<synchronous>, transform_indices = @transform_6, window_bounds = array<i64: 1, 2>}, {pipeline_mode = #tpu.pipeline_mode<synchronous>, transform_indices = @transform_7, window_bounds = array<i64: 4, 2>}, {pipeline_mode = #tpu.pipeline_mode<synchronous>, transform_indices = @transform_8, window_bounds = array<i64: 4, 1>}, {transform_indices = @transform_9, window_bounds = array<i64: 1, 4, 256>}]} {
    %c0 = arith.constant 0 : index
    %c0_0 = arith.constant 0 : index
    %c0_1 = arith.constant 0 : index
    %0 = vector.load %arg1[%c0, %c0_0, %c0_1] : memref<1x4x256xf32, #tpu.memory_space<vmem>>, vector<1x4x256xf32>
    %1 = vector.shape_cast %0 : vector<1x4x256xf32> to vector<4x256xf32>
    %c4 = arith.constant 4 : index
    %c0_2 = arith.constant 0 : index
    %c0_3 = arith.constant 0 : index
    %2 = vector.load %arg2[%c4, %c0_2, %c0_3] : memref<9x4x256xf32, #tpu.memory_space<vmem>>, vector<1x4x256xf32>
    %3 = vector.shape_cast %2 : vector<1x4x256xf32> to vector<4x256xf32>
    %4 = arith.mulf %3, %1 : vector<4x256xf32>
    %c0_4 = arith.constant 0 : index
    %c0_5 = arith.constant 0 : index
    %5 = vector.load %arg3[%c0_4, %c0_5] : memref<4x1xf32, #tpu.memory_space<vmem>>, vector<4x1xf32>
    %6 = vector.broadcast %5 : vector<4x1xf32> to vector<4x256xf32>
    %7 = arith.addf %4, %6 : vector<4x256xf32>
    %c0_6 = arith.constant 0 : index
    %c0_7 = arith.constant 0 : index
    %c0_8 = arith.constant 0 : index
    %8 = vector.load %arg2[%c0_6, %c0_7, %c0_8] : memref<9x4x256xf32, #tpu.memory_space<vmem>>, vector<1x4x256xf32>
    %9 = vector.shape_cast %8 : vector<1x4x256xf32> to vector<4x256xf32>
    %c17_i32 = arith.constant 17 : i32
    %10 = tpu.dynamic_rotate %1 by %c17_i32 dim 1 : vector<4x256xf32>, i32 -> vector<4x256xf32>
    %11 = arith.mulf %9, %10 : vector<4x256xf32>
    %12 = arith.addf %7, %11 : vector<4x256xf32>
    %c1 = arith.constant 1 : index
    %c0_9 = arith.constant 0 : index
    %c0_10 = arith.constant 0 : index
    %13 = vector.load %arg2[%c1, %c0_9, %c0_10] : memref<9x4x256xf32, #tpu.memory_space<vmem>>, vector<1x4x256xf32>
    %14 = vector.shape_cast %13 : vector<1x4x256xf32> to vector<4x256xf32>
    %c16_i32 = arith.constant 16 : i32
    %15 = tpu.dynamic_rotate %1 by %c16_i32 dim 1 : vector<4x256xf32>, i32 -> vector<4x256xf32>
    %16 = arith.mulf %14, %15 : vector<4x256xf32>
    %17 = arith.addf %12, %16 : vector<4x256xf32>
    %c2 = arith.constant 2 : index
    %c0_11 = arith.constant 0 : index
    %c0_12 = arith.constant 0 : index
    %18 = vector.load %arg2[%c2, %c0_11, %c0_12] : memref<9x4x256xf32, #tpu.memory_space<vmem>>, vector<1x4x256xf32>
    %19 = vector.shape_cast %18 : vector<1x4x256xf32> to vector<4x256xf32>
    %c15_i32 = arith.constant 15 : i32
    %20 = tpu.dynamic_rotate %1 by %c15_i32 dim 1 : vector<4x256xf32>, i32 -> vector<4x256xf32>
    %21 = arith.mulf %19, %20 : vector<4x256xf32>
    %22 = arith.addf %17, %21 : vector<4x256xf32>
    %c3 = arith.constant 3 : index
    %c0_13 = arith.constant 0 : index
    %c0_14 = arith.constant 0 : index
    %23 = vector.load %arg2[%c3, %c0_13, %c0_14] : memref<9x4x256xf32, #tpu.memory_space<vmem>>, vector<1x4x256xf32>
    %24 = vector.shape_cast %23 : vector<1x4x256xf32> to vector<4x256xf32>
    %c1_i32 = arith.constant 1 : i32
    %25 = tpu.dynamic_rotate %1 by %c1_i32 dim 1 : vector<4x256xf32>, i32 -> vector<4x256xf32>
    %26 = arith.mulf %24, %25 : vector<4x256xf32>
    %27 = arith.addf %22, %26 : vector<4x256xf32>
    %c5 = arith.constant 5 : index
    %c0_15 = arith.constant 0 : index
    %c0_16 = arith.constant 0 : index
    %28 = vector.load %arg2[%c5, %c0_15, %c0_16] : memref<9x4x256xf32, #tpu.memory_space<vmem>>, vector<1x4x256xf32>
    %29 = vector.shape_cast %28 : vector<1x4x256xf32> to vector<4x256xf32>
    %c255_i32 = arith.constant 255 : i32
    %30 = tpu.dynamic_rotate %1 by %c255_i32 dim 1 : vector<4x256xf32>, i32 -> vector<4x256xf32>
    %31 = arith.mulf %29, %30 : vector<4x256xf32>
    %32 = arith.addf %27, %31 : vector<4x256xf32>
    %c6 = arith.constant 6 : index
    %c0_17 = arith.constant 0 : index
    %c0_18 = arith.constant 0 : index
    %33 = vector.load %arg2[%c6, %c0_17, %c0_18] : memref<9x4x256xf32, #tpu.memory_space<vmem>>, vector<1x4x256xf32>
    %34 = vector.shape_cast %33 : vector<1x4x256xf32> to vector<4x256xf32>
    %c241_i32 = arith.constant 241 : i32
    %35 = tpu.dynamic_rotate %1 by %c241_i32 dim 1 : vector<4x256xf32>, i32 -> vector<4x256xf32>
    %36 = arith.mulf %34, %35 : vector<4x256xf32>
    %37 = arith.addf %32, %36 : vector<4x256xf32>
    %c7 = arith.constant 7 : index
    %c0_19 = arith.constant 0 : index
    %c0_20 = arith.constant 0 : index
    %38 = vector.load %arg2[%c7, %c0_19, %c0_20] : memref<9x4x256xf32, #tpu.memory_space<vmem>>, vector<1x4x256xf32>
    %39 = vector.shape_cast %38 : vector<1x4x256xf32> to vector<4x256xf32>
    %c240_i32 = arith.constant 240 : i32
    %40 = tpu.dynamic_rotate %1 by %c240_i32 dim 1 : vector<4x256xf32>, i32 -> vector<4x256xf32>
    %41 = arith.mulf %39, %40 : vector<4x256xf32>
    %42 = arith.addf %37, %41 : vector<4x256xf32>
    %c8 = arith.constant 8 : index
    %c0_21 = arith.constant 0 : index
    %c0_22 = arith.constant 0 : index
    %43 = vector.load %arg2[%c8, %c0_21, %c0_22] : memref<9x4x256xf32, #tpu.memory_space<vmem>>, vector<1x4x256xf32>
    %44 = vector.shape_cast %43 : vector<1x4x256xf32> to vector<4x256xf32>
    %c239_i32 = arith.constant 239 : i32
    %45 = tpu.dynamic_rotate %1 by %c239_i32 dim 1 : vector<4x256xf32>, i32 -> vector<4x256xf32>
    %46 = arith.mulf %44, %45 : vector<4x256xf32>
    %47 = arith.addf %42, %46 : vector<4x256xf32>
    %cst = arith.constant dense<0.000000e+00> : vector<256xf32>
    %48 = vector.multi_reduction <add>, %47, %cst [0] : vector<4x256xf32> to vector<256xf32>
    %49 = vector.shape_cast %48 : vector<256xf32> to vector<1x256xf32>
    %cst_23 = arith.constant 4.000000e+00 : f32
    %50 = vector.broadcast %cst_23 : f32 to vector<1x256xf32>
    %51 = arith.divf %49, %50 : vector<1x256xf32>
    %cst_24 = arith.constant dense<0xFF800000> : vector<256xf32>
    %52 = vector.multi_reduction <maximumf>, %47, %cst_24 [0] : vector<4x256xf32> to vector<256xf32>
    %53 = vector.shape_cast %52 : vector<256xf32> to vector<1x256xf32>
    %c0_25 = arith.constant 0 : index
    %c0_26 = arith.constant 0 : index
    %c0_27 = arith.constant 0 : index
    %54 = vector.load %arg4[%c0_25, %c0_26, %c0_27] : memref<2x256x256xf32, #tpu.memory_space<vmem>>, vector<1x256x256xf32>
    %55 = vector.shape_cast %54 : vector<1x256x256xf32> to vector<256x256xf32>
    %cst_28 = arith.constant dense<0.000000e+00> : vector<1x256xf32>
    %56 = tpu.matmul %51, %55, %cst_28 {dimension_numbers = #tpu.dot_dimension_numbers<[1], [0], [0], [1], [0, 0, 1, 1], [], []>, precision = #tpu.contract_precision<fp32>} : vector<1x256xf32>, vector<256x256xf32>, vector<1x256xf32> -> vector<1x256xf32>
    %c1_29 = arith.constant 1 : index
    %c0_30 = arith.constant 0 : index
    %c0_31 = arith.constant 0 : index
    %57 = vector.load %arg4[%c1_29, %c0_30, %c0_31] : memref<2x256x256xf32, #tpu.memory_space<vmem>>, vector<1x256x256xf32>
    %58 = vector.shape_cast %57 : vector<1x256x256xf32> to vector<256x256xf32>
    %cst_32 = arith.constant dense<0.000000e+00> : vector<1x256xf32>
    %59 = tpu.matmul %53, %58, %cst_32 {dimension_numbers = #tpu.dot_dimension_numbers<[1], [0], [0], [1], [0, 0, 1, 1], [], []>, precision = #tpu.contract_precision<fp32>} : vector<1x256xf32>, vector<256x256xf32>, vector<1x256xf32> -> vector<1x256xf32>
    %60 = arith.addf %56, %59 : vector<1x256xf32>
    %c0_33 = arith.constant 0 : index
    %61 = memref.load %arg5[%c0_33] : memref<1xf32, #tpu.memory_space<smem>>
    %62 = vector.broadcast %61 : f32 to vector<1x256xf32>
    %63 = arith.addf %60, %62 : vector<1x256xf32>
    %64 = arith.negf %63 : vector<1x256xf32>
    %65 = math.exp %64 : vector<1x256xf32>
    %cst_34 = arith.constant 1.000000e+00 : f32
    %66 = vector.broadcast %cst_34 : f32 to vector<1x256xf32>
    %67 = arith.addf %66, %65 : vector<1x256xf32>
    %68 = arith.divf %66, %67 : vector<1x256xf32>
    %69 = vector.broadcast %68 : vector<1x256xf32> to vector<4x256xf32>
    %70 = arith.mulf %47, %69 : vector<4x256xf32>
    %cst_35 = arith.constant dense<0.000000e+00> : vector<4xf32>
    %71 = vector.multi_reduction <add>, %70, %cst_35 [1] : vector<4x256xf32> to vector<4xf32>
    %72 = vector.shape_cast %71 : vector<4xf32> to vector<4x1xf32>
    %cst_36 = arith.constant 2.560000e+02 : f32
    %73 = vector.broadcast %cst_36 : f32 to vector<4x1xf32>
    %74 = arith.divf %72, %73 : vector<4x1xf32>
    %cst_37 = arith.constant dense<0xFF800000> : vector<4xf32>
    %75 = vector.multi_reduction <maximumf>, %70, %cst_37 [1] : vector<4x256xf32> to vector<4xf32>
    %76 = vector.shape_cast %75 : vector<4xf32> to vector<4x1xf32>
    %c0_38 = arith.constant 0 : index
    %c0_39 = arith.constant 0 : index
    %c0_40 = arith.constant 0 : index
    %77 = vector.load %arg6[%c0_38, %c0_39, %c0_40] : memref<2x4x2xf32, #tpu.memory_space<vmem>>, vector<1x4x2xf32>
    %78 = vector.shape_cast %77 : vector<1x4x2xf32> to vector<4x2xf32>
    %79 = vector.broadcast %74 : vector<4x1xf32> to vector<4x2xf32>
    %80 = arith.mulf %78, %79 : vector<4x2xf32>
    %c1_41 = arith.constant 1 : index
    %c0_42 = arith.constant 0 : index
    %c0_43 = arith.constant 0 : index
    %81 = vector.load %arg6[%c1_41, %c0_42, %c0_43] : memref<2x4x2xf32, #tpu.memory_space<vmem>>, vector<1x4x2xf32>
    %82 = vector.shape_cast %81 : vector<1x4x2xf32> to vector<4x2xf32>
    %83 = vector.broadcast %76 : vector<4x1xf32> to vector<4x2xf32>
    %84 = arith.mulf %82, %83 : vector<4x2xf32>
    %85 = arith.addf %80, %84 : vector<4x2xf32>
    %cst_44 = arith.constant dense<0.000000e+00> : vector<2xf32>
    %86 = vector.multi_reduction <add>, %85, %cst_44 [0] : vector<4x2xf32> to vector<2xf32>
    %87 = vector.shape_cast %86 : vector<2xf32> to vector<1x2xf32>
    %c0_45 = arith.constant 0 : index
    %c0_46 = arith.constant 0 : index
    %88 = vector.load %arg7[%c0_45, %c0_46] : memref<1x2xf32, #tpu.memory_space<vmem>>, vector<1x2xf32>
    %89 = arith.addf %87, %88 : vector<1x2xf32>
    %cst_47 = arith.constant 0.000000e+00 : f32
    %90 = vector.broadcast %cst_47 : f32 to vector<1x2xf32>
    %91 = arith.maximumf %89, %90 : vector<1x2xf32>
    %c0_48 = arith.constant 0 : index
    %c0_49 = arith.constant 0 : index
    %92 = vector.load %arg8[%c0_48, %c0_49] : memref<4x2xf32, #tpu.memory_space<vmem>>, vector<4x2xf32>
    %93 = vector.broadcast %91 : vector<1x2xf32> to vector<4x2xf32>
    %94 = arith.mulf %92, %93 : vector<4x2xf32>
    %cst_50 = arith.constant dense<0.000000e+00> : vector<4xf32>
    %95 = vector.multi_reduction <add>, %94, %cst_50 [1] : vector<4x2xf32> to vector<4xf32>
    %96 = vector.shape_cast %95 : vector<4xf32> to vector<4x1xf32>
    %c0_51 = arith.constant 0 : index
    %c0_52 = arith.constant 0 : index
    %97 = vector.load %arg9[%c0_51, %c0_52] : memref<4x1xf32, #tpu.memory_space<vmem>>, vector<4x1xf32>
    %98 = arith.addf %96, %97 : vector<4x1xf32>
    %99 = arith.negf %98 : vector<4x1xf32>
    %100 = math.exp %99 : vector<4x1xf32>
    %cst_53 = arith.constant 1.000000e+00 : f32
    %101 = vector.broadcast %cst_53 : f32 to vector<4x1xf32>
    %102 = arith.addf %101, %100 : vector<4x1xf32>
    %103 = arith.divf %101, %102 : vector<4x1xf32>
    %104 = vector.broadcast %103 : vector<4x1xf32> to vector<4x256xf32>
    %105 = arith.mulf %70, %104 : vector<4x256xf32>
    %c0_54 = arith.constant 0 : index
    %c0_55 = arith.constant 0 : index
    %c0_56 = arith.constant 0 : index
    %106 = vector.load %arg10[%c0_54, %c0_55, %c0_56] : memref<1x4x256xf32, #tpu.memory_space<vmem>>, vector<1x4x256xf32>
    %107 = vector.shape_cast %106 : vector<1x4x256xf32> to vector<4x256xf32>
    %108 = vector.shape_cast %105 : vector<4x256xf32> to vector<1x4x256xf32>
    tpu.vector_store %arg10[%c0_54, %c0_55, %c0_56], %108 {strides = array<i32>} : memref<1x4x256xf32, #tpu.memory_space<vmem>>, vector<1x4x256xf32>,
    return
  }
  func.func @transform_0(%arg0: i32) -> (i32, i32, i32) {
    %c0_i32 = arith.constant 0 : i32
    %c0_i32_0 = arith.constant 0 : i32
    %c0_i32_1 = arith.constant 0 : i32
    return %arg0, %c0_i32, %c0_i32_0 : i32, i32, i32
  }
  func.func @transform_1(%arg0: i32) -> (i32, i32, i32) {
    %c0_i32 = arith.constant 0 : i32
    %c0_i32_0 = arith.constant 0 : i32
    %c0_i32_1 = arith.constant 0 : i32
    %c0_i32_2 = arith.constant 0 : i32
    return %c0_i32, %c0_i32_0, %c0_i32_1 : i32, i32, i32
  }
  func.func @transform_2(%arg0: i32) -> (i32, i32) {
    %c0_i32 = arith.constant 0 : i32
    %c0_i32_0 = arith.constant 0 : i32
    %c0_i32_1 = arith.constant 0 : i32
    return %c0_i32, %c0_i32_0 : i32, i32
  }
  func.func @transform_3(%arg0: i32) -> (i32, i32, i32) {
    %c0_i32 = arith.constant 0 : i32
    %c0_i32_0 = arith.constant 0 : i32
    %c0_i32_1 = arith.constant 0 : i32
    %c0_i32_2 = arith.constant 0 : i32
    return %c0_i32, %c0_i32_0, %c0_i32_1 : i32, i32, i32
  }
  func.func @transform_4(%arg0: i32) -> i32 {
    %c0_i32 = arith.constant 0 : i32
    %c0_i32_0 = arith.constant 0 : i32
    return %c0_i32 : i32
  }
  func.func @transform_5(%arg0: i32) -> (i32, i32, i32) {
    %c0_i32 = arith.constant 0 : i32
    %c0_i32_0 = arith.constant 0 : i32
    %c0_i32_1 = arith.constant 0 : i32
    %c0_i32_2 = arith.constant 0 : i32
    return %c0_i32, %c0_i32_0, %c0_i32_1 : i32, i32, i32
  }
  func.func @transform_6(%arg0: i32) -> (i32, i32) {
    %c0_i32 = arith.constant 0 : i32
    %c0_i32_0 = arith.constant 0 : i32
    %c0_i32_1 = arith.constant 0 : i32
    return %c0_i32, %c0_i32_0 : i32, i32
  }
  func.func @transform_7(%arg0: i32) -> (i32, i32) {
    %c0_i32 = arith.constant 0 : i32
    %c0_i32_0 = arith.constant 0 : i32
    %c0_i32_1 = arith.constant 0 : i32
    return %c0_i32, %c0_i32_0 : i32, i32
  }
  func.func @transform_8(%arg0: i32) -> (i32, i32) {
    %c0_i32 = arith.constant 0 : i32
    %c0_i32_0 = arith.constant 0 : i32
    %c0_i32_1 = arith.constant 0 : i32
    return %c0_i32, %c0_i32_0 : i32, i32
  }
  func.func @transform_9(%arg0: i32) -> (i32, i32, i32) {
    %c0_i32 = arith.constant 0 : i32
    %c0_i32_0 = arith.constant 0 : i32
    %c0_i32_1 = arith.constant 0 : i32
    return %arg0, %c0_i32, %c0_i32_0 : i32, i32, i32
  }
}

</mosaic_0001>

<llo_original>
// kernel: tpu_custom_call.1
$region0: #{tpu_custom_call.1}
  #allocation0 [shape = 'u32[]', space=smem, size = 0x4, offset = 0x4, fixed_abs, tag = 'smem constant byte address 0x4 - core index']
  #allocation1 [shape = 'u32[144,128]{1,0:T(1,128)}', space=vmem, size = 0x12000, scoped, tag = 'internal scratch']
  #allocation2 [shape = 'f32[1]{0:T(128)S(6)}', space=smem, size = 0x200, scoped, tag = 'scoped memory for tpu_custom_call.1']
  %s0 = inlined_call_operand.vmem [shape: f32[2,4,256], index: 0, kind: input, shape index: {}]
  %s1 = inlined_call_operand.hbm [shape: f32[9,4,256], index: 1, kind: input, shape index: {}]
  %s2 = inlined_call_operand.vmem [shape: f32[4,1], index: 2, kind: input, shape index: {}]
  %s3 = inlined_call_operand.hbm [shape: f32[2,256,256], index: 3, kind: input, shape index: {}]
  %s4 = inlined_call_operand.<no memory space> [shape: f32[1], index: 4, kind: input, shape index: {}]
  %s5 = inlined_call_operand.vmem [shape: f32[2,4,2], index: 5, kind: input, shape index: {}]
  %s6 = inlined_call_operand.vmem [shape: f32[1,2], index: 6, kind: input, shape index: {}]
  %s7 = inlined_call_operand.vmem [shape: f32[4,2], index: 7, kind: input, shape index: {}]
  %s8 = inlined_call_operand.vmem [shape: f32[4,1], index: 8, kind: input, shape index: {}]
  %s9 = inlined_call_operand.hbm [shape: f32[2,4,256], index: 9, kind: output, shape index: {}]
  %s10 = sld [smem:[#allocation0]]
  $region77: #{tpu_custom_call.1} parent=0
    _
  %s12 = ssub.s32 1, %s10
  %s13 = scalar_select 0, %s12, %s10
  %14 = sst [smem:[#allocation2]] %s4
  $region1: #{tpu_custom_call.1} parent=0
    #allocation3 [shape = 'u8[36864]{0}', space=vmem, size = 0x9000, scoped, tag = 'input window, operand 1, single buffered']
    #allocation4 [shape = 's32[2]{0}', space=sflag, size = 0x8, scoped, tag = 'scoped memory for tpu_custom_call.1']
    #allocation5 [shape = 's32[2]{0}', space=sflag, size = 0x8, scoped, tag = 'scoped memory for tpu_custom_call.1']
    #allocation6 [shape = 'u8[524288]{0}', space=vmem, size = 0x80000, scoped, tag = 'input window, operand 3, single buffered']
    #allocation7 [shape = 's32[1]{0}', space=sflag, size = 0x4, scoped, tag = 'scoped memory for tpu_custom_call.1']
    #allocation8 [shape = 'u8[8192]{0}', space=vmem, size = 0x2000, scoped, tag = 'output window, operand 0']
    %15 = vsyncpa [#allocation4], 0
    %16 = vsyncpa [#allocation7], 0
    %17 = vsyncpa [#allocation5], 0
    %s18 = scalar_lea.sflag [#allocation5], 1
    %19 = vsyncpa %s18, 0
    loop: start=0, step=1, limit=4
    $region2: #{tpu_custom_call.1} parent=1 // loop_pre_header
      _
    $region3: #{tpu_custom_call.1} parent=1 // loop_header
      %s21 = sphi 0, %s25
      %p22 = scmp.ge.s32.totalorder %s21, 4
      %s31 = sphi 0, %s33
      %s34 = sphi 0, %s31
      %s35 = sphi 0, %s34
      %s51 = sphi 0, %s35
      %s55 = sphi 0, %s55
      %s57 = sphi 0, %s55
      %s58 = sphi 0, %s57
      %s72 = sphi 0, %s58
      %s76 = sphi 0, %s76
      %s78 = sphi 0, %s76
      %s79 = sphi 0, %s78
      %s93 = sphi 0, %s79
      %s97 = sphi 0, %s97
      %s99 = sphi 0, %s97
      %s100 = sphi 0, %s99
      %s114 = sphi 0, %s100
      %s118 = sphi 0, %s118
      %s120 = sphi 0, %s118
      %s121 = sphi 0, %s120
      %s135 = sphi 0, %s121
      %s139 = sphi 0, %s139
      %s141 = sphi 0, %s139
      %s142 = sphi 0, %s141
      %s156 = sphi 0, %s142
      %s160 = sphi 0, %s160
      %s162 = sphi 0, %s160
      %s163 = sphi 0, %s162
      %s177 = sphi 0, %s163
      %s181 = sphi 0, %s181
      %s183 = sphi 0, %s181
      %s184 = sphi 0, %s183
      %s198 = sphi 0, %s184
      %s202 = sphi 0, %s202
      %s204 = sphi 0, %s202
      %s205 = sphi 0, %s204
      %s219 = sphi 0, %s205
      %s225 = sphi 0, %s227
      %s228 = sphi 0, %s225
      %s229 = sphi 0, %s228
      %s245 = sphi 0, %s229
    $region4: #{tpu_custom_call.1} parent=1 // loop_header_branch
      %24 = sbr.rel (%p22) target = $region8
    $region5: #{tpu_custom_call.1} parent=1 // loop_body
      %s26 = ssub.s32 %s21, 1
      %s27 = ssub.s32 %s21, 2
      %s28 = sadd.s32 %s21, 1
      %s29 = ssub.s32 %s21, %s28
      %p30 = scmp.eq.s32.totalorder %s29, 0
      %s32 = sadd.s32 %s31, 1
      %s33 = scalar_select %p30, %s31, %s32
      %p36 = pneg %p30
      %p37 = scmp.eq.s32.totalorder %s21, 1
      %p38 = por %p36, %p37
      %p39 = scmp.ne.s32.totalorder %s31, %s34
      %p40 = scmp.eq.s32.totalorder %s21, 0
      %p41 = por %p39, %p40
      %p42 = scmp.ne.s32.totalorder %s31, %s34
      %p43 = scmp.eq.s32.totalorder %s26, 1
      %p44 = por %p42, %p43
      %p45 = scmp.ne.s32.totalorder %s34, %s35
      %p46 = scmp.eq.s32.totalorder %s26, 0
      %p47 = por %p45, %p46
      %p48 = scmp.ne.s32.totalorder %s34, %s35
      %p49 = scmp.eq.s32.totalorder %s27, 1
      %p50 = por %p48, %p49
      %p52 = scmp.ne.s32.totalorder %s35, %s51
      %p53 = scmp.eq.s32.totalorder %s27, 0
      %p54 = por %p52, %p53
      %s56 = sadd.s32 %s55, 1
      %p59 = scmp.eq.s32.totalorder %s21, 1
      %p60 = scmp.ne.s32.totalorder %s55, %s57
      %p61 = scmp.eq.s32.totalorder %s21, 0
      %p62 = por %p60, %p61
      %p63 = scmp.ne.s32.totalorder %s55, %s57
      %p64 = scmp.eq.s32.totalorder %s26, 1
      %p65 = por %p63, %p64
      %p66 = scmp.ne.s32.totalorder %s57, %s58
      %p67 = scmp.eq.s32.totalorder %s26, 0
      %p68 = por %p66, %p67
      %p69 = scmp.ne.s32.totalorder %s57, %s58
      %p70 = scmp.eq.s32.totalorder %s27, 1
      %p71 = por %p69, %p70
      %p73 = scmp.ne.s32.totalorder %s58, %s72
      %p74 = scmp.eq.s32.totalorder %s27, 0
      %p75 = por %p73, %p74
      %s77 = sadd.s32 %s76, 1
      %p80 = scmp.eq.s32.totalorder %s21, 1
      %p81 = scmp.ne.s32.totalorder %s76, %s78
      %p82 = scmp.eq.s32.totalorder %s21, 0
      %p83 = por %p81, %p82
      %p84 = scmp.ne.s32.totalorder %s76, %s78
      %p85 = scmp.eq.s32.totalorder %s26, 1
      %p86 = por %p84, %p85
      %p87 = scmp.ne.s32.totalorder %s78, %s79
      %p88 = scmp.eq.s32.totalorder %s26, 0
      %p89 = por %p87, %p88
      %p90 = scmp.ne.s32.totalorder %s78, %s79
      %p91 = scmp.eq.s32.totalorder %s27, 1
      %p92 = por %p90, %p91
      %p94 = scmp.ne.s32.totalorder %s79, %s93
      %p95 = scmp.eq.s32.totalorder %s27, 0
      %p96 = por %p94, %p95
      %s98 = sadd.s32 %s97, 1
      %p101 = scmp.eq.s32.totalorder %s21, 1
      %p102 = scmp.ne.s32.totalorder %s97, %s99
      %p103 = scmp.eq.s32.totalorder %s21, 0
      %p104 = por %p102, %p103
      %p105 = scmp.ne.s32.totalorder %s97, %s99
      %p106 = scmp.eq.s32.totalorder %s26, 1
      %p107 = por %p105, %p106
      %p108 = scmp.ne.s32.totalorder %s99, %s100
      %p109 = scmp.eq.s32.totalorder %s26, 0
      %p110 = por %p108, %p109
      %p111 = scmp.ne.s32.totalorder %s99, %s100
      %p112 = scmp.eq.s32.totalorder %s27, 1
      %p113 = por %p111, %p112
      %p115 = scmp.ne.s32.totalorder %s100, %s114
      %p116 = scmp.eq.s32.totalorder %s27, 0
      %p117 = por %p115, %p116
      %s119 = sadd.s32 %s118, 1
      %p122 = scmp.eq.s32.totalorder %s21, 1
      %p123 = scmp.ne.s32.totalorder %s118, %s120
      %p124 = scmp.eq.s32.totalorder %s21, 0
      %p125 = por %p123, %p124
      %p126 = scmp.ne.s32.totalorder %s118, %s120
      %p127 = scmp.eq.s32.totalorder %s26, 1
      %p128 = por %p126, %p127
      %p129 = scmp.ne.s32.totalorder %s120, %s121
      %p130 = scmp.eq.s32.totalorder %s26, 0
      %p131 = por %p129, %p130
      %p132 = scmp.ne.s32.totalorder %s120, %s121
      %p133 = scmp.eq.s32.totalorder %s27, 1
      %p134 = por %p132, %p133
      %p136 = scmp.ne.s32.totalorder %s121, %s135
      %p137 = scmp.eq.s32.totalorder %s27, 0
      %p138 = por %p136, %p137
      %s140 = sadd.s32 %s139, 1
      %p143 = scmp.eq.s32.totalorder %s21, 1
      %p144 = scmp.ne.s32.totalorder %s139, %s141
      %p145 = scmp.eq.s32.totalorder %s21, 0
      %p146 = por %p144, %p145
      %p147 = scmp.ne.s32.totalorder %s139, %s141
      %p148 = scmp.eq.s32.totalorder %s26, 1
      %p149 = por %p147, %p148
      %p150 = scmp.ne.s32.totalorder %s141, %s142
      %p151 = scmp.eq.s32.totalorder %s26, 0
      %p152 = por %p150, %p151
      %p153 = scmp.ne.s32.totalorder %s141, %s142
      %p154 = scmp.eq.s32.totalorder %s27, 1
      %p155 = por %p153, %p154
      %p157 = scmp.ne.s32.totalorder %s142, %s156
      %p158 = scmp.eq.s32.totalorder %s27, 0
      %p159 = por %p157, %p158
      %s161 = sadd.s32 %s160, 1
      %p164 = scmp.eq.s32.totalorder %s21, 1
      %p165 = scmp.ne.s32.totalorder %s160, %s162
      %p166 = scmp.eq.s32.totalorder %s21, 0
      %p167 = por %p165, %p166
      %p168 = scmp.ne.s32.totalorder %s160, %s162
      %p169 = scmp.eq.s32.totalorder %s26, 1
      %p170 = por %p168, %p169
      %p171 = scmp.ne.s32.totalorder %s162, %s163
      %p172 = scmp.eq.s32.totalorder %s26, 0
      %p173 = por %p171, %p172
      %p174 = scmp.ne.s32.totalorder %s162, %s163
      %p175 = scmp.eq.s32.totalorder %s27, 1
      %p176 = por %p174, %p175
      %p178 = scmp.ne.s32.totalorder %s163, %s177
      %p179 = scmp.eq.s32.totalorder %s27, 0
      %p180 = por %p178, %p179
      %s182 = sadd.s32 %s181, 1
      %p185 = scmp.eq.s32.totalorder %s21, 1
      %p186 = scmp.ne.s32.totalorder %s181, %s183
      %p187 = scmp.eq.s32.totalorder %s21, 0
      %p188 = por %p186, %p187
      %p189 = scmp.ne.s32.totalorder %s181, %s183
      %p190 = scmp.eq.s32.totalorder %s26, 1
      %p191 = por %p189, %p190
      %p192 = scmp.ne.s32.totalorder %s183, %s184
      %p193 = scmp.eq.s32.totalorder %s26, 0
      %p194 = por %p192, %p193
      %p195 = scmp.ne.s32.totalorder %s183, %s184
      %p196 = scmp.eq.s32.totalorder %s27, 1
      %p197 = por %p195, %p196
      %p199 = scmp.ne.s32.totalorder %s184, %s198
      %p200 = scmp.eq.s32.totalorder %s27, 0
      %p201 = por %p199, %p200
      %s203 = sadd.s32 %s202, 1
      %p206 = scmp.eq.s32.totalorder %s21, 1
      %p207 = scmp.ne.s32.totalorder %s202, %s204
      %p208 = scmp.eq.s32.totalorder %s21, 0
      %p209 = por %p207, %p208
      %p210 = scmp.ne.s32.totalorder %s202, %s204
      %p211 = scmp.eq.s32.totalorder %s26, 1
      %p212 = por %p210, %p211
      %p213 = scmp.ne.s32.totalorder %s204, %s205
      %p214 = scmp.eq.s32.totalorder %s26, 0
      %p215 = por %p213, %p214
      %p216 = scmp.ne.s32.totalorder %s204, %s205
      %p217 = scmp.eq.s32.totalorder %s27, 1
      %p218 = por %p216, %p217
      %p220 = scmp.ne.s32.totalorder %s205, %s219
      %p221 = scmp.eq.s32.totalorder %s27, 0
      %p222 = por %p220, %p221
      %s223 = ssub.s32 %s21, %s28
      %p224 = scmp.eq.s32.totalorder %s223, 0
      %s226 = sadd.s32 %s225, 1
      %s227 = scalar_select %p224, %s225, %s226
      %p230 = pneg %p224
      %p231 = scmp.eq.s32.totalorder %s21, 1
      %p232 = por %p230, %p231
      %p233 = scmp.ne.s32.totalorder %s225, %s228
      %p234 = scmp.eq.s32.totalorder %s21, 0
      %p235 = por %p233, %p234
      %p236 = scmp.ne.s32.totalorder %s225, %s228
      %p237 = scmp.eq.s32.totalorder %s26, 1
      %p238 = por %p236, %p237
      %p239 = scmp.ne.s32.totalorder %s228, %s229
      %p240 = scmp.eq.s32.totalorder %s26, 0
      %p241 = por %p239, %p240
      %p242 = scmp.ne.s32.totalorder %s228, %s229
      %p243 = scmp.eq.s32.totalorder %s27, 1
      %p244 = por %p242, %p243
      %p246 = scmp.ne.s32.totalorder %s229, %s245
      %p247 = scmp.eq.s32.totalorder %s27, 0
      %p248 = por %p246, %p247
      %p249 = scmp.le.s32.totalorder 1, %s21
      %p250 = scmp.lt.s32.totalorder %s21, 3
      %p251 = pnand %p249, %p250
      %p252 = pneg %p251
      // Predicated region
      $region9: #{tpu_custom_call.1} parent=5 // pred_check
        _
      $region10: #{tpu_custom_call.1} parent=5 // pred_check_branch
        %254 = sbr.rel (%p251) target = $region12
      $region11: #{tpu_custom_call.1} parent=5 // pred_region
        %s255 = ssub.s32 %s21, 1
        // Predicated region
        $region13: #{tpu_custom_call.1} parent=11 // pred_check
          %p256 = pneg %p68
        $region14: #{tpu_custom_call.1} parent=11 // pred_check_branch
          %258 = sbr.rel (%p256) target = $region16
        $region15: #{tpu_custom_call.1} parent=11 // pred_region
          %s260 = ssub.s32 1152, 1152
          %261 = vsyncadd [#allocation4], %s260
          %s262 = sshll.u32 [#allocation3], 4
          %s263 = int_to_ptr.vmem [resolvable:$true] %s262
          %268 = dma.hbm_to_vmem [thread:$0]  %s1, 1152, %s263, [#allocation4], 128, 128, 8
        $region16: #{tpu_custom_call.1} parent=11 // pred_fallthru
          _
        // Predicated region
        $region17: #{tpu_custom_call.1} parent=11 // pred_check
          %p269 = pneg %p89
        $region18: #{tpu_custom_call.1} parent=11 // pred_check_branch
          %271 = sbr.rel (%p269) target = $region20
        $region19: #{tpu_custom_call.1} parent=11 // pred_region
          _
        $region20: #{tpu_custom_call.1} parent=11 // pred_fallthru
          _
        // Predicated region
        $region21: #{tpu_custom_call.1} parent=11 // pred_check
          %p272 = pneg %p110
        $region22: #{tpu_custom_call.1} parent=11 // pred_check_branch
          %274 = sbr.rel (%p272) target = $region24
        $region23: #{tpu_custom_call.1} parent=11 // pred_region
          %s276 = ssub.s32 16384, 16384
          %277 = vsyncadd [#allocation7], %s276
          %s278 = sshll.u32 [#allocation6], 4
          %s279 = int_to_ptr.vmem [resolvable:$true] %s278
          %284 = dma.hbm_to_vmem [thread:$0]  %s3, 16384, %s279, [#allocation7], 256, 256, 16
        $region24: #{tpu_custom_call.1} parent=11 // pred_fallthru
          _
        // Predicated region
        $region25: #{tpu_custom_call.1} parent=11 // pred_check
          %p285 = pneg %p131
        $region26: #{tpu_custom_call.1} parent=11 // pred_check_branch
          %287 = sbr.rel (%p285) target = $region28
        $region27: #{tpu_custom_call.1} parent=11 // pred_region
          _
        $region28: #{tpu_custom_call.1} parent=11 // pred_fallthru
          _
        // Predicated region
        $region29: #{tpu_custom_call.1} parent=11 // pred_check
          %p288 = pneg %p152
        $region30: #{tpu_custom_call.1} parent=11 // pred_check_branch
          %290 = sbr.rel (%p288) target = $region32
        $region31: #{tpu_custom_call.1} parent=11 // pred_region
          _
        $region32: #{tpu_custom_call.1} parent=11 // pred_fallthru
          _
        // Predicated region
        $region33: #{tpu_custom_call.1} parent=11 // pred_check
          %p291 = pneg %p173
        $region34: #{tpu_custom_call.1} parent=11 // pred_check_branch
          %293 = sbr.rel (%p291) target = $region36
        $region35: #{tpu_custom_call.1} parent=11 // pred_region
          _
        $region36: #{tpu_custom_call.1} parent=11 // pred_fallthru
          _
        // Predicated region
        $region37: #{tpu_custom_call.1} parent=11 // pred_check
          %p294 = pneg %p194
        $region38: #{tpu_custom_call.1} parent=11 // pred_check_branch
          %296 = sbr.rel (%p294) target = $region40
        $region39: #{tpu_custom_call.1} parent=11 // pred_region
          _
        $region40: #{tpu_custom_call.1} parent=11 // pred_fallthru
          _
        // Predicated region
        $region41: #{tpu_custom_call.1} parent=11 // pred_check
          %p297 = pneg %p215
        $region42: #{tpu_custom_call.1} parent=11 // pred_check_branch
          %299 = sbr.rel (%p297) target = $region44
        $region43: #{tpu_custom_call.1} parent=11 // pred_region
          _
        $region44: #{tpu_custom_call.1} parent=11 // pred_fallthru
          _
      $region12: #{tpu_custom_call.1} parent=5 // pred_fallthru
        _
      %p300 = scmp.lt.s32.totalorder %s21, 2
      // Predicated region
      $region45: #{tpu_custom_call.1} parent=5 // pred_check
        %p301 = pneg %p300
      $region46: #{tpu_custom_call.1} parent=5 // pred_check_branch
        %303 = sbr.rel (%p301) target = $region48
      $region47: #{tpu_custom_call.1} parent=5 // pred_region
        // Predicated region
        $region49: #{tpu_custom_call.1} parent=47 // pred_check
          %p304 = pneg %p41
        $region50: #{tpu_custom_call.1} parent=47 // pred_check_branch
          %306 = sbr.rel (%p304) target = $region52
        $region51: #{tpu_custom_call.1} parent=47 // pred_region
          %p307 = scmp.lt.s32.totalorder %s21, 1
          %s308 = scalar_select %p307, %s21, 1
          %s309 = smul.addr %s308, 2
          %s310 = smul.addr %s309, 4
          %s311 = scalar_lea.vmem %s0, %s310
        $region52: #{tpu_custom_call.1} parent=47 // pred_fallthru
          _
      $region48: #{tpu_custom_call.1} parent=5 // pred_fallthru
        _
      %p312 = scmp.le.s32.totalorder 1, %s21
      %p313 = scmp.lt.s32.totalorder %s21, 3
      %p314 = pnand %p312, %p313
      %p315 = pneg %p314
      // Predicated region
      $region53: #{tpu_custom_call.1} parent=5 // pred_check
        _
      $region54: #{tpu_custom_call.1} parent=5 // pred_check_branch
        %317 = sbr.rel (%p314) target = $region56
      $region55: #{tpu_custom_call.1} parent=5 // pred_region
        %s318 = ssub.s32 %s21, 1
        // Predicated region
        $region57: #{tpu_custom_call.1} parent=55 // pred_check
          %p319 = pneg %p68
        $region58: #{tpu_custom_call.1} parent=55 // pred_check_branch
          %321 = sbr.rel (%p319) target = $region60
        $region59: #{tpu_custom_call.1} parent=55 // pred_region
          %322 = dma.done [#allocation4], 1152
        $region60: #{tpu_custom_call.1} parent=55 // pred_fallthru
          _
        // Predicated region
        $region61: #{tpu_custom_call.1} parent=55 // pred_check
          %p323 = pneg %p110
        $region62: #{tpu_custom_call.1} parent=55 // pred_check_branch
          %325 = sbr.rel (%p323) target = $region64
        $region63: #{tpu_custom_call.1} parent=55 // pred_region
          %326 = dma.done [#allocation7], 16384
        $region64: #{tpu_custom_call.1} parent=55 // pred_fallthru
          _
        %p327 = scmp.lt.s32.totalorder %s26, 1
        %s328 = scalar_select %p327, %s26, 1
        %s329 = smul.addr %s328, 2
        %s330 = smul.addr %s329, 4
        %s331 = scalar_lea.vmem %s0, %s330
        %p332 = pneg %p47
        %p333 = pneg %p44
        %p334 = pneg %p68
        %p335 = pneg %p65
        %p336 = pneg %p89
        %p337 = pneg %p86
        %p338 = pneg %p110
        %p339 = pneg %p107
        %p340 = pneg %p131
        %p341 = pneg %p128
        %p342 = pneg %p152
        %p343 = pneg %p149
        %p344 = pneg %p173
        %p345 = pneg %p170
        %p346 = pneg %p194
        %p347 = pneg %p191
        %p348 = pneg %p215
        %p349 = pneg %p212
        %p350 = pneg %p241
        %p351 = pneg %p238
        %s352 = sand.u32 %s228, 1
        %s353 = scalar_lea.sflag [#allocation5], %s352
        %s354 = sand.u32 %s228, 1
        %s355 = smul.addr %s354, 8
        %s356 = scalar_lea.vmem [#allocation8], %s355
        %p357 = scmp.lt.s32.totalorder %s26, 1
        %s358 = scalar_select %p357, %s26, 1
        %s359 = smul.addr %s358, 2
        %s360 = smul.addr %s359, 4
        %s361 = scalar_lea.vmem %s0, %s360
        %v362 = vld [vmem:[%s361] sm:$0xff]
        %s363 = scalar_lea.vmem [#allocation3], 32
        %v364 = vld [vmem:[%s363] sm:$0xff]
        %v365 = vmul.f32 %v364, %v362
        %v366 = vld [vmem:[%s2] sm:$0xf]
        %368 = vset.pattern.permute.xlu0 0
        %369 = vperm.xlu0 %368, %v366
        %v370 = vpop.permute.xlu0 %369
        %v372 = vunpack.c.l.s4 839922192
        %v373 = vunpack.c.0.s8 %v372
        %v374 = vlaneseq
        %v375 = vshrl.u32 %v374, 7
        %v376 = vsub.s32 %v373, %v375
        %v377 = vrot.slane %v370, %v376
        %v379 = vadd.f32 %v365, %v377
        %v380 = vld [vmem:[#allocation3] sm:$0xff]
        %v382 = vcombine.high %v362, %v362
        %384 = vrot.lane.b32.xlu0 %v362, 17
        %v385 = vpop.permute.xlu0 %384
        %386 = vrot.lane.b32.xlu0 %v382, 17
        %v387 = vpop.permute.xlu0 %386
        %v388 = vlaneseq
        %v389 = vand.u32 %v388, 127
        %vm390 = vcmp.lt.s32.totalorder %v389, 17
        %v391 = vsel %vm390, %v385, %v387
        %v392 = vsel %vm390, %v387, %v385
        %v395 = vcombine.low %v392, %v391
        %v397 = vmul.f32 %v380, %v395
        %v398 = vadd.f32 %v379, %v397
        %s399 = scalar_lea.vmem [#allocation3], 8
        %v400 = vld [vmem:[%s399] sm:$0xff]
        %401 = vrot.lane.b32.xlu0 %v362, 16
        %v402 = vpop.permute.xlu0 %401
        %403 = vrot.lane.b32.xlu0 %v382, 16
        %v404 = vpop.permute.xlu0 %403
        %vm405 = vcmp.lt.s32.totalorder %v389, 16
        %v406 = vsel %vm405, %v402, %v404
        %v407 = vsel %vm405, %v404, %v402
        %v410 = vcombine.low %v407, %v406
        %v412 = vmul.f32 %v400, %v410
        %v413 = vadd.f32 %v398, %v412
        %s414 = scalar_lea.vmem [#allocation3], 16
        %v415 = vld [vmem:[%s414] sm:$0xff]
        %416 = vrot.lane.b32.xlu0 %v362, 15
        %v417 = vpop.permute.xlu0 %416
        %418 = vrot.lane.b32.xlu0 %v382, 15
        %v419 = vpop.permute.xlu0 %418
        %vm420 = vcmp.lt.s32.totalorder %v389, 15
        %v421 = vsel %vm420, %v417, %v419
        %v422 = vsel %vm420, %v419, %v417
        %v425 = vcombine.low %v422, %v421
        %v427 = vmul.f32 %v415, %v425
        %v428 = vadd.f32 %v413, %v427
        %s429 = scalar_lea.vmem [#allocation3], 24
        %v430 = vld [vmem:[%s429] sm:$0xff]
        %431 = vrot.lane.b32.xlu0 %v362, 1
        %v432 = vpop.permute.xlu0 %431
        %433 = vrot.lane.b32.xlu0 %v382, 1
        %v434 = vpop.permute.xlu0 %433
        %vm435 = vcmp.lt.s32.totalorder %v389, 1
        %v436 = vsel %vm435, %v432, %v434
        %v437 = vsel %vm435, %v434, %v432
        %v440 = vcombine.low %v437, %v436
        %v442 = vmul.f32 %v430, %v440
        %v443 = vadd.f32 %v428, %v442
        %s444 = scalar_lea.vmem [#allocation3], 40
        %v445 = vld [vmem:[%s444] sm:$0xff]
        %446 = vrot.lane.b32.xlu0 %v362, 127
        %v447 = vpop.permute.xlu0 %446
        %448 = vrot.lane.b32.xlu0 %v382, 127
        %v449 = vpop.permute.xlu0 %448
        %vm450 = vcmp.lt.s32.totalorder %v389, 127
        %v451 = vsel %vm450, %v447, %v449
        %v452 = vsel %vm450, %v449, %v447
        %v455 = vcombine.low %v451, %v452
        %v457 = vmul.f32 %v445, %v455
        %v458 = vadd.f32 %v443, %v457
        %s459 = scalar_lea.vmem [#allocation3], 48
        %v460 = vld [vmem:[%s459] sm:$0xff]
        %461 = vrot.lane.b32.xlu0 %v362, 113
        %v462 = vpop.permute.xlu0 %461
        %463 = vrot.lane.b32.xlu0 %v382, 113
        %v464 = vpop.permute.xlu0 %463
        %vm465 = vcmp.lt.s32.totalorder %v389, 113
        %v466 = vsel %vm465, %v462, %v464
        %v467 = vsel %vm465, %v464, %v462
        %v470 = vcombine.low %v466, %v467
        %v472 = vmul.f32 %v460, %v470
        %v473 = vadd.f32 %v458, %v472
        %s474 = scalar_lea.vmem [#allocation3], 56
        %v475 = vld [vmem:[%s474] sm:$0xff]
        %476 = vrot.lane.b32.xlu0 %v362, 112
        %v477 = vpop.permute.xlu0 %476
        %478 = vrot.lane.b32.xlu0 %v382, 112
        %v479 = vpop.permute.xlu0 %478
        %vm480 = vcmp.lt.s32.totalorder %v389, 112
        %v481 = vsel %vm480, %v477, %v479
        %v482 = vsel %vm480, %v479, %v477
        %v485 = vcombine.low %v481, %v482
        %v487 = vmul.f32 %v475, %v485
        %v488 = vadd.f32 %v473, %v487
        %s489 = scalar_lea.vmem [#allocation3], 64
        %v490 = vld [vmem:[%s489] sm:$0xff]
        %491 = vrot.lane.b32.xlu0 %v362, 111
        %v492 = vpop.permute.xlu0 %491
        %493 = vrot.lane.b32.xlu0 %v382, 111
        %v494 = vpop.permute.xlu0 %493
        %vm495 = vcmp.lt.s32.totalorder %v389, 111
        %v496 = vsel %vm495, %v492, %v494
        %v497 = vsel %vm495, %v494, %v492
        %v500 = vcombine.low %v496, %v497
        %v502 = vmul.f32 %v490, %v500
        %v503 = vadd.f32 %v488, %v502
        %v505 = vcombine.high %v503, %v503
        %vm507 = vcmask 1043456
        %v508 = vsel %vm507, %v503, 0.0
        %v509 = vrot.slane %v508, 4
        %v510 = vadd.f32 %v508, %v509
        %v511 = vrot.slane %v510, 2
        %v512 = vadd.f32 %v510, %v511
        %v513 = vrot.slane %v512, 1
        %v514 = vadd.f32 %v512, %v513
        %v515 = vsel %vm507, %v505, 0.0
        %v516 = vrot.slane %v515, 4
        %v517 = vadd.f32 %v515, %v516
        %v518 = vrot.slane %v517, 2
        %v519 = vadd.f32 %v517, %v518
        %v520 = vrot.slane %v519, 1
        %v521 = vadd.f32 %v519, %v520
        %v522 = vrcp.pop 4.0
        %v523 = vmul.f32 %v514, %v522
        %v524 = vmul.f32 %v521, %v522
        %v525 = vsel %vm507, %v503, -inf
        %v526 = vrot.slane %v525, 4
        %v527 = vmax.f32 %v525, %v526
        %v528 = vrot.slane %v527, 2
        %v529 = vmax.f32 %v527, %v528
        %v530 = vrot.slane %v529, 1
        %v531 = vmax.f32 %v529, %v530
        %v532 = vsel %vm507, %v505, -inf
        %v533 = vrot.slane %v532, 4
        %v534 = vmax.f32 %v532, %v533
        %v535 = vrot.slane %v534, 2
        %v536 = vmax.f32 %v534, %v535
        %v537 = vrot.slane %v536, 1
        %v538 = vmax.f32 %v536, %v537
        %v539 = vld [vmem:[#allocation6] sm:$0xff]
        %v540 = vld [vmem:[#allocation6 + $0x8] sm:$0xff]
        %v541 = vld [vmem:[#allocation6 + $0x10] sm:$0xff]
        %v542 = vld [vmem:[#allocation6 + $0x18] sm:$0xff]
        %v543 = vld [vmem:[#allocation6 + $0x20] sm:$0xff]
        %v544 = vld [vmem:[#allocation6 + $0x28] sm:$0xff]
        %v545 = vld [vmem:[#allocation6 + $0x30] sm:$0xff]
        %v546 = vld [vmem:[#allocation6 + $0x38] sm:$0xff]
        %v547 = vld [vmem:[#allocation6 + $0x40] sm:$0xff]
        %v548 = vld [vmem:[#allocation6 + $0x48] sm:$0xff]
        %v549 = vld [vmem:[#allocation6 + $0x50] sm:$0xff]
        %v550 = vld [vmem:[#allocation6 + $0x58] sm:$0xff]
        %v551 = vld [vmem:[#allocation6 + $0x60] sm:$0xff]
        %v552 = vld [vmem:[#allocation6 + $0x68] sm:$0xff]
        %v553 = vld [vmem:[#allocation6 + $0x70] sm:$0xff]
        %v554 = vld [vmem:[#allocation6 + $0x78] sm:$0xff]
        %v555 = vld [vmem:[#allocation6 + $0x80] sm:$0xff]
        %v556 = vld [vmem:[#allocation6 + $0x88] sm:$0xff]
        %v557 = vld [vmem:[#allocation6 + $0x90] sm:$0xff]
        %v558 = vld [vmem:[#allocation6 + $0x98] sm:$0xff]
        %v559 = vld [vmem:[#allocation6 + $0xa0] sm:$0xff]
        %v560 = vld [vmem:[#allocation6 + $0xa8] sm:$0xff]
        %v561 = vld [vmem:[#allocation6 + $0xb0] sm:$0xff]
        %v562 = vld [vmem:[#allocation6 + $0xb8] sm:$0xff]
        %v563 = vld [vmem:[#allocation6 + $0xc0] sm:$0xff]
        %v564 = vld [vmem:[#allocation6 + $0xc8] sm:$0xff]
        %v565 = vld [vmem:[#allocation6 + $0xd0] sm:$0xff]
        %v566 = vld [vmem:[#allocation6 + $0xd8] sm:$0xff]
        %v567 = vld [vmem:[#allocation6 + $0xe0] sm:$0xff]
        %v568 = vld [vmem:[#allocation6 + $0xe8] sm:$0xff]
        %v569 = vld [vmem:[#allocation6 + $0xf0] sm:$0xff]
        %v570 = vld [vmem:[#allocation6 + $0xf8] sm:$0xff]
        %v571 = vld [vmem:[#allocation6 + $0x100] sm:$0xff]
        %v572 = vld [vmem:[#allocation6 + $0x108] sm:$0xff]
        %v573 = vld [vmem:[#allocation6 + $0x110] sm:$0xff]
        %v574 = vld [vmem:[#allocation6 + $0x118] sm:$0xff]
        %v575 = vld [vmem:[#allocation6 + $0x120] sm:$0xff]
        %v576 = vld [vmem:[#allocation6 + $0x128] sm:$0xff]
        %v577 = vld [vmem:[#allocation6 + $0x130] sm:$0xff]
        %v578 = vld [vmem:[#allocation6 + $0x138] sm:$0xff]
        %v579 = vld [vmem:[#allocation6 + $0x140] sm:$0xff]
        %v580 = vld [vmem:[#allocation6 + $0x148] sm:$0xff]
        %v581 = vld [vmem:[#allocation6 + $0x150] sm:$0xff]
        %v582 = vld [vmem:[#allocation6 + $0x158] sm:$0xff]
        %v583 = vld [vmem:[#allocation6 + $0x160] sm:$0xff]
        %v584 = vld [vmem:[#allocation6 + $0x168] sm:$0xff]
        %v585 = vld [vmem:[#allocation6 + $0x170] sm:$0xff]
        %v586 = vld [vmem:[#allocation6 + $0x178] sm:$0xff]
        %v587 = vld [vmem:[#allocation6 + $0x180] sm:$0xff]
        %v588 = vld [vmem:[#allocation6 + $0x188] sm:$0xff]
        %v589 = vld [vmem:[#allocation6 + $0x190] sm:$0xff]
        %v590 = vld [vmem:[#allocation6 + $0x198] sm:$0xff]
        %v591 = vld [vmem:[#allocation6 + $0x1a0] sm:$0xff]
        %v592 = vld [vmem:[#allocation6 + $0x1a8] sm:$0xff]
        %v593 = vld [vmem:[#allocation6 + $0x1b0] sm:$0xff]
        %v594 = vld [vmem:[#allocation6 + $0x1b8] sm:$0xff]
        %v595 = vld [vmem:[#allocation6 + $0x1c0] sm:$0xff]
        %v596 = vld [vmem:[#allocation6 + $0x1c8] sm:$0xff]
        %v597 = vld [vmem:[#allocation6 + $0x1d0] sm:$0xff]
        %v598 = vld [vmem:[#allocation6 + $0x1d8] sm:$0xff]
        %v599 = vld [vmem:[#allocation6 + $0x1e0] sm:$0xff]
        %v600 = vld [vmem:[#allocation6 + $0x1e8] sm:$0xff]
        %v601 = vld [vmem:[#allocation6 + $0x1f0] sm:$0xff]
        %v602 = vld [vmem:[#allocation6 + $0x1f8] sm:$0xff]
        %s603 = scalar_lea.vmem [#allocation6], 512
        %v604 = vld [vmem:[%s603] sm:$0xff]
        %v605 = vld [vmem:[%s603 + $0x8] sm:$0xff]
        %v606 = vld [vmem:[%s603 + $0x10] sm:$0xff]
        %v607 = vld [vmem:[%s603 + $0x18] sm:$0xff]
        %v608 = vld [vmem:[%s603 + $0x20] sm:$0xff]
        %v609 = vld [vmem:[%s603 + $0x28] sm:$0xff]
        %v610 = vld [vmem:[%s603 + $0x30] sm:$0xff]
        %v611 = vld [vmem:[%s603 + $0x38] sm:$0xff]
        %v612 = vld [vmem:[%s603 + $0x40] sm:$0xff]
        %v613 = vld [vmem:[%s603 + $0x48] sm:$0xff]
        %v614 = vld [vmem:[%s603 + $0x50] sm:$0xff]
        %v615 = vld [vmem:[%s603 + $0x58] sm:$0xff]
        %v616 = vld [vmem:[%s603 + $0x60] sm:$0xff]
        %v617 = vld [vmem:[%s603 + $0x68] sm:$0xff]
        %v618 = vld [vmem:[%s603 + $0x70] sm:$0xff]
        %v619 = vld [vmem:[%s603 + $0x78] sm:$0xff]
        %v620 = vld [vmem:[%s603 + $0x80] sm:$0xff]
        %v621 = vld [vmem:[%s603 + $0x88] sm:$0xff]
        %v622 = vld [vmem:[%s603 + $0x90] sm:$0xff]
        %v623 = vld [vmem:[%s603 + $0x98] sm:$0xff]
        %v624 = vld [vmem:[%s603 + $0xa0] sm:$0xff]
        %v625 = vld [vmem:[%s603 + $0xa8] sm:$0xff]
        %v626 = vld [vmem:[%s603 + $0xb0] sm:$0xff]
        %v627 = vld [vmem:[%s603 + $0xb8] sm:$0xff]
        %v628 = vld [vmem:[%s603 + $0xc0] sm:$0xff]
        %v629 = vld [vmem:[%s603 + $0xc8] sm:$0xff]
        %v630 = vld [vmem:[%s603 + $0xd0] sm:$0xff]
        %v631 = vld [vmem:[%s603 + $0xd8] sm:$0xff]
        %v632 = vld [vmem:[%s603 + $0xe0] sm:$0xff]
        %v633 = vld [vmem:[%s603 + $0xe8] sm:$0xff]
        %v634 = vld [vmem:[%s603 + $0xf0] sm:$0xff]
        %v635 = vld [vmem:[%s603 + $0xf8] sm:$0xff]
        %v636 = vld [vmem:[%s603 + $0x100] sm:$0xff]
        %v637 = vld [vmem:[%s603 + $0x108] sm:$0xff]
        %v638 = vld [vmem:[%s603 + $0x110] sm:$0xff]
        %v639 = vld [vmem:[%s603 + $0x118] sm:$0xff]
        %v640 = vld [vmem:[%s603 + $0x120] sm:$0xff]
        %v641 = vld [vmem:[%s603 + $0x128] sm:$0xff]
        %v642 = vld [vmem:[%s603 + $0x130] sm:$0xff]
        %v643 = vld [vmem:[%s603 + $0x138] sm:$0xff]
        %v644 = vld [vmem:[%s603 + $0x140] sm:$0xff]
        %v645 = vld [vmem:[%s603 + $0x148] sm:$0xff]
        %v646 = vld [vmem:[%s603 + $0x150] sm:$0xff]
        %v647 = vld [vmem:[%s603 + $0x158] sm:$0xff]
        %v648 = vld [vmem:[%s603 + $0x160] sm:$0xff]
        %v649 = vld [vmem:[%s603 + $0x168] sm:$0xff]
        %v650 = vld [vmem:[%s603 + $0x170] sm:$0xff]
        %v651 = vld [vmem:[%s603 + $0x178] sm:$0xff]
        %v652 = vld [vmem:[%s603 + $0x180] sm:$0xff]
        %v653 = vld [vmem:[%s603 + $0x188] sm:$0xff]
        %v654 = vld [vmem:[%s603 + $0x190] sm:$0xff]
        %v655 = vld [vmem:[%s603 + $0x198] sm:$0xff]
        %v656 = vld [vmem:[%s603 + $0x1a0] sm:$0xff]
        %v657 = vld [vmem:[%s603 + $0x1a8] sm:$0xff]
        %v658 = vld [vmem:[%s603 + $0x1b0] sm:$0xff]
        %v659 = vld [vmem:[%s603 + $0x1b8] sm:$0xff]
        %v660 = vld [vmem:[%s603 + $0x1c0] sm:$0xff]
        %v661 = vld [vmem:[%s603 + $0x1c8] sm:$0xff]
        %v662 = vld [vmem:[%s603 + $0x1d0] sm:$0xff]
        %v663 = vld [vmem:[%s603 + $0x1d8] sm:$0xff]
        %v664 = vld [vmem:[%s603 + $0x1e0] sm:$0xff]
        %v665 = vld [vmem:[%s603 + $0x1e8] sm:$0xff]
        %v666 = vld [vmem:[%s603 + $0x1f0] sm:$0xff]
        %v667 = vld [vmem:[%s603 + $0x1f8] sm:$0xff]
        %v668 = vand.u32 %v605, 4294901760
        %669 = vmatprep.subr.mxu0 %v668
        %v670 = vand.u32 %v604, 4294901760
        %671 = vmatpush1.msra.mxu0 %v670
        %v672 = vand.u32 %v607, 4294901760
        %673 = vmatprep.subr.mxu0 %v672
        %v674 = vand.u32 %v606, 4294901760
        %675 = vmatpush1.msra.mxu0 %v674
        %v676 = vand.u32 %v609, 4294901760
        %677 = vmatprep.subr.mxu0 %v676
        %v678 = vand.u32 %v608, 4294901760
        %679 = vmatpush1.msra.mxu0 %v678
        %v680 = vand.u32 %v611, 4294901760
        %681 = vmatprep.subr.mxu0 %v680
        %v682 = vand.u32 %v610, 4294901760
        %683 = vmatpush1.msra.mxu0 %v682
        %v684 = vand.u32 %v613, 4294901760
        %685 = vmatprep.subr.mxu0 %v684
        %v686 = vand.u32 %v612, 4294901760
        %687 = vmatpush1.msra.mxu0 %v686
        %v688 = vand.u32 %v615, 4294901760
        %689 = vmatprep.subr.mxu0 %v688
        %v690 = vand.u32 %v614, 4294901760
        %691 = vmatpush1.msra.mxu0 %v690
        %v692 = vand.u32 %v617, 4294901760
        %693 = vmatprep.subr.mxu0 %v692
        %v694 = vand.u32 %v616, 4294901760
        %695 = vmatpush1.msra.mxu0 %v694
        %v696 = vand.u32 %v619, 4294901760
        %697 = vmatprep.subr.mxu0 %v696
        %v698 = vand.u32 %v618, 4294901760
        %699 = vmatpush1.msra.mxu0 %v698
        %v700 = vand.u32 %v621, 4294901760
        %701 = vmatprep.subr.mxu0 %v700
        %v702 = vand.u32 %v620, 4294901760
        %703 = vmatpush1.msra.mxu0 %v702
        %v704 = vand.u32 %v623, 4294901760
        %705 = vmatprep.subr.mxu0 %v704
        %v706 = vand.u32 %v622, 4294901760
        %707 = vmatpush1.msra.mxu0 %v706
        %v708 = vand.u32 %v625, 4294901760
        %709 = vmatprep.subr.mxu0 %v708
        %v710 = vand.u32 %v624, 4294901760
        %711 = vmatpush1.msra.mxu0 %v710
        %v712 = vand.u32 %v627, 4294901760
        %713 = vmatprep.subr.mxu0 %v712
        %v714 = vand.u32 %v626, 4294901760
        %715 = vmatpush1.msra.mxu0 %v714
        %v716 = vand.u32 %v629, 4294901760
        %717 = vmatprep.subr.mxu0 %v716
        %v718 = vand.u32 %v628, 4294901760
        %719 = vmatpush1.msra.mxu0 %v718
        %v720 = vand.u32 %v631, 4294901760
        %721 = vmatprep.subr.mxu0 %v720
        %v722 = vand.u32 %v630, 4294901760
        %723 = vmatpush1.msra.mxu0 %v722
        %v724 = vand.u32 %v633, 4294901760
        %725 = vmatprep.subr.mxu0 %v724
        %v726 = vand.u32 %v632, 4294901760
        %727 = vmatpush1.msra.mxu0 %v726
        %v728 = vand.u32 %v635, 4294901760
        %729 = vmatprep.subr.mxu0 %v728
        %v730 = vand.u32 %v634, 4294901760
        %731 = vmatpush1.msra.mxu0 %v730
        %v732 = vand.u32 %v637, 4294901760
        %733 = vmatprep.subr.mxu0 %v732
        %v734 = vand.u32 %v636, 4294901760
        %735 = vmatpush1.msra.mxu0 %v734
        %v736 = vand.u32 %v639, 4294901760
        %737 = vmatprep.subr.mxu0 %v736
        %v738 = vand.u32 %v638, 4294901760
        %739 = vmatpush1.msra.mxu0 %v738
        %v740 = vand.u32 %v641, 4294901760
        %741 = vmatprep.subr.mxu0 %v740
        %v742 = vand.u32 %v640, 4294901760
        %743 = vmatpush1.msra.mxu0 %v742
        %v744 = vand.u32 %v643, 4294901760
        %745 = vmatprep.subr.mxu0 %v744
        %v746 = vand.u32 %v642, 4294901760
        %747 = vmatpush1.msra.mxu0 %v746
        %v748 = vand.u32 %v645, 4294901760
        %749 = vmatprep.subr.mxu0 %v748
        %v750 = vand.u32 %v644, 4294901760
        %751 = vmatpush1.msra.mxu0 %v750
        %v752 = vand.u32 %v647, 4294901760
        %753 = vmatprep.subr.mxu0 %v752
        %v754 = vand.u32 %v646, 4294901760
        %755 = vmatpush1.msra.mxu0 %v754
        %v756 = vand.u32 %v649, 4294901760
        %757 = vmatprep.subr.mxu0 %v756
        %v758 = vand.u32 %v648, 4294901760
        %759 = vmatpush1.msra.mxu0 %v758
        %v760 = vand.u32 %v651, 4294901760
        %761 = vmatprep.subr.mxu0 %v760
        %v762 = vand.u32 %v650, 4294901760
        %763 = vmatpush1.msra.mxu0 %v762
        %v764 = vand.u32 %v653, 4294901760
        %765 = vmatprep.subr.mxu0 %v764
        %v766 = vand.u32 %v652, 4294901760
        %767 = vmatpush1.msra.mxu0 %v766
        %v768 = vand.u32 %v655, 4294901760
        %769 = vmatprep.subr.mxu0 %v768
        %v770 = vand.u32 %v654, 4294901760
        %771 = vmatpush1.msra.mxu0 %v770
        %v772 = vand.u32 %v657, 4294901760
        %773 = vmatprep.subr.mxu0 %v772
        %v774 = vand.u32 %v656, 4294901760
        %775 = vmatpush1.msra.mxu0 %v774
        %v776 = vand.u32 %v659, 4294901760
        %777 = vmatprep.subr.mxu0 %v776
        %v778 = vand.u32 %v658, 4294901760
        %779 = vmatpush1.msra.mxu0 %v778
        %v780 = vand.u32 %v661, 4294901760
        %781 = vmatprep.subr.mxu0 %v780
        %v782 = vand.u32 %v660, 4294901760
        %783 = vmatpush1.msra.mxu0 %v782
        %v784 = vand.u32 %v663, 4294901760
        %785 = vmatprep.subr.mxu0 %v784
        %v786 = vand.u32 %v662, 4294901760
        %787 = vmatpush1.msra.mxu0 %v786
        %v788 = vand.u32 %v665, 4294901760
        %789 = vmatprep.subr.mxu0 %v788
        %v790 = vand.u32 %v664, 4294901760
        %791 = vmatpush1.msra.mxu0 %v790
        %v792 = vand.u32 %v667, 4294901760
        %793 = vmatprep.subr.mxu0 %v792
        %v794 = vand.u32 %v666, 4294901760
        %795 = vmatpush1.msra.mxu0 %v794
        %v796 = vand.u32 %v538, 4294901760
        %v797 = vsub.f32 %v538, %v796
        %v798 = vand.u32 %v797, 4294901760
        %v799 = vsub.f32 %v797, %v798
        %v800 = vand.u32 %v799, 4294901760
        %801 = vmatprep.mubr.f32.mxu0 %v800
        %v802 = vand.u32 %v531, 4294901760
        %v803 = vsub.f32 %v531, %v802
        %v804 = vand.u32 %v803, 4294901760
        %v805 = vsub.f32 %v803, %v804
        %v806 = vand.u32 %v805, 4294901760
        %807 = vmatmul.mubr.f32.gmra.mrb[0].mxu0 %v806
        %v808 = vpop.f32.mrb[0].mxu0
        %v809 = vadd.f32 0.0, %v808
        %v810 = vpop.f32.mrb[0].mxu0
        %v811 = vadd.f32 0.0, %v810
        %812 = vdwg.mxu0
        %v813 = vand.u32 %v605, 4294901760
        %v814 = vsub.f32 %v605, %v813
        %v815 = vand.u32 %v814, 4294901760
        %v816 = vsub.f32 %v814, %v815
        %v817 = vand.u32 %v816, 4294901760
        %818 = vmatprep.subr.mxu0 %v817
        %v819 = vand.u32 %v604, 4294901760
        %v820 = vsub.f32 %v604, %v819
        %v821 = vand.u32 %v820, 4294901760
        %v822 = vsub.f32 %v820, %v821
        %v823 = vand.u32 %v822, 4294901760
        %824 = vmatpush1.msra.mxu0 %v823
        %v825 = vand.u32 %v607, 4294901760
        %v826 = vsub.f32 %v607, %v825
        %v827 = vand.u32 %v826, 4294901760
        %v828 = vsub.f32 %v826, %v827
        %v829 = vand.u32 %v828, 4294901760
        %830 = vmatprep.subr.mxu0 %v829
        %v831 = vand.u32 %v606, 4294901760
        %v832 = vsub.f32 %v606, %v831
        %v833 = vand.u32 %v832, 4294901760
        %v834 = vsub.f32 %v832, %v833
        %v835 = vand.u32 %v834, 4294901760
        %836 = vmatpush1.msra.mxu0 %v835
        %v837 = vand.u32 %v609, 4294901760
        %v838 = vsub.f32 %v609, %v837
        %v839 = vand.u32 %v838, 4294901760
        %v840 = vsub.f32 %v838, %v839
        %v841 = vand.u32 %v840, 4294901760
        %842 = vmatprep.subr.mxu0 %v841
        %v843 = vand.u32 %v608, 4294901760
        %v844 = vsub.f32 %v608, %v843
        %v845 = vand.u32 %v844, 4294901760
        %v846 = vsub.f32 %v844, %v845
        %v847 = vand.u32 %v846, 4294901760
        %848 = vmatpush1.msra.mxu0 %v847
        %v849 = vand.u32 %v611, 4294901760
        %v850 = vsub.f32 %v611, %v849
        %v851 = vand.u32 %v850, 4294901760
        %v852 = vsub.f32 %v850, %v851
        %v853 = vand.u32 %v852, 4294901760
        %854 = vmatprep.subr.mxu0 %v853
        %v855 = vand.u32 %v610, 4294901760
        %v856 = vsub.f32 %v610, %v855
        %v857 = vand.u32 %v856, 4294901760
        %v858 = vsub.f32 %v856, %v857
        %v859 = vand.u32 %v858, 4294901760
        %860 = vmatpush1.msra.mxu0 %v859
        %v861 = vand.u32 %v613, 4294901760
        %v862 = vsub.f32 %v613, %v861
        %v863 = vand.u32 %v862, 4294901760
        %v864 = vsub.f32 %v862, %v863
        %v865 = vand.u32 %v864, 4294901760
        %866 = vmatprep.subr.mxu0 %v865
        %v867 = vand.u32 %v612, 4294901760
        %v868 = vsub.f32 %v612, %v867
        %v869 = vand.u32 %v868, 4294901760
        %v870 = vsub.f32 %v868, %v869
        %v871 = vand.u32 %v870, 4294901760
        %872 = vmatpush1.msra.mxu0 %v871
        %v873 = vand.u32 %v615, 4294901760
        %v874 = vsub.f32 %v615, %v873
        %v875 = vand.u32 %v874, 4294901760
        %v876 = vsub.f32 %v874, %v875
        %v877 = vand.u32 %v876, 4294901760
        %878 = vmatprep.subr.mxu0 %v877
        %v879 = vand.u32 %v614, 4294901760
        %v880 = vsub.f32 %v614, %v879
        %v881 = vand.u32 %v880, 4294901760
        %v882 = vsub.f32 %v880, %v881
        %v883 = vand.u32 %v882, 4294901760
        %884 = vmatpush1.msra.mxu0 %v883
        %v885 = vand.u32 %v617, 4294901760
        %v886 = vsub.f32 %v617, %v885
        %v887 = vand.u32 %v886, 4294901760
        %v888 = vsub.f32 %v886, %v887
        %v889 = vand.u32 %v888, 4294901760
        %890 = vmatprep.subr.mxu0 %v889
        %v891 = vand.u32 %v616, 4294901760
        %v892 = vsub.f32 %v616, %v891
        %v893 = vand.u32 %v892, 4294901760
        %v894 = vsub.f32 %v892, %v893
        %v895 = vand.u32 %v894, 4294901760
        %896 = vmatpush1.msra.mxu0 %v895
        %v897 = vand.u32 %v619, 4294901760
        %v898 = vsub.f32 %v619, %v897
        %v899 = vand.u32 %v898, 4294901760
        %v900 = vsub.f32 %v898, %v899
        %v901 = vand.u32 %v900, 4294901760
        %902 = vmatprep.subr.mxu0 %v901
        %v903 = vand.u32 %v618, 4294901760
        %v904 = vsub.f32 %v618, %v903
        %v905 = vand.u32 %v904, 4294901760
        %v906 = vsub.f32 %v904, %v905
        %v907 = vand.u32 %v906, 4294901760
        %908 = vmatpush1.msra.mxu0 %v907
        %v909 = vand.u32 %v621, 4294901760
        %v910 = vsub.f32 %v621, %v909
        %v911 = vand.u32 %v910, 4294901760
        %v912 = vsub.f32 %v910, %v911
        %v913 = vand.u32 %v912, 4294901760
        %914 = vmatprep.subr.mxu0 %v913
        %v915 = vand.u32 %v620, 4294901760
        %v916 = vsub.f32 %v620, %v915
        %v917 = vand.u32 %v916, 4294901760
        %v918 = vsub.f32 %v916, %v917
        %v919 = vand.u32 %v918, 4294901760
        %920 = vmatpush1.msra.mxu0 %v919
        %v921 = vand.u32 %v623, 4294901760
        %v922 = vsub.f32 %v623, %v921
        %v923 = vand.u32 %v922, 4294901760
        %v924 = vsub.f32 %v922, %v923
        %v925 = vand.u32 %v924, 4294901760
        %926 = vmatprep.subr.mxu0 %v925
        %v927 = vand.u32 %v622, 4294901760
        %v928 = vsub.f32 %v622, %v927
        %v929 = vand.u32 %v928, 4294901760
        %v930 = vsub.f32 %v928, %v929
        %v931 = vand.u32 %v930, 4294901760
        %932 = vmatpush1.msra.mxu0 %v931
        %v933 = vand.u32 %v625, 4294901760
        %v934 = vsub.f32 %v625, %v933
        %v935 = vand.u32 %v934, 4294901760
        %v936 = vsub.f32 %v934, %v935
        %v937 = vand.u32 %v936, 4294901760
        %938 = vmatprep.subr.mxu0 %v937
        %v939 = vand.u32 %v624, 4294901760
        %v940 = vsub.f32 %v624, %v939
        %v941 = vand.u32 %v940, 4294901760
        %v942 = vsub.f32 %v940, %v941
        %v943 = vand.u32 %v942, 4294901760
        %944 = vmatpush1.msra.mxu0 %v943
        %v945 = vand.u32 %v627, 4294901760
        %v946 = vsub.f32 %v627, %v945
        %v947 = vand.u32 %v946, 4294901760
        %v948 = vsub.f32 %v946, %v947
        %v949 = vand.u32 %v948, 4294901760
        %950 = vmatprep.subr.mxu0 %v949
        %v951 = vand.u32 %v626, 4294901760
        %v952 = vsub.f32 %v626, %v951
        %v953 = vand.u32 %v952, 4294901760
        %v954 = vsub.f32 %v952, %v953
        %v955 = vand.u32 %v954, 4294901760
        %956 = vmatpush1.msra.mxu0 %v955
        %v957 = vand.u32 %v629, 4294901760
        %v958 = vsub.f32 %v629, %v957
        %v959 = vand.u32 %v958, 4294901760
        %v960 = vsub.f32 %v958, %v959
        %v961 = vand.u32 %v960, 4294901760
        %962 = vmatprep.subr.mxu0 %v961
        %v963 = vand.u32 %v628, 4294901760
        %v964 = vsub.f32 %v628, %v963
        %v965 = vand.u32 %v964, 4294901760
        %v966 = vsub.f32 %v964, %v965
        %v967 = vand.u32 %v966, 4294901760
        %968 = vmatpush1.msra.mxu0 %v967
        %v969 = vand.u32 %v631, 4294901760
        %v970 = vsub.f32 %v631, %v969
        %v971 = vand.u32 %v970, 4294901760
        %v972 = vsub.f32 %v970, %v971
        %v973 = vand.u32 %v972, 4294901760
        %974 = vmatprep.subr.mxu0 %v973
        %v975 = vand.u32 %v630, 4294901760
        %v976 = vsub.f32 %v630, %v975
        %v977 = vand.u32 %v976, 4294901760
        %v978 = vsub.f32 %v976, %v977
        %v979 = vand.u32 %v978, 4294901760
        %980 = vmatpush1.msra.mxu0 %v979
        %v981 = vand.u32 %v633, 4294901760
        %v982 = vsub.f32 %v633, %v981
        %v983 = vand.u32 %v982, 4294901760
        %v984 = vsub.f32 %v982, %v983
        %v985 = vand.u32 %v984, 4294901760
        %986 = vmatprep.subr.mxu0 %v985
        %v987 = vand.u32 %v632, 4294901760
        %v988 = vsub.f32 %v632, %v987
        %v989 = vand.u32 %v988, 4294901760
        %v990 = vsub.f32 %v988, %v989
        %v991 = vand.u32 %v990, 4294901760
        %992 = vmatpush1.msra.mxu0 %v991
        %v993 = vand.u32 %v635, 4294901760
        %v994 = vsub.f32 %v635, %v993
        %v995 = vand.u32 %v994, 4294901760
        %v996 = vsub.f32 %v994, %v995
        %v997 = vand.u32 %v996, 4294901760
        %998 = vmatprep.subr.mxu0 %v997
        %v999 = vand.u32 %v634, 4294901760
        %v1000 = vsub.f32 %v634, %v999
        %v1001 = vand.u32 %v1000, 4294901760
        %v1002 = vsub.f32 %v1000, %v1001
        %v1003 = vand.u32 %v1002, 4294901760
        %1004 = vmatpush1.msra.mxu0 %v1003
        %v1005 = vand.u32 %v637, 4294901760
        %v1006 = vsub.f32 %v637, %v1005
        %v1007 = vand.u32 %v1006, 4294901760
        %v1008 = vsub.f32 %v1006, %v1007
        %v1009 = vand.u32 %v1008, 4294901760
        %1010 = vmatprep.subr.mxu0 %v1009
        %v1011 = vand.u32 %v636, 4294901760
        %v1012 = vsub.f32 %v636, %v1011
        %v1013 = vand.u32 %v1012, 4294901760
        %v1014 = vsub.f32 %v1012, %v1013
        %v1015 = vand.u32 %v1014, 4294901760
        %1016 = vmatpush1.msra.mxu0 %v1015
        %v1017 = vand.u32 %v639, 4294901760
        %v1018 = vsub.f32 %v639, %v1017
        %v1019 = vand.u32 %v1018, 4294901760
        %v1020 = vsub.f32 %v1018, %v1019
        %v1021 = vand.u32 %v1020, 4294901760
        %1022 = vmatprep.subr.mxu0 %v1021
        %v1023 = vand.u32 %v638, 4294901760
        %v1024 = vsub.f32 %v638, %v1023
        %v1025 = vand.u32 %v1024, 4294901760
        %v1026 = vsub.f32 %v1024, %v1025
        %v1027 = vand.u32 %v1026, 4294901760
        %1028 = vmatpush1.msra.mxu0 %v1027
        %v1029 = vand.u32 %v641, 4294901760
        %v1030 = vsub.f32 %v641, %v1029
        %v1031 = vand.u32 %v1030, 4294901760
        %v1032 = vsub.f32 %v1030, %v1031
        %v1033 = vand.u32 %v1032, 4294901760
        %1034 = vmatprep.subr.mxu0 %v1033
        %v1035 = vand.u32 %v640, 4294901760
        %v1036 = vsub.f32 %v640, %v1035
        %v1037 = vand.u32 %v1036, 4294901760
        %v1038 = vsub.f32 %v1036, %v1037
        %v1039 = vand.u32 %v1038, 4294901760
        %1040 = vmatpush1.msra.mxu0 %v1039
        %v1041 = vand.u32 %v643, 4294901760
        %v1042 = vsub.f32 %v643, %v1041
        %v1043 = vand.u32 %v1042, 4294901760
        %v1044 = vsub.f32 %v1042, %v1043
        %v1045 = vand.u32 %v1044, 4294901760
        %1046 = vmatprep.subr.mxu0 %v1045
        %v1047 = vand.u32 %v642, 4294901760
        %v1048 = vsub.f32 %v642, %v1047
        %v1049 = vand.u32 %v1048, 4294901760
        %v1050 = vsub.f32 %v1048, %v1049
        %v1051 = vand.u32 %v1050, 4294901760
        %1052 = vmatpush1.msra.mxu0 %v1051
        %v1053 = vand.u32 %v645, 4294901760
        %v1054 = vsub.f32 %v645, %v1053
        %v1055 = vand.u32 %v1054, 4294901760
        %v1056 = vsub.f32 %v1054, %v1055
        %v1057 = vand.u32 %v1056, 4294901760
        %1058 = vmatprep.subr.mxu0 %v1057
        %v1059 = vand.u32 %v644, 4294901760
        %v1060 = vsub.f32 %v644, %v1059
        %v1061 = vand.u32 %v1060, 4294901760
        %v1062 = vsub.f32 %v1060, %v1061
        %v1063 = vand.u32 %v1062, 4294901760
        %1064 = vmatpush1.msra.mxu0 %v1063
        %v1065 = vand.u32 %v647, 4294901760
        %v1066 = vsub.f32 %v647, %v1065
        %v1067 = vand.u32 %v1066, 4294901760
        %v1068 = vsub.f32 %v1066, %v1067
        %v1069 = vand.u32 %v1068, 4294901760
        %1070 = vmatprep.subr.mxu0 %v1069
        %v1071 = vand.u32 %v646, 4294901760
        %v1072 = vsub.f32 %v646, %v1071
        %v1073 = vand.u32 %v1072, 4294901760
        %v1074 = vsub.f32 %v1072, %v1073
        %v1075 = vand.u32 %v1074, 4294901760
        %1076 = vmatpush1.msra.mxu0 %v1075
        %v1077 = vand.u32 %v649, 4294901760
        %v1078 = vsub.f32 %v649, %v1077
        %v1079 = vand.u32 %v1078, 4294901760
        %v1080 = vsub.f32 %v1078, %v1079
        %v1081 = vand.u32 %v1080, 4294901760
        %1082 = vmatprep.subr.mxu0 %v1081
        %v1083 = vand.u32 %v648, 4294901760
        %v1084 = vsub.f32 %v648, %v1083
        %v1085 = vand.u32 %v1084, 4294901760
        %v1086 = vsub.f32 %v1084, %v1085
        %v1087 = vand.u32 %v1086, 4294901760
        %1088 = vmatpush1.msra.mxu0 %v1087
        %v1089 = vand.u32 %v651, 4294901760
        %v1090 = vsub.f32 %v651, %v1089
        %v1091 = vand.u32 %v1090, 4294901760
        %v1092 = vsub.f32 %v1090, %v1091
        %v1093 = vand.u32 %v1092, 4294901760
        %1094 = vmatprep.subr.mxu0 %v1093
        %v1095 = vand.u32 %v650, 4294901760
        %v1096 = vsub.f32 %v650, %v1095
        %v1097 = vand.u32 %v1096, 4294901760
        %v1098 = vsub.f32 %v1096, %v1097
        %v1099 = vand.u32 %v1098, 4294901760
        %1100 = vmatpush1.msra.mxu0 %v1099
        %v1101 = vand.u32 %v653, 4294901760
        %v1102 = vsub.f32 %v653, %v1101
        %v1103 = vand.u32 %v1102, 4294901760
        %v1104 = vsub.f32 %v1102, %v1103
        %v1105 = vand.u32 %v1104, 4294901760
        %1106 = vmatprep.subr.mxu0 %v1105
        %v1107 = vand.u32 %v652, 4294901760
        %v1108 = vsub.f32 %v652, %v1107
        %v1109 = vand.u32 %v1108, 4294901760
        %v1110 = vsub.f32 %v1108, %v1109
        %v1111 = vand.u32 %v1110, 4294901760
        %1112 = vmatpush1.msra.mxu0 %v1111
        %v1113 = vand.u32 %v655, 4294901760
        %v1114 = vsub.f32 %v655, %v1113
        %v1115 = vand.u32 %v1114, 4294901760
        %v1116 = vsub.f32 %v1114, %v1115
        %v1117 = vand.u32 %v1116, 4294901760
        %1118 = vmatprep.subr.mxu0 %v1117
        %v1119 = vand.u32 %v654, 4294901760
        %v1120 = vsub.f32 %v654, %v1119
        %v1121 = vand.u32 %v1120, 4294901760
        %v1122 = vsub.f32 %v1120, %v1121
        %v1123 = vand.u32 %v1122, 4294901760
        %1124 = vmatpush1.msra.mxu0 %v1123
        %v1125 = vand.u32 %v657, 4294901760
        %v1126 = vsub.f32 %v657, %v1125
        %v1127 = vand.u32 %v1126, 4294901760
        %v1128 = vsub.f32 %v1126, %v1127
        %v1129 = vand.u32 %v1128, 4294901760
        %1130 = vmatprep.subr.mxu0 %v1129
        %v1131 = vand.u32 %v656, 4294901760
        %v1132 = vsub.f32 %v656, %v1131
        %v1133 = vand.u32 %v1132, 4294901760
        %v1134 = vsub.f32 %v1132, %v1133
        %v1135 = vand.u32 %v1134, 4294901760
        %1136 = vmatpush1.msra.mxu0 %v1135
        %v1137 = vand.u32 %v659, 4294901760
        %v1138 = vsub.f32 %v659, %v1137
        %v1139 = vand.u32 %v1138, 4294901760
        %v1140 = vsub.f32 %v1138, %v1139
        %v1141 = vand.u32 %v1140, 4294901760
        %1142 = vmatprep.subr.mxu0 %v1141
        %v1143 = vand.u32 %v658, 4294901760
        %v1144 = vsub.f32 %v658, %v1143
        %v1145 = vand.u32 %v1144, 4294901760
        %v1146 = vsub.f32 %v1144, %v1145
        %v1147 = vand.u32 %v1146, 4294901760
        %1148 = vmatpush1.msra.mxu0 %v1147
        %v1149 = vand.u32 %v661, 4294901760
        %v1150 = vsub.f32 %v661, %v1149
        %v1151 = vand.u32 %v1150, 4294901760
        %v1152 = vsub.f32 %v1150, %v1151
        %v1153 = vand.u32 %v1152, 4294901760
        %1154 = vmatprep.subr.mxu0 %v1153
        %v1155 = vand.u32 %v660, 4294901760
        %v1156 = vsub.f32 %v660, %v1155
        %v1157 = vand.u32 %v1156, 4294901760
        %v1158 = vsub.f32 %v1156, %v1157
        %v1159 = vand.u32 %v1158, 4294901760
        %1160 = vmatpush1.msra.mxu0 %v1159
        %v1161 = vand.u32 %v663, 4294901760
        %v1162 = vsub.f32 %v663, %v1161
        %v1163 = vand.u32 %v1162, 4294901760
        %v1164 = vsub.f32 %v1162, %v1163
        %v1165 = vand.u32 %v1164, 4294901760
        %1166 = vmatprep.subr.mxu0 %v1165
        %v1167 = vand.u32 %v662, 4294901760
        %v1168 = vsub.f32 %v662, %v1167
        %v1169 = vand.u32 %v1168, 4294901760
        %v1170 = vsub.f32 %v1168, %v1169
        %v1171 = vand.u32 %v1170, 4294901760
        %1172 = vmatpush1.msra.mxu0 %v1171
        %v1173 = vand.u32 %v665, 4294901760
        %v1174 = vsub.f32 %v665, %v1173
        %v1175 = vand.u32 %v1174, 4294901760
        %v1176 = vsub.f32 %v1174, %v1175
        %v1177 = vand.u32 %v1176, 4294901760
        %1178 = vmatprep.subr.mxu0 %v1177
        %v1179 = vand.u32 %v664, 4294901760
        %v1180 = vsub.f32 %v664, %v1179
        %v1181 = vand.u32 %v1180, 4294901760
        %v1182 = vsub.f32 %v1180, %v1181
        %v1183 = vand.u32 %v1182, 4294901760
        %1184 = vmatpush1.msra.mxu0 %v1183
        %v1185 = vand.u32 %v667, 4294901760
        %v1186 = vsub.f32 %v667, %v1185
        %v1187 = vand.u32 %v1186, 4294901760
        %v1188 = vsub.f32 %v1186, %v1187
        %v1189 = vand.u32 %v1188, 4294901760
        %1190 = vmatprep.subr.mxu0 %v1189
        %v1191 = vand.u32 %v666, 4294901760
        %v1192 = vsub.f32 %v666, %v1191
        %v1193 = vand.u32 %v1192, 4294901760
        %v1194 = vsub.f32 %v1192, %v1193
        %v1195 = vand.u32 %v1194, 4294901760
        %1196 = vmatpush1.msra.mxu0 %v1195
        %v1197 = vand.u32 %v538, 4294901760
        %1198 = vmatprep.mubr.f32.mxu0 %v1197
        %v1199 = vand.u32 %v531, 4294901760
        %1200 = vmatmul.mubr.f32.gmra.mrb[0].mxu0 %v1199
        %v1201 = vpop.f32.mrb[0].mxu0
        %v1202 = vadd.f32 %v809, %v1201
        %v1203 = vpop.f32.mrb[0].mxu0
        %v1204 = vadd.f32 %v811, %v1203
        %1205 = vdwg.mxu0
        %v1206 = vand.u32 %v605, 4294901760
        %v1207 = vsub.f32 %v605, %v1206
        %1208 = vmatprep.subr.mxu0 %v1207
        %v1209 = vand.u32 %v604, 4294901760
        %v1210 = vsub.f32 %v604, %v1209
        %1211 = vmatpush1.msra.mxu0 %v1210
        %v1212 = vand.u32 %v607, 4294901760
        %v1213 = vsub.f32 %v607, %v1212
        %1214 = vmatprep.subr.mxu0 %v1213
        %v1215 = vand.u32 %v606, 4294901760
        %v1216 = vsub.f32 %v606, %v1215
        %1217 = vmatpush1.msra.mxu0 %v1216
        %v1218 = vand.u32 %v609, 4294901760
        %v1219 = vsub.f32 %v609, %v1218
        %1220 = vmatprep.subr.mxu0 %v1219
        %v1221 = vand.u32 %v608, 4294901760
        %v1222 = vsub.f32 %v608, %v1221
        %1223 = vmatpush1.msra.mxu0 %v1222
        %v1224 = vand.u32 %v611, 4294901760
        %v1225 = vsub.f32 %v611, %v1224
        %1226 = vmatprep.subr.mxu0 %v1225
        %v1227 = vand.u32 %v610, 4294901760
        %v1228 = vsub.f32 %v610, %v1227
        %1229 = vmatpush1.msra.mxu0 %v1228
        %v1230 = vand.u32 %v613, 4294901760
        %v1231 = vsub.f32 %v613, %v1230
        %1232 = vmatprep.subr.mxu0 %v1231
        %v1233 = vand.u32 %v612, 4294901760
        %v1234 = vsub.f32 %v612, %v1233
        %1235 = vmatpush1.msra.mxu0 %v1234
        %v1236 = vand.u32 %v615, 4294901760
        %v1237 = vsub.f32 %v615, %v1236
        %1238 = vmatprep.subr.mxu0 %v1237
        %v1239 = vand.u32 %v614, 4294901760
        %v1240 = vsub.f32 %v614, %v1239
        %1241 = vmatpush1.msra.mxu0 %v1240
        %v1242 = vand.u32 %v617, 4294901760
        %v1243 = vsub.f32 %v617, %v1242
        %1244 = vmatprep.subr.mxu0 %v1243
        %v1245 = vand.u32 %v616, 4294901760
        %v1246 = vsub.f32 %v616, %v1245
        %1247 = vmatpush1.msra.mxu0 %v1246
        %v1248 = vand.u32 %v619, 4294901760
        %v1249 = vsub.f32 %v619, %v1248
        %1250 = vmatprep.subr.mxu0 %v1249
        %v1251 = vand.u32 %v618, 4294901760
        %v1252 = vsub.f32 %v618, %v1251
        %1253 = vmatpush1.msra.mxu0 %v1252
        %v1254 = vand.u32 %v621, 4294901760
        %v1255 = vsub.f32 %v621, %v1254
        %1256 = vmatprep.subr.mxu0 %v1255
        %v1257 = vand.u32 %v620, 4294901760
        %v1258 = vsub.f32 %v620, %v1257
        %1259 = vmatpush1.msra.mxu0 %v1258
        %v1260 = vand.u32 %v623, 4294901760
        %v1261 = vsub.f32 %v623, %v1260
        %1262 = vmatprep.subr.mxu0 %v1261
        %v1263 = vand.u32 %v622, 4294901760
        %v1264 = vsub.f32 %v622, %v1263
        %1265 = vmatpush1.msra.mxu0 %v1264
        %v1266 = vand.u32 %v625, 4294901760
        %v1267 = vsub.f32 %v625, %v1266
        %1268 = vmatprep.subr.mxu0 %v1267
        %v1269 = vand.u32 %v624, 4294901760
        %v1270 = vsub.f32 %v624, %v1269
        %1271 = vmatpush1.msra.mxu0 %v1270
        %v1272 = vand.u32 %v627, 4294901760
        %v1273 = vsub.f32 %v627, %v1272
        %1274 = vmatprep.subr.mxu0 %v1273
        %v1275 = vand.u32 %v626, 4294901760
        %v1276 = vsub.f32 %v626, %v1275
        %1277 = vmatpush1.msra.mxu0 %v1276
        %v1278 = vand.u32 %v629, 4294901760
        %v1279 = vsub.f32 %v629, %v1278
        %1280 = vmatprep.subr.mxu0 %v1279
        %v1281 = vand.u32 %v628, 4294901760
        %v1282 = vsub.f32 %v628, %v1281
        %1283 = vmatpush1.msra.mxu0 %v1282
        %v1284 = vand.u32 %v631, 4294901760
        %v1285 = vsub.f32 %v631, %v1284
        %1286 = vmatprep.subr.mxu0 %v1285
        %v1287 = vand.u32 %v630, 4294901760
        %v1288 = vsub.f32 %v630, %v1287
        %1289 = vmatpush1.msra.mxu0 %v1288
        %v1290 = vand.u32 %v633, 4294901760
        %v1291 = vsub.f32 %v633, %v1290
        %1292 = vmatprep.subr.mxu0 %v1291
        %v1293 = vand.u32 %v632, 4294901760
        %v1294 = vsub.f32 %v632, %v1293
        %1295 = vmatpush1.msra.mxu0 %v1294
        %v1296 = vand.u32 %v635, 4294901760
        %v1297 = vsub.f32 %v635, %v1296
        %1298 = vmatprep.subr.mxu0 %v1297
        %v1299 = vand.u32 %v634, 4294901760
        %v1300 = vsub.f32 %v634, %v1299
        %1301 = vmatpush1.msra.mxu0 %v1300
        %v1302 = vand.u32 %v637, 4294901760
        %v1303 = vsub.f32 %v637, %v1302
        %1304 = vmatprep.subr.mxu0 %v1303
        %v1305 = vand.u32 %v636, 4294901760
        %v1306 = vsub.f32 %v636, %v1305
        %1307 = vmatpush1.msra.mxu0 %v1306
        %v1308 = vand.u32 %v639, 4294901760
        %v1309 = vsub.f32 %v639, %v1308
        %1310 = vmatprep.subr.mxu0 %v1309
        %v1311 = vand.u32 %v638, 4294901760
        %v1312 = vsub.f32 %v638, %v1311
        %1313 = vmatpush1.msra.mxu0 %v1312
        %v1314 = vand.u32 %v641, 4294901760
        %v1315 = vsub.f32 %v641, %v1314
        %1316 = vmatprep.subr.mxu0 %v1315
        %v1317 = vand.u32 %v640, 4294901760
        %v1318 = vsub.f32 %v640, %v1317
        %1319 = vmatpush1.msra.mxu0 %v1318
        %v1320 = vand.u32 %v643, 4294901760
        %v1321 = vsub.f32 %v643, %v1320
        %1322 = vmatprep.subr.mxu0 %v1321
        %v1323 = vand.u32 %v642, 4294901760
        %v1324 = vsub.f32 %v642, %v1323
        %1325 = vmatpush1.msra.mxu0 %v1324
        %v1326 = vand.u32 %v645, 4294901760
        %v1327 = vsub.f32 %v645, %v1326
        %1328 = vmatprep.subr.mxu0 %v1327
        %v1329 = vand.u32 %v644, 4294901760
        %v1330 = vsub.f32 %v644, %v1329
        %1331 = vmatpush1.msra.mxu0 %v1330
        %v1332 = vand.u32 %v647, 4294901760
        %v1333 = vsub.f32 %v647, %v1332
        %1334 = vmatprep.subr.mxu0 %v1333
        %v1335 = vand.u32 %v646, 4294901760
        %v1336 = vsub.f32 %v646, %v1335
        %1337 = vmatpush1.msra.mxu0 %v1336
        %v1338 = vand.u32 %v649, 4294901760
        %v1339 = vsub.f32 %v649, %v1338
        %1340 = vmatprep.subr.mxu0 %v1339
        %v1341 = vand.u32 %v648, 4294901760
        %v1342 = vsub.f32 %v648, %v1341
        %1343 = vmatpush1.msra.mxu0 %v1342
        %v1344 = vand.u32 %v651, 4294901760
        %v1345 = vsub.f32 %v651, %v1344
        %1346 = vmatprep.subr.mxu0 %v1345
        %v1347 = vand.u32 %v650, 4294901760
        %v1348 = vsub.f32 %v650, %v1347
        %1349 = vmatpush1.msra.mxu0 %v1348
        %v1350 = vand.u32 %v653, 4294901760
        %v1351 = vsub.f32 %v653, %v1350
        %1352 = vmatprep.subr.mxu0 %v1351
        %v1353 = vand.u32 %v652, 4294901760
        %v1354 = vsub.f32 %v652, %v1353
        %1355 = vmatpush1.msra.mxu0 %v1354
        %v1356 = vand.u32 %v655, 4294901760
        %v1357 = vsub.f32 %v655, %v1356
        %1358 = vmatprep.subr.mxu0 %v1357
        %v1359 = vand.u32 %v654, 4294901760
        %v1360 = vsub.f32 %v654, %v1359
        %1361 = vmatpush1.msra.mxu0 %v1360
        %v1362 = vand.u32 %v657, 4294901760
        %v1363 = vsub.f32 %v657, %v1362
        %1364 = vmatprep.subr.mxu0 %v1363
        %v1365 = vand.u32 %v656, 4294901760
        %v1366 = vsub.f32 %v656, %v1365
        %1367 = vmatpush1.msra.mxu0 %v1366
        %v1368 = vand.u32 %v659, 4294901760
        %v1369 = vsub.f32 %v659, %v1368
        %1370 = vmatprep.subr.mxu0 %v1369
        %v1371 = vand.u32 %v658, 4294901760
        %v1372 = vsub.f32 %v658, %v1371
        %1373 = vmatpush1.msra.mxu0 %v1372
        %v1374 = vand.u32 %v661, 4294901760
        %v1375 = vsub.f32 %v661, %v1374
        %1376 = vmatprep.subr.mxu0 %v1375
        %v1377 = vand.u32 %v660, 4294901760
        %v1378 = vsub.f32 %v660, %v1377
        %1379 = vmatpush1.msra.mxu0 %v1378
        %v1380 = vand.u32 %v663, 4294901760
        %v1381 = vsub.f32 %v663, %v1380
        %1382 = vmatprep.subr.mxu0 %v1381
        %v1383 = vand.u32 %v662, 4294901760
        %v1384 = vsub.f32 %v662, %v1383
        %1385 = vmatpush1.msra.mxu0 %v1384
        %v1386 = vand.u32 %v665, 4294901760
        %v1387 = vsub.f32 %v665, %v1386
        %1388 = vmatprep.subr.mxu0 %v1387
        %v1389 = vand.u32 %v664, 4294901760
        %v1390 = vsub.f32 %v664, %v1389
        %1391 = vmatpush1.msra.mxu0 %v1390
        %v1392 = vand.u32 %v667, 4294901760
        %v1393 = vsub.f32 %v667, %v1392
        %1394 = vmatprep.subr.mxu0 %v1393
        %v1395 = vand.u32 %v666, 4294901760
        %v1396 = vsub.f32 %v666, %v1395
        %1397 = vmatpush1.msra.mxu0 %v1396
        %v1398 = vand.u32 %v538, 4294901760
        %v1399 = vsub.f32 %v538, %v1398
        %1400 = vmatprep.mubr.f32.mxu0 %v1399
        %v1401 = vand.u32 %v531, 4294901760
        %v1402 = vsub.f32 %v531, %v1401
        %1403 = vmatmul.mubr.f32.gmra.mrb[0].mxu0 %v1402
        %v1404 = vpop.f32.mrb[0].mxu0
        %v1405 = vadd.f32 %v1202, %v1404
        %v1406 = vpop.f32.mrb[0].mxu0
        %v1407 = vadd.f32 %v1204, %v1406
        %1408 = vdwg.mxu0
        %v1409 = vand.u32 %v605, 4294901760
        %1410 = vmatprep.subr.mxu0 %v1409
        %v1411 = vand.u32 %v604, 4294901760
        %1412 = vmatpush1.msra.mxu0 %v1411
        %v1413 = vand.u32 %v607, 4294901760
        %1414 = vmatprep.subr.mxu0 %v1413
        %v1415 = vand.u32 %v606, 4294901760
        %1416 = vmatpush1.msra.mxu0 %v1415
        %v1417 = vand.u32 %v609, 4294901760
        %1418 = vmatprep.subr.mxu0 %v1417
        %v1419 = vand.u32 %v608, 4294901760
        %1420 = vmatpush1.msra.mxu0 %v1419
        %v1421 = vand.u32 %v611, 4294901760
        %1422 = vmatprep.subr.mxu0 %v1421
        %v1423 = vand.u32 %v610, 4294901760
        %1424 = vmatpush1.msra.mxu0 %v1423
        %v1425 = vand.u32 %v613, 4294901760
        %1426 = vmatprep.subr.mxu0 %v1425
        %v1427 = vand.u32 %v612, 4294901760
        %1428 = vmatpush1.msra.mxu0 %v1427
        %v1429 = vand.u32 %v615, 4294901760
        %1430 = vmatprep.subr.mxu0 %v1429
        %v1431 = vand.u32 %v614, 4294901760
        %1432 = vmatpush1.msra.mxu0 %v1431
        %v1433 = vand.u32 %v617, 4294901760
        %1434 = vmatprep.subr.mxu0 %v1433
        %v1435 = vand.u32 %v616, 4294901760
        %1436 = vmatpush1.msra.mxu0 %v1435
        %v1437 = vand.u32 %v619, 4294901760
        %1438 = vmatprep.subr.mxu0 %v1437
        %v1439 = vand.u32 %v618, 4294901760
        %1440 = vmatpush1.msra.mxu0 %v1439
        %v1441 = vand.u32 %v621, 4294901760
        %1442 = vmatprep.subr.mxu0 %v1441
        %v1443 = vand.u32 %v620, 4294901760
        %1444 = vmatpush1.msra.mxu0 %v1443
        %v1445 = vand.u32 %v623, 4294901760
        %1446 = vmatprep.subr.mxu0 %v1445
        %v1447 = vand.u32 %v622, 4294901760
        %1448 = vmatpush1.msra.mxu0 %v1447
        %v1449 = vand.u32 %v625, 4294901760
        %1450 = vmatprep.subr.mxu0 %v1449
        %v1451 = vand.u32 %v624, 4294901760
        %1452 = vmatpush1.msra.mxu0 %v1451
        %v1453 = vand.u32 %v627, 4294901760
        %1454 = vmatprep.subr.mxu0 %v1453
        %v1455 = vand.u32 %v626, 4294901760
        %1456 = vmatpush1.msra.mxu0 %v1455
        %v1457 = vand.u32 %v629, 4294901760
        %1458 = vmatprep.subr.mxu0 %v1457
        %v1459 = vand.u32 %v628, 4294901760
        %1460 = vmatpush1.msra.mxu0 %v1459
        %v1461 = vand.u32 %v631, 4294901760
        %1462 = vmatprep.subr.mxu0 %v1461
        %v1463 = vand.u32 %v630, 4294901760
        %1464 = vmatpush1.msra.mxu0 %v1463
        %v1465 = vand.u32 %v633, 4294901760
        %1466 = vmatprep.subr.mxu0 %v1465
        %v1467 = vand.u32 %v632, 4294901760
        %1468 = vmatpush1.msra.mxu0 %v1467
        %v1469 = vand.u32 %v635, 4294901760
        %1470 = vmatprep.subr.mxu0 %v1469
        %v1471 = vand.u32 %v634, 4294901760
        %1472 = vmatpush1.msra.mxu0 %v1471
        %v1473 = vand.u32 %v637, 4294901760
        %1474 = vmatprep.subr.mxu0 %v1473
        %v1475 = vand.u32 %v636, 4294901760
        %1476 = vmatpush1.msra.mxu0 %v1475
        %v1477 = vand.u32 %v639, 4294901760
        %1478 = vmatprep.subr.mxu0 %v1477
        %v1479 = vand.u32 %v638, 4294901760
        %1480 = vmatpush1.msra.mxu0 %v1479
        %v1481 = vand.u32 %v641, 4294901760
        %1482 = vmatprep.subr.mxu0 %v1481
        %v1483 = vand.u32 %v640, 4294901760
        %1484 = vmatpush1.msra.mxu0 %v1483
        %v1485 = vand.u32 %v643, 4294901760
        %1486 = vmatprep.subr.mxu0 %v1485
        %v1487 = vand.u32 %v642, 4294901760
        %1488 = vmatpush1.msra.mxu0 %v1487
        %v1489 = vand.u32 %v645, 4294901760
        %1490 = vmatprep.subr.mxu0 %v1489
        %v1491 = vand.u32 %v644, 4294901760
        %1492 = vmatpush1.msra.mxu0 %v1491
        %v1493 = vand.u32 %v647, 4294901760
        %1494 = vmatprep.subr.mxu0 %v1493
        %v1495 = vand.u32 %v646, 4294901760
        %1496 = vmatpush1.msra.mxu0 %v1495
        %v1497 = vand.u32 %v649, 4294901760
        %1498 = vmatprep.subr.mxu0 %v1497
        %v1499 = vand.u32 %v648, 4294901760
        %1500 = vmatpush1.msra.mxu0 %v1499
        %v1501 = vand.u32 %v651, 4294901760
        %1502 = vmatprep.subr.mxu0 %v1501
        %v1503 = vand.u32 %v650, 4294901760
        %1504 = vmatpush1.msra.mxu0 %v1503
        %v1505 = vand.u32 %v653, 4294901760
        %1506 = vmatprep.subr.mxu0 %v1505
        %v1507 = vand.u32 %v652, 4294901760
        %1508 = vmatpush1.msra.mxu0 %v1507
        %v1509 = vand.u32 %v655, 4294901760
        %1510 = vmatprep.subr.mxu0 %v1509
        %v1511 = vand.u32 %v654, 4294901760
        %1512 = vmatpush1.msra.mxu0 %v1511
        %v1513 = vand.u32 %v657, 4294901760
        %1514 = vmatprep.subr.mxu0 %v1513
        %v1515 = vand.u32 %v656, 4294901760
        %1516 = vmatpush1.msra.mxu0 %v1515
        %v1517 = vand.u32 %v659, 4294901760
        %1518 = vmatprep.subr.mxu0 %v1517
        %v1519 = vand.u32 %v658, 4294901760
        %1520 = vmatpush1.msra.mxu0 %v1519
        %v1521 = vand.u32 %v661, 4294901760
        %1522 = vmatprep.subr.mxu0 %v1521
        %v1523 = vand.u32 %v660, 4294901760
        %1524 = vmatpush1.msra.mxu0 %v1523
        %v1525 = vand.u32 %v663, 4294901760
        %1526 = vmatprep.subr.mxu0 %v1525
        %v1527 = vand.u32 %v662, 4294901760
        %1528 = vmatpush1.msra.mxu0 %v1527
        %v1529 = vand.u32 %v665, 4294901760
        %1530 = vmatprep.subr.mxu0 %v1529
        %v1531 = vand.u32 %v664, 4294901760
        %1532 = vmatpush1.msra.mxu0 %v1531
        %v1533 = vand.u32 %v667, 4294901760
        %1534 = vmatprep.subr.mxu0 %v1533
        %v1535 = vand.u32 %v666, 4294901760
        %1536 = vmatpush1.msra.mxu0 %v1535
        %v1537 = vand.u32 %v538, 4294901760
        %v1538 = vsub.f32 %v538, %v1537
        %v1539 = vand.u32 %v1538, 4294901760
        %1540 = vmatprep.mubr.f32.mxu0 %v1539
        %v1541 = vand.u32 %v531, 4294901760
        %v1542 = vsub.f32 %v531, %v1541
        %v1543 = vand.u32 %v1542, 4294901760
        %1544 = vmatmul.mubr.f32.gmra.mrb[0].mxu0 %v1543
        %v1545 = vpop.f32.mrb[0].mxu0
        %v1546 = vadd.f32 %v1405, %v1545
        %v1547 = vpop.f32.mrb[0].mxu0
        %v1548 = vadd.f32 %v1407, %v1547
        %1549 = vdwg.mxu0
        %v1550 = vand.u32 %v605, 4294901760
        %v1551 = vsub.f32 %v605, %v1550
        %v1552 = vand.u32 %v1551, 4294901760
        %1553 = vmatprep.subr.mxu0 %v1552
        %v1554 = vand.u32 %v604, 4294901760
        %v1555 = vsub.f32 %v604, %v1554
        %v1556 = vand.u32 %v1555, 4294901760
        %1557 = vmatpush1.msra.mxu0 %v1556
        %v1558 = vand.u32 %v607, 4294901760
        %v1559 = vsub.f32 %v607, %v1558
        %v1560 = vand.u32 %v1559, 4294901760
        %1561 = vmatprep.subr.mxu0 %v1560
        %v1562 = vand.u32 %v606, 4294901760
        %v1563 = vsub.f32 %v606, %v1562
        %v1564 = vand.u32 %v1563, 4294901760
        %1565 = vmatpush1.msra.mxu0 %v1564
        %v1566 = vand.u32 %v609, 4294901760
        %v1567 = vsub.f32 %v609, %v1566
        %v1568 = vand.u32 %v1567, 4294901760
        %1569 = vmatprep.subr.mxu0 %v1568
        %v1570 = vand.u32 %v608, 4294901760
        %v1571 = vsub.f32 %v608, %v1570
        %v1572 = vand.u32 %v1571, 4294901760
        %1573 = vmatpush1.msra.mxu0 %v1572
        %v1574 = vand.u32 %v611, 4294901760
        %v1575 = vsub.f32 %v611, %v1574
        %v1576 = vand.u32 %v1575, 4294901760
        %1577 = vmatprep.subr.mxu0 %v1576
        %v1578 = vand.u32 %v610, 4294901760
        %v1579 = vsub.f32 %v610, %v1578
        %v1580 = vand.u32 %v1579, 4294901760
        %1581 = vmatpush1.msra.mxu0 %v1580
        %v1582 = vand.u32 %v613, 4294901760
        %v1583 = vsub.f32 %v613, %v1582
        %v1584 = vand.u32 %v1583, 4294901760
        %1585 = vmatprep.subr.mxu0 %v1584
        %v1586 = vand.u32 %v612, 4294901760
        %v1587 = vsub.f32 %v612, %v1586
        %v1588 = vand.u32 %v1587, 4294901760
        %1589 = vmatpush1.msra.mxu0 %v1588
        %v1590 = vand.u32 %v615, 4294901760
        %v1591 = vsub.f32 %v615, %v1590
        %v1592 = vand.u32 %v1591, 4294901760
        %1593 = vmatprep.subr.mxu0 %v1592
        %v1594 = vand.u32 %v614, 4294901760
        %v1595 = vsub.f32 %v614, %v1594
        %v1596 = vand.u32 %v1595, 4294901760
        %1597 = vmatpush1.msra.mxu0 %v1596
        %v1598 = vand.u32 %v617, 4294901760
        %v1599 = vsub.f32 %v617, %v1598
        %v1600 = vand.u32 %v1599, 4294901760
        %1601 = vmatprep.subr.mxu0 %v1600
        %v1602 = vand.u32 %v616, 4294901760
        %v1603 = vsub.f32 %v616, %v1602
        %v1604 = vand.u32 %v1603, 4294901760
        %1605 = vmatpush1.msra.mxu0 %v1604
        %v1606 = vand.u32 %v619, 4294901760
        %v1607 = vsub.f32 %v619, %v1606
        %v1608 = vand.u32 %v1607, 4294901760
        %1609 = vmatprep.subr.mxu0 %v1608
        %v1610 = vand.u32 %v618, 4294901760
        %v1611 = vsub.f32 %v618, %v1610
        %v1612 = vand.u32 %v1611, 4294901760
        %1613 = vmatpush1.msra.mxu0 %v1612
        %v1614 = vand.u32 %v621, 4294901760
        %v1615 = vsub.f32 %v621, %v1614
        %v1616 = vand.u32 %v1615, 4294901760
        %1617 = vmatprep.subr.mxu0 %v1616
        %v1618 = vand.u32 %v620, 4294901760
        %v1619 = vsub.f32 %v620, %v1618
        %v1620 = vand.u32 %v1619, 4294901760
        %1621 = vmatpush1.msra.mxu0 %v1620
        %v1622 = vand.u32 %v623, 4294901760
        %v1623 = vsub.f32 %v623, %v1622
        %v1624 = vand.u32 %v1623, 4294901760
        %1625 = vmatprep.subr.mxu0 %v1624
        %v1626 = vand.u32 %v622, 4294901760
        %v1627 = vsub.f32 %v622, %v1626
        %v1628 = vand.u32 %v1627, 4294901760
        %1629 = vmatpush1.msra.mxu0 %v1628
        %v1630 = vand.u32 %v625, 4294901760
        %v1631 = vsub.f32 %v625, %v1630
        %v1632 = vand.u32 %v1631, 4294901760
        %1633 = vmatprep.subr.mxu0 %v1632
        %v1634 = vand.u32 %v624, 4294901760
        %v1635 = vsub.f32 %v624, %v1634
        %v1636 = vand.u32 %v1635, 4294901760
        %1637 = vmatpush1.msra.mxu0 %v1636
        %v1638 = vand.u32 %v627, 4294901760
        %v1639 = vsub.f32 %v627, %v1638
        %v1640 = vand.u32 %v1639, 4294901760
        %1641 = vmatprep.subr.mxu0 %v1640
        %v1642 = vand.u32 %v626, 4294901760
        %v1643 = vsub.f32 %v626, %v1642
        %v1644 = vand.u32 %v1643, 4294901760
        %1645 = vmatpush1.msra.mxu0 %v1644
        %v1646 = vand.u32 %v629, 4294901760
        %v1647 = vsub.f32 %v629, %v1646
        %v1648 = vand.u32 %v1647, 4294901760
        %1649 = vmatprep.subr.mxu0 %v1648
        %v1650 = vand.u32 %v628, 4294901760
        %v1651 = vsub.f32 %v628, %v1650
        %v1652 = vand.u32 %v1651, 4294901760
        %1653 = vmatpush1.msra.mxu0 %v1652
        %v1654 = vand.u32 %v631, 4294901760
        %v1655 = vsub.f32 %v631, %v1654
        %v1656 = vand.u32 %v1655, 4294901760
        %1657 = vmatprep.subr.mxu0 %v1656
        %v1658 = vand.u32 %v630, 4294901760
        %v1659 = vsub.f32 %v630, %v1658
        %v1660 = vand.u32 %v1659, 4294901760
        %1661 = vmatpush1.msra.mxu0 %v1660
        %v1662 = vand.u32 %v633, 4294901760
        %v1663 = vsub.f32 %v633, %v1662
        %v1664 = vand.u32 %v1663, 4294901760
        %1665 = vmatprep.subr.mxu0 %v1664
        %v1666 = vand.u32 %v632, 4294901760
        %v1667 = vsub.f32 %v632, %v1666
        %v1668 = vand.u32 %v1667, 4294901760
        %1669 = vmatpush1.msra.mxu0 %v1668
        %v1670 = vand.u32 %v635, 4294901760
        %v1671 = vsub.f32 %v635, %v1670
        %v1672 = vand.u32 %v1671, 4294901760
        %1673 = vmatprep.subr.mxu0 %v1672
        %v1674 = vand.u32 %v634, 4294901760
        %v1675 = vsub.f32 %v634, %v1674
        %v1676 = vand.u32 %v1675, 4294901760
        %1677 = vmatpush1.msra.mxu0 %v1676
        %v1678 = vand.u32 %v637, 4294901760
        %v1679 = vsub.f32 %v637, %v1678
        %v1680 = vand.u32 %v1679, 4294901760
        %1681 = vmatprep.subr.mxu0 %v1680
        %v1682 = vand.u32 %v636, 4294901760
        %v1683 = vsub.f32 %v636, %v1682
        %v1684 = vand.u32 %v1683, 4294901760
        %1685 = vmatpush1.msra.mxu0 %v1684
        %v1686 = vand.u32 %v639, 4294901760
        %v1687 = vsub.f32 %v639, %v1686
        %v1688 = vand.u32 %v1687, 4294901760
        %1689 = vmatprep.subr.mxu0 %v1688
        %v1690 = vand.u32 %v638, 4294901760
        %v1691 = vsub.f32 %v638, %v1690
        %v1692 = vand.u32 %v1691, 4294901760
        %1693 = vmatpush1.msra.mxu0 %v1692
        %v1694 = vand.u32 %v641, 4294901760
        %v1695 = vsub.f32 %v641, %v1694
        %v1696 = vand.u32 %v1695, 4294901760
        %1697 = vmatprep.subr.mxu0 %v1696
        %v1698 = vand.u32 %v640, 4294901760
        %v1699 = vsub.f32 %v640, %v1698
        %v1700 = vand.u32 %v1699, 4294901760
        %1701 = vmatpush1.msra.mxu0 %v1700
        %v1702 = vand.u32 %v643, 4294901760
        %v1703 = vsub.f32 %v643, %v1702
        %v1704 = vand.u32 %v1703, 4294901760
        %1705 = vmatprep.subr.mxu0 %v1704
        %v1706 = vand.u32 %v642, 4294901760
        %v1707 = vsub.f32 %v642, %v1706
        %v1708 = vand.u32 %v1707, 4294901760
        %1709 = vmatpush1.msra.mxu0 %v1708
        %v1710 = vand.u32 %v645, 4294901760
        %v1711 = vsub.f32 %v645, %v1710
        %v1712 = vand.u32 %v1711, 4294901760
        %1713 = vmatprep.subr.mxu0 %v1712
        %v1714 = vand.u32 %v644, 4294901760
        %v1715 = vsub.f32 %v644, %v1714
        %v1716 = vand.u32 %v1715, 4294901760
        %1717 = vmatpush1.msra.mxu0 %v1716
        %v1718 = vand.u32 %v647, 4294901760
        %v1719 = vsub.f32 %v647, %v1718
        %v1720 = vand.u32 %v1719, 4294901760
        %1721 = vmatprep.subr.mxu0 %v1720
        %v1722 = vand.u32 %v646, 4294901760
        %v1723 = vsub.f32 %v646, %v1722
        %v1724 = vand.u32 %v1723, 4294901760
        %1725 = vmatpush1.msra.mxu0 %v1724
        %v1726 = vand.u32 %v649, 4294901760
        %v1727 = vsub.f32 %v649, %v1726
        %v1728 = vand.u32 %v1727, 4294901760
        %1729 = vmatprep.subr.mxu0 %v1728
        %v1730 = vand.u32 %v648, 4294901760
        %v1731 = vsub.f32 %v648, %v1730
        %v1732 = vand.u32 %v1731, 4294901760
        %1733 = vmatpush1.msra.mxu0 %v1732
        %v1734 = vand.u32 %v651, 4294901760
        %v1735 = vsub.f32 %v651, %v1734
        %v1736 = vand.u32 %v1735, 4294901760
        %1737 = vmatprep.subr.mxu0 %v1736
        %v1738 = vand.u32 %v650, 4294901760
        %v1739 = vsub.f32 %v650, %v1738
        %v1740 = vand.u32 %v1739, 4294901760
        %1741 = vmatpush1.msra.mxu0 %v1740
        %v1742 = vand.u32 %v653, 4294901760
        %v1743 = vsub.f32 %v653, %v1742
        %v1744 = vand.u32 %v1743, 4294901760
        %1745 = vmatprep.subr.mxu0 %v1744
        %v1746 = vand.u32 %v652, 4294901760
        %v1747 = vsub.f32 %v652, %v1746
        %v1748 = vand.u32 %v1747, 4294901760
        %1749 = vmatpush1.msra.mxu0 %v1748
        %v1750 = vand.u32 %v655, 4294901760
        %v1751 = vsub.f32 %v655, %v1750
        %v1752 = vand.u32 %v1751, 4294901760
        %1753 = vmatprep.subr.mxu0 %v1752
        %v1754 = vand.u32 %v654, 4294901760
        %v1755 = vsub.f32 %v654, %v1754
        %v1756 = vand.u32 %v1755, 4294901760
        %1757 = vmatpush1.msra.mxu0 %v1756
        %v1758 = vand.u32 %v657, 4294901760
        %v1759 = vsub.f32 %v657, %v1758
        %v1760 = vand.u32 %v1759, 4294901760
        %1761 = vmatprep.subr.mxu0 %v1760
        %v1762 = vand.u32 %v656, 4294901760
        %v1763 = vsub.f32 %v656, %v1762
        %v1764 = vand.u32 %v1763, 4294901760
        %1765 = vmatpush1.msra.mxu0 %v1764
        %v1766 = vand.u32 %v659, 4294901760
        %v1767 = vsub.f32 %v659, %v1766
        %v1768 = vand.u32 %v1767, 4294901760
        %1769 = vmatprep.subr.mxu0 %v1768
        %v1770 = vand.u32 %v658, 4294901760
        %v1771 = vsub.f32 %v658, %v1770
        %v1772 = vand.u32 %v1771, 4294901760
        %1773 = vmatpush1.msra.mxu0 %v1772
        %v1774 = vand.u32 %v661, 4294901760
        %v1775 = vsub.f32 %v661, %v1774
        %v1776 = vand.u32 %v1775, 4294901760
        %1777 = vmatprep.subr.mxu0 %v1776
        %v1778 = vand.u32 %v660, 4294901760
        %v1779 = vsub.f32 %v660, %v1778
        %v1780 = vand.u32 %v1779, 4294901760
        %1781 = vmatpush1.msra.mxu0 %v1780
        %v1782 = vand.u32 %v663, 4294901760
        %v1783 = vsub.f32 %v663, %v1782
        %v1784 = vand.u32 %v1783, 4294901760
        %1785 = vmatprep.subr.mxu0 %v1784
        %v1786 = vand.u32 %v662, 4294901760
        %v1787 = vsub.f32 %v662, %v1786
        %v1788 = vand.u32 %v1787, 4294901760
        %1789 = vmatpush1.msra.mxu0 %v1788
        %v1790 = vand.u32 %v665, 4294901760
        %v1791 = vsub.f32 %v665, %v1790
        %v1792 = vand.u32 %v1791, 4294901760
        %1793 = vmatprep.subr.mxu0 %v1792
        %v1794 = vand.u32 %v664, 4294901760
        %v1795 = vsub.f32 %v664, %v1794
        %v1796 = vand.u32 %v1795, 4294901760
        %1797 = vmatpush1.msra.mxu0 %v1796
        %v1798 = vand.u32 %v667, 4294901760
        %v1799 = vsub.f32 %v667, %v1798
        %v1800 = vand.u32 %v1799, 4294901760
        %1801 = vmatprep.subr.mxu0 %v1800
        %v1802 = vand.u32 %v666, 4294901760
        %v1803 = vsub.f32 %v666, %v1802
        %v1804 = vand.u32 %v1803, 4294901760
        %1805 = vmatpush1.msra.mxu0 %v1804
        %v1806 = vand.u32 %v538, 4294901760
        %1807 = vmatprep.mubr.f32.mxu0 %v1806
        %v1808 = vand.u32 %v531, 4294901760
        %1809 = vmatmul.mubr.f32.gmra.mrb[0].mxu0 %v1808
        %v1810 = vpop.f32.mrb[0].mxu0
        %v1811 = vadd.f32 %v1546, %v1810
        %v1812 = vpop.f32.mrb[0].mxu0
        %v1813 = vadd.f32 %v1548, %v1812
        %1814 = vdwg.mxu0
        %v1815 = vand.u32 %v605, 4294901760
        %1816 = vmatprep.subr.mxu0 %v1815
        %v1817 = vand.u32 %v604, 4294901760
        %1818 = vmatpush1.msra.mxu0 %v1817
        %v1819 = vand.u32 %v607, 4294901760
        %1820 = vmatprep.subr.mxu0 %v1819
        %v1821 = vand.u32 %v606, 4294901760
        %1822 = vmatpush1.msra.mxu0 %v1821
        %v1823 = vand.u32 %v609, 4294901760
        %1824 = vmatprep.subr.mxu0 %v1823
        %v1825 = vand.u32 %v608, 4294901760
        %1826 = vmatpush1.msra.mxu0 %v1825
        %v1827 = vand.u32 %v611, 4294901760
        %1828 = vmatprep.subr.mxu0 %v1827
        %v1829 = vand.u32 %v610, 4294901760
        %1830 = vmatpush1.msra.mxu0 %v1829
        %v1831 = vand.u32 %v613, 4294901760
        %1832 = vmatprep.subr.mxu0 %v1831
        %v1833 = vand.u32 %v612, 4294901760
        %1834 = vmatpush1.msra.mxu0 %v1833
        %v1835 = vand.u32 %v615, 4294901760
        %1836 = vmatprep.subr.mxu0 %v1835
        %v1837 = vand.u32 %v614, 4294901760
        %1838 = vmatpush1.msra.mxu0 %v1837
        %v1839 = vand.u32 %v617, 4294901760
        %1840 = vmatprep.subr.mxu0 %v1839
        %v1841 = vand.u32 %v616, 4294901760
        %1842 = vmatpush1.msra.mxu0 %v1841
        %v1843 = vand.u32 %v619, 4294901760
        %1844 = vmatprep.subr.mxu0 %v1843
        %v1845 = vand.u32 %v618, 4294901760
        %1846 = vmatpush1.msra.mxu0 %v1845
        %v1847 = vand.u32 %v621, 4294901760
        %1848 = vmatprep.subr.mxu0 %v1847
        %v1849 = vand.u32 %v620, 4294901760
        %1850 = vmatpush1.msra.mxu0 %v1849
        %v1851 = vand.u32 %v623, 4294901760
        %1852 = vmatprep.subr.mxu0 %v1851
        %v1853 = vand.u32 %v622, 4294901760
        %1854 = vmatpush1.msra.mxu0 %v1853
        %v1855 = vand.u32 %v625, 4294901760
        %1856 = vmatprep.subr.mxu0 %v1855
        %v1857 = vand.u32 %v624, 4294901760
        %1858 = vmatpush1.msra.mxu0 %v1857
        %v1859 = vand.u32 %v627, 4294901760
        %1860 = vmatprep.subr.mxu0 %v1859
        %v1861 = vand.u32 %v626, 4294901760
        %1862 = vmatpush1.msra.mxu0 %v1861
        %v1863 = vand.u32 %v629, 4294901760
        %1864 = vmatprep.subr.mxu0 %v1863
        %v1865 = vand.u32 %v628, 4294901760
        %1866 = vmatpush1.msra.mxu0 %v1865
        %v1867 = vand.u32 %v631, 4294901760
        %1868 = vmatprep.subr.mxu0 %v1867
        %v1869 = vand.u32 %v630, 4294901760
        %1870 = vmatpush1.msra.mxu0 %v1869
        %v1871 = vand.u32 %v633, 4294901760
        %1872 = vmatprep.subr.mxu0 %v1871
        %v1873 = vand.u32 %v632, 4294901760
        %1874 = vmatpush1.msra.mxu0 %v1873
        %v1875 = vand.u32 %v635, 4294901760
        %1876 = vmatprep.subr.mxu0 %v1875
        %v1877 = vand.u32 %v634, 4294901760
        %1878 = vmatpush1.msra.mxu0 %v1877
        %v1879 = vand.u32 %v637, 4294901760
        %1880 = vmatprep.subr.mxu0 %v1879
        %v1881 = vand.u32 %v636, 4294901760
        %1882 = vmatpush1.msra.mxu0 %v1881
        %v1883 = vand.u32 %v639, 4294901760
        %1884 = vmatprep.subr.mxu0 %v1883
        %v1885 = vand.u32 %v638, 4294901760
        %1886 = vmatpush1.msra.mxu0 %v1885
        %v1887 = vand.u32 %v641, 4294901760
        %1888 = vmatprep.subr.mxu0 %v1887
        %v1889 = vand.u32 %v640, 4294901760
        %1890 = vmatpush1.msra.mxu0 %v1889
        %v1891 = vand.u32 %v643, 4294901760
        %1892 = vmatprep.subr.mxu0 %v1891
        %v1893 = vand.u32 %v642, 4294901760
        %1894 = vmatpush1.msra.mxu0 %v1893
        %v1895 = vand.u32 %v645, 4294901760
        %1896 = vmatprep.subr.mxu0 %v1895
        %v1897 = vand.u32 %v644, 4294901760
        %1898 = vmatpush1.msra.mxu0 %v1897
        %v1899 = vand.u32 %v647, 4294901760
        %1900 = vmatprep.subr.mxu0 %v1899
        %v1901 = vand.u32 %v646, 4294901760
        %1902 = vmatpush1.msra.mxu0 %v1901
        %v1903 = vand.u32 %v649, 4294901760
        %1904 = vmatprep.subr.mxu0 %v1903
        %v1905 = vand.u32 %v648, 4294901760
        %1906 = vmatpush1.msra.mxu0 %v1905
        %v1907 = vand.u32 %v651, 4294901760
        %1908 = vmatprep.subr.mxu0 %v1907
        %v1909 = vand.u32 %v650, 4294901760
        %1910 = vmatpush1.msra.mxu0 %v1909
        %v1911 = vand.u32 %v653, 4294901760
        %1912 = vmatprep.subr.mxu0 %v1911
        %v1913 = vand.u32 %v652, 4294901760
        %1914 = vmatpush1.msra.mxu0 %v1913
        %v1915 = vand.u32 %v655, 4294901760
        %1916 = vmatprep.subr.mxu0 %v1915
        %v1917 = vand.u32 %v654, 4294901760
        %1918 = vmatpush1.msra.mxu0 %v1917
        %v1919 = vand.u32 %v657, 4294901760
        %1920 = vmatprep.subr.mxu0 %v1919
        %v1921 = vand.u32 %v656, 4294901760
        %1922 = vmatpush1.msra.mxu0 %v1921
        %v1923 = vand.u32 %v659, 4294901760
        %1924 = vmatprep.subr.mxu0 %v1923
        %v1925 = vand.u32 %v658, 4294901760
        %1926 = vmatpush1.msra.mxu0 %v1925
        %v1927 = vand.u32 %v661, 4294901760
        %1928 = vmatprep.subr.mxu0 %v1927
        %v1929 = vand.u32 %v660, 4294901760
        %1930 = vmatpush1.msra.mxu0 %v1929
        %v1931 = vand.u32 %v663, 4294901760
        %1932 = vmatprep.subr.mxu0 %v1931
        %v1933 = vand.u32 %v662, 4294901760
        %1934 = vmatpush1.msra.mxu0 %v1933
        %v1935 = vand.u32 %v665, 4294901760
        %1936 = vmatprep.subr.mxu0 %v1935
        %v1937 = vand.u32 %v664, 4294901760
        %1938 = vmatpush1.msra.mxu0 %v1937
        %v1939 = vand.u32 %v667, 4294901760
        %1940 = vmatprep.subr.mxu0 %v1939
        %v1941 = vand.u32 %v666, 4294901760
        %1942 = vmatpush1.msra.mxu0 %v1941
        %v1943 = vand.u32 %v538, 4294901760
        %1944 = vmatprep.mubr.f32.mxu0 %v1943
        %v1945 = vand.u32 %v531, 4294901760
        %1946 = vmatmul.mubr.f32.gmra.mrb[0].mxu0 %v1945
        %v1947 = vpop.f32.mrb[0].mxu0
        %v1948 = vadd.f32 %v1811, %v1947
        %v1949 = vpop.f32.mrb[0].mxu0
        %v1950 = vadd.f32 %v1813, %v1949
        %1951 = vdwg.mxu0
        %v1952 = vand.u32 %v540, 4294901760
        %1953 = vmatprep.subr.mxu0 %v1952
        %v1954 = vand.u32 %v539, 4294901760
        %1955 = vmatpush1.msra.mxu0 %v1954
        %v1956 = vand.u32 %v542, 4294901760
        %1957 = vmatprep.subr.mxu0 %v1956
        %v1958 = vand.u32 %v541, 4294901760
        %1959 = vmatpush1.msra.mxu0 %v1958
        %v1960 = vand.u32 %v544, 4294901760
        %1961 = vmatprep.subr.mxu0 %v1960
        %v1962 = vand.u32 %v543, 4294901760
        %1963 = vmatpush1.msra.mxu0 %v1962
        %v1964 = vand.u32 %v546, 4294901760
        %1965 = vmatprep.subr.mxu0 %v1964
        %v1966 = vand.u32 %v545, 4294901760
        %1967 = vmatpush1.msra.mxu0 %v1966
        %v1968 = vand.u32 %v548, 4294901760
        %1969 = vmatprep.subr.mxu0 %v1968
        %v1970 = vand.u32 %v547, 4294901760
        %1971 = vmatpush1.msra.mxu0 %v1970
        %v1972 = vand.u32 %v550, 4294901760
        %1973 = vmatprep.subr.mxu0 %v1972
        %v1974 = vand.u32 %v549, 4294901760
        %1975 = vmatpush1.msra.mxu0 %v1974
        %v1976 = vand.u32 %v552, 4294901760
        %1977 = vmatprep.subr.mxu0 %v1976
        %v1978 = vand.u32 %v551, 4294901760
        %1979 = vmatpush1.msra.mxu0 %v1978
        %v1980 = vand.u32 %v554, 4294901760
        %1981 = vmatprep.subr.mxu0 %v1980
        %v1982 = vand.u32 %v553, 4294901760
        %1983 = vmatpush1.msra.mxu0 %v1982
        %v1984 = vand.u32 %v556, 4294901760
        %1985 = vmatprep.subr.mxu0 %v1984
        %v1986 = vand.u32 %v555, 4294901760
        %1987 = vmatpush1.msra.mxu0 %v1986
        %v1988 = vand.u32 %v558, 4294901760
        %1989 = vmatprep.subr.mxu0 %v1988
        %v1990 = vand.u32 %v557, 4294901760
        %1991 = vmatpush1.msra.mxu0 %v1990
        %v1992 = vand.u32 %v560, 4294901760
        %1993 = vmatprep.subr.mxu0 %v1992
        %v1994 = vand.u32 %v559, 4294901760
        %1995 = vmatpush1.msra.mxu0 %v1994
        %v1996 = vand.u32 %v562, 4294901760
        %1997 = vmatprep.subr.mxu0 %v1996
        %v1998 = vand.u32 %v561, 4294901760
        %1999 = vmatpush1.msra.mxu0 %v1998
        %v2000 = vand.u32 %v564, 4294901760
        %2001 = vmatprep.subr.mxu0 %v2000
        %v2002 = vand.u32 %v563, 4294901760
        %2003 = vmatpush1.msra.mxu0 %v2002
        %v2004 = vand.u32 %v566, 4294901760
        %2005 = vmatprep.subr.mxu0 %v2004
        %v2006 = vand.u32 %v565, 4294901760
        %2007 = vmatpush1.msra.mxu0 %v2006
        %v2008 = vand.u32 %v568, 4294901760
        %2009 = vmatprep.subr.mxu0 %v2008
        %v2010 = vand.u32 %v567, 4294901760
        %2011 = vmatpush1.msra.mxu0 %v2010
        %v2012 = vand.u32 %v570, 4294901760
        %2013 = vmatprep.subr.mxu0 %v2012
        %v2014 = vand.u32 %v569, 4294901760
        %2015 = vmatpush1.msra.mxu0 %v2014
        %v2016 = vand.u32 %v572, 4294901760
        %2017 = vmatprep.subr.mxu0 %v2016
        %v2018 = vand.u32 %v571, 4294901760
        %2019 = vmatpush1.msra.mxu0 %v2018
        %v2020 = vand.u32 %v574, 4294901760
        %2021 = vmatprep.subr.mxu0 %v2020
        %v2022 = vand.u32 %v573, 4294901760
        %2023 = vmatpush1.msra.mxu0 %v2022
        %v2024 = vand.u32 %v576, 4294901760
        %2025 = vmatprep.subr.mxu0 %v2024
        %v2026 = vand.u32 %v575, 4294901760
        %2027 = vmatpush1.msra.mxu0 %v2026
        %v2028 = vand.u32 %v578, 4294901760
        %2029 = vmatprep.subr.mxu0 %v2028
        %v2030 = vand.u32 %v577, 4294901760
        %2031 = vmatpush1.msra.mxu0 %v2030
        %v2032 = vand.u32 %v580, 4294901760
        %2033 = vmatprep.subr.mxu0 %v2032
        %v2034 = vand.u32 %v579, 4294901760
        %2035 = vmatpush1.msra.mxu0 %v2034
        %v2036 = vand.u32 %v582, 4294901760
        %2037 = vmatprep.subr.mxu0 %v2036
        %v2038 = vand.u32 %v581, 4294901760
        %2039 = vmatpush1.msra.mxu0 %v2038
        %v2040 = vand.u32 %v584, 4294901760
        %2041 = vmatprep.subr.mxu0 %v2040
        %v2042 = vand.u32 %v583, 4294901760
        %2043 = vmatpush1.msra.mxu0 %v2042
        %v2044 = vand.u32 %v586, 4294901760
        %2045 = vmatprep.subr.mxu0 %v2044
        %v2046 = vand.u32 %v585, 4294901760
        %2047 = vmatpush1.msra.mxu0 %v2046
        %v2048 = vand.u32 %v588, 4294901760
        %2049 = vmatprep.subr.mxu0 %v2048
        %v2050 = vand.u32 %v587, 4294901760
        %2051 = vmatpush1.msra.mxu0 %v2050
        %v2052 = vand.u32 %v590, 4294901760
        %2053 = vmatprep.subr.mxu0 %v2052
        %v2054 = vand.u32 %v589, 4294901760
        %2055 = vmatpush1.msra.mxu0 %v2054
        %v2056 = vand.u32 %v592, 4294901760
        %2057 = vmatprep.subr.mxu0 %v2056
        %v2058 = vand.u32 %v591, 4294901760
        %2059 = vmatpush1.msra.mxu0 %v2058
        %v2060 = vand.u32 %v594, 4294901760
        %2061 = vmatprep.subr.mxu0 %v2060
        %v2062 = vand.u32 %v593, 4294901760
        %2063 = vmatpush1.msra.mxu0 %v2062
        %v2064 = vand.u32 %v596, 4294901760
        %2065 = vmatprep.subr.mxu0 %v2064
        %v2066 = vand.u32 %v595, 4294901760
        %2067 = vmatpush1.msra.mxu0 %v2066
        %v2068 = vand.u32 %v598, 4294901760
        %2069 = vmatprep.subr.mxu0 %v2068
        %v2070 = vand.u32 %v597, 4294901760
        %2071 = vmatpush1.msra.mxu0 %v2070
        %v2072 = vand.u32 %v600, 4294901760
        %2073 = vmatprep.subr.mxu0 %v2072
        %v2074 = vand.u32 %v599, 4294901760
        %2075 = vmatpush1.msra.mxu0 %v2074
        %v2076 = vand.u32 %v602, 4294901760
        %2077 = vmatprep.subr.mxu0 %v2076
        %v2078 = vand.u32 %v601, 4294901760
        %2079 = vmatpush1.msra.mxu0 %v2078
        %v2080 = vand.u32 %v524, 4294901760
        %v2081 = vsub.f32 %v524, %v2080
        %v2082 = vand.u32 %v2081, 4294901760
        %v2083 = vsub.f32 %v2081, %v2082
        %v2084 = vand.u32 %v2083, 4294901760
        %2085 = vmatprep.mubr.f32.mxu0 %v2084
        %v2086 = vand.u32 %v523, 4294901760
        %v2087 = vsub.f32 %v523, %v2086
        %v2088 = vand.u32 %v2087, 4294901760
        %v2089 = vsub.f32 %v2087, %v2088
        %v2090 = vand.u32 %v2089, 4294901760
        %2091 = vmatmul.mubr.f32.gmra.mrb[0].mxu0 %v2090
        %v2092 = vpop.f32.mrb[0].mxu0
        %v2093 = vadd.f32 %v1948, %v2092
        %v2094 = vpop.f32.mrb[0].mxu0
        %v2095 = vadd.f32 %v1950, %v2094
        %2096 = vdwg.mxu0
        %v2097 = vand.u32 %v540, 4294901760
        %v2098 = vsub.f32 %v540, %v2097
        %v2099 = vand.u32 %v2098, 4294901760
        %v2100 = vsub.f32 %v2098, %v2099
        %v2101 = vand.u32 %v2100, 4294901760
        %2102 = vmatprep.subr.mxu0 %v2101
        %v2103 = vand.u32 %v539, 4294901760
        %v2104 = vsub.f32 %v539, %v2103
        %v2105 = vand.u32 %v2104, 4294901760
        %v2106 = vsub.f32 %v2104, %v2105
        %v2107 = vand.u32 %v2106, 4294901760
        %2108 = vmatpush1.msra.mxu0 %v2107
        %v2109 = vand.u32 %v542, 4294901760
        %v2110 = vsub.f32 %v542, %v2109
        %v2111 = vand.u32 %v2110, 4294901760
        %v2112 = vsub.f32 %v2110, %v2111
        %v2113 = vand.u32 %v2112, 4294901760
        %2114 = vmatprep.subr.mxu0 %v2113
        %v2115 = vand.u32 %v541, 4294901760
        %v2116 = vsub.f32 %v541, %v2115
        %v2117 = vand.u32 %v2116, 4294901760
        %v2118 = vsub.f32 %v2116, %v2117
        %v2119 = vand.u32 %v2118, 4294901760
        %2120 = vmatpush1.msra.mxu0 %v2119
        %v2121 = vand.u32 %v544, 4294901760
        %v2122 = vsub.f32 %v544, %v2121
        %v2123 = vand.u32 %v2122, 4294901760
        %v2124 = vsub.f32 %v2122, %v2123
        %v2125 = vand.u32 %v2124, 4294901760
        %2126 = vmatprep.subr.mxu0 %v2125
        %v2127 = vand.u32 %v543, 4294901760
        %v2128 = vsub.f32 %v543, %v2127
        %v2129 = vand.u32 %v2128, 4294901760
        %v2130 = vsub.f32 %v2128, %v2129
        %v2131 = vand.u32 %v2130, 4294901760
        %2132 = vmatpush1.msra.mxu0 %v2131
        %v2133 = vand.u32 %v546, 4294901760
        %v2134 = vsub.f32 %v546, %v2133
        %v2135 = vand.u32 %v2134, 4294901760
        %v2136 = vsub.f32 %v2134, %v2135
        %v2137 = vand.u32 %v2136, 4294901760
        %2138 = vmatprep.subr.mxu0 %v2137
        %v2139 = vand.u32 %v545, 4294901760
        %v2140 = vsub.f32 %v545, %v2139
        %v2141 = vand.u32 %v2140, 4294901760
        %v2142 = vsub.f32 %v2140, %v2141
        %v2143 = vand.u32 %v2142, 4294901760
        %2144 = vmatpush1.msra.mxu0 %v2143
        %v2145 = vand.u32 %v548, 4294901760
        %v2146 = vsub.f32 %v548, %v2145
        %v2147 = vand.u32 %v2146, 4294901760
        %v2148 = vsub.f32 %v2146, %v2147
        %v2149 = vand.u32 %v2148, 4294901760
        %2150 = vmatprep.subr.mxu0 %v2149
        %v2151 = vand.u32 %v547, 4294901760
        %v2152 = vsub.f32 %v547, %v2151
        %v2153 = vand.u32 %v2152, 4294901760
        %v2154 = vsub.f32 %v2152, %v2153
        %v2155 = vand.u32 %v2154, 4294901760
        %2156 = vmatpush1.msra.mxu0 %v2155
        %v2157 = vand.u32 %v550, 4294901760
        %v2158 = vsub.f32 %v550, %v2157
        %v2159 = vand.u32 %v2158, 4294901760
        %v2160 = vsub.f32 %v2158, %v2159
        %v2161 = vand.u32 %v2160, 4294901760
        %2162 = vmatprep.subr.mxu0 %v2161
        %v2163 = vand.u32 %v549, 4294901760
        %v2164 = vsub.f32 %v549, %v2163
        %v2165 = vand.u32 %v2164, 4294901760
        %v2166 = vsub.f32 %v2164, %v2165
        %v2167 = vand.u32 %v2166, 4294901760
        %2168 = vmatpush1.msra.mxu0 %v2167
        %v2169 = vand.u32 %v552, 4294901760
        %v2170 = vsub.f32 %v552, %v2169
        %v2171 = vand.u32 %v2170, 4294901760
        %v2172 = vsub.f32 %v2170, %v2171
        %v2173 = vand.u32 %v2172, 4294901760
        %2174 = vmatprep.subr.mxu0 %v2173
        %v2175 = vand.u32 %v551, 4294901760
        %v2176 = vsub.f32 %v551, %v2175
        %v2177 = vand.u32 %v2176, 4294901760
        %v2178 = vsub.f32 %v2176, %v2177
        %v2179 = vand.u32 %v2178, 4294901760
        %2180 = vmatpush1.msra.mxu0 %v2179
        %v2181 = vand.u32 %v554, 4294901760
        %v2182 = vsub.f32 %v554, %v2181
        %v2183 = vand.u32 %v2182, 4294901760
        %v2184 = vsub.f32 %v2182, %v2183
        %v2185 = vand.u32 %v2184, 4294901760
        %2186 = vmatprep.subr.mxu0 %v2185
        %v2187 = vand.u32 %v553, 4294901760
        %v2188 = vsub.f32 %v553, %v2187
        %v2189 = vand.u32 %v2188, 4294901760
        %v2190 = vsub.f32 %v2188, %v2189
        %v2191 = vand.u32 %v2190, 4294901760
        %2192 = vmatpush1.msra.mxu0 %v2191
        %v2193 = vand.u32 %v556, 4294901760
        %v2194 = vsub.f32 %v556, %v2193
        %v2195 = vand.u32 %v2194, 4294901760
        %v2196 = vsub.f32 %v2194, %v2195
        %v2197 = vand.u32 %v2196, 4294901760
        %2198 = vmatprep.subr.mxu0 %v2197
        %v2199 = vand.u32 %v555, 4294901760
        %v2200 = vsub.f32 %v555, %v2199
        %v2201 = vand.u32 %v2200, 4294901760
        %v2202 = vsub.f32 %v2200, %v2201
        %v2203 = vand.u32 %v2202, 4294901760
        %2204 = vmatpush1.msra.mxu0 %v2203
        %v2205 = vand.u32 %v558, 4294901760
        %v2206 = vsub.f32 %v558, %v2205
        %v2207 = vand.u32 %v2206, 4294901760
        %v2208 = vsub.f32 %v2206, %v2207
        %v2209 = vand.u32 %v2208, 4294901760
        %2210 = vmatprep.subr.mxu0 %v2209
        %v2211 = vand.u32 %v557, 4294901760
        %v2212 = vsub.f32 %v557, %v2211
        %v2213 = vand.u32 %v2212, 4294901760
        %v2214 = vsub.f32 %v2212, %v2213
        %v2215 = vand.u32 %v2214, 4294901760
        %2216 = vmatpush1.msra.mxu0 %v2215
        %v2217 = vand.u32 %v560, 4294901760
        %v2218 = vsub.f32 %v560, %v2217
        %v2219 = vand.u32 %v2218, 4294901760
        %v2220 = vsub.f32 %v2218, %v2219
        %v2221 = vand.u32 %v2220, 4294901760
        %2222 = vmatprep.subr.mxu0 %v2221
        %v2223 = vand.u32 %v559, 4294901760
        %v2224 = vsub.f32 %v559, %v2223
        %v2225 = vand.u32 %v2224, 4294901760
        %v2226 = vsub.f32 %v2224, %v2225
        %v2227 = vand.u32 %v2226, 4294901760
        %2228 = vmatpush1.msra.mxu0 %v2227
        %v2229 = vand.u32 %v562, 4294901760
        %v2230 = vsub.f32 %v562, %v2229
        %v2231 = vand.u32 %v2230, 4294901760
        %v2232 = vsub.f32 %v2230, %v2231
        %v2233 = vand.u32 %v2232, 4294901760
        %2234 = vmatprep.subr.mxu0 %v2233
        %v2235 = vand.u32 %v561, 4294901760
        %v2236 = vsub.f32 %v561, %v2235
        %v2237 = vand.u32 %v2236, 4294901760
        %v2238 = vsub.f32 %v2236, %v2237
        %v2239 = vand.u32 %v2238, 4294901760
        %2240 = vmatpush1.msra.mxu0 %v2239
        %v2241 = vand.u32 %v564, 4294901760
        %v2242 = vsub.f32 %v564, %v2241
        %v2243 = vand.u32 %v2242, 4294901760
        %v2244 = vsub.f32 %v2242, %v2243
        %v2245 = vand.u32 %v2244, 4294901760
        %2246 = vmatprep.subr.mxu0 %v2245
        %v2247 = vand.u32 %v563, 4294901760
        %v2248 = vsub.f32 %v563, %v2247
        %v2249 = vand.u32 %v2248, 4294901760
        %v2250 = vsub.f32 %v2248, %v2249
        %v2251 = vand.u32 %v2250, 4294901760
        %2252 = vmatpush1.msra.mxu0 %v2251
        %v2253 = vand.u32 %v566, 4294901760
        %v2254 = vsub.f32 %v566, %v2253
        %v2255 = vand.u32 %v2254, 4294901760
        %v2256 = vsub.f32 %v2254, %v2255
        %v2257 = vand.u32 %v2256, 4294901760
        %2258 = vmatprep.subr.mxu0 %v2257
        %v2259 = vand.u32 %v565, 4294901760
        %v2260 = vsub.f32 %v565, %v2259
        %v2261 = vand.u32 %v2260, 4294901760
        %v2262 = vsub.f32 %v2260, %v2261
        %v2263 = vand.u32 %v2262, 4294901760
        %2264 = vmatpush1.msra.mxu0 %v2263
        %v2265 = vand.u32 %v568, 4294901760
        %v2266 = vsub.f32 %v568, %v2265
        %v2267 = vand.u32 %v2266, 4294901760
        %v2268 = vsub.f32 %v2266, %v2267
        %v2269 = vand.u32 %v2268, 4294901760
        %2270 = vmatprep.subr.mxu0 %v2269
        %v2271 = vand.u32 %v567, 4294901760
        %v2272 = vsub.f32 %v567, %v2271
        %v2273 = vand.u32 %v2272, 4294901760
        %v2274 = vsub.f32 %v2272, %v2273
        %v2275 = vand.u32 %v2274, 4294901760
        %2276 = vmatpush1.msra.mxu0 %v2275
        %v2277 = vand.u32 %v570, 4294901760
        %v2278 = vsub.f32 %v570, %v2277
        %v2279 = vand.u32 %v2278, 4294901760
        %v2280 = vsub.f32 %v2278, %v2279
        %v2281 = vand.u32 %v2280, 4294901760
        %2282 = vmatprep.subr.mxu0 %v2281
        %v2283 = vand.u32 %v569, 4294901760
        %v2284 = vsub.f32 %v569, %v2283
        %v2285 = vand.u32 %v2284, 4294901760
        %v2286 = vsub.f32 %v2284, %v2285
        %v2287 = vand.u32 %v2286, 4294901760
        %2288 = vmatpush1.msra.mxu0 %v2287
        %v2289 = vand.u32 %v572, 4294901760
        %v2290 = vsub.f32 %v572, %v2289
        %v2291 = vand.u32 %v2290, 4294901760
        %v2292 = vsub.f32 %v2290, %v2291
        %v2293 = vand.u32 %v2292, 4294901760
        %2294 = vmatprep.subr.mxu0 %v2293
        %v2295 = vand.u32 %v571, 4294901760
        %v2296 = vsub.f32 %v571, %v2295
        %v2297 = vand.u32 %v2296, 4294901760
        %v2298 = vsub.f32 %v2296, %v2297
        %v2299 = vand.u32 %v2298, 4294901760
        %2300 = vmatpush1.msra.mxu0 %v2299
        %v2301 = vand.u32 %v574, 4294901760
        %v2302 = vsub.f32 %v574, %v2301
        %v2303 = vand.u32 %v2302, 4294901760
        %v2304 = vsub.f32 %v2302, %v2303
        %v2305 = vand.u32 %v2304, 4294901760
        %2306 = vmatprep.subr.mxu0 %v2305
        %v2307 = vand.u32 %v573, 4294901760
        %v2308 = vsub.f32 %v573, %v2307
        %v2309 = vand.u32 %v2308, 4294901760
        %v2310 = vsub.f32 %v2308, %v2309
        %v2311 = vand.u32 %v2310, 4294901760
        %2312 = vmatpush1.msra.mxu0 %v2311
        %v2313 = vand.u32 %v576, 4294901760
        %v2314 = vsub.f32 %v576, %v2313
        %v2315 = vand.u32 %v2314, 4294901760
        %v2316 = vsub.f32 %v2314, %v2315
        %v2317 = vand.u32 %v2316, 4294901760
        %2318 = vmatprep.subr.mxu0 %v2317
        %v2319 = vand.u32 %v575, 4294901760
        %v2320 = vsub.f32 %v575, %v2319
        %v2321 = vand.u32 %v2320, 4294901760
        %v2322 = vsub.f32 %v2320, %v2321
        %v2323 = vand.u32 %v2322, 4294901760
        %2324 = vmatpush1.msra.mxu0 %v2323
        %v2325 = vand.u32 %v578, 4294901760
        %v2326 = vsub.f32 %v578, %v2325
        %v2327 = vand.u32 %v2326, 4294901760
        %v2328 = vsub.f32 %v2326, %v2327
        %v2329 = vand.u32 %v2328, 4294901760
        %2330 = vmatprep.subr.mxu0 %v2329
        %v2331 = vand.u32 %v577, 4294901760
        %v2332 = vsub.f32 %v577, %v2331
        %v2333 = vand.u32 %v2332, 4294901760
        %v2334 = vsub.f32 %v2332, %v2333
        %v2335 = vand.u32 %v2334, 4294901760
        %2336 = vmatpush1.msra.mxu0 %v2335
        %v2337 = vand.u32 %v580, 4294901760
        %v2338 = vsub.f32 %v580, %v2337
        %v2339 = vand.u32 %v2338, 4294901760
        %v2340 = vsub.f32 %v2338, %v2339
        %v2341 = vand.u32 %v2340, 4294901760
        %2342 = vmatprep.subr.mxu0 %v2341
        %v2343 = vand.u32 %v579, 4294901760
        %v2344 = vsub.f32 %v579, %v2343
        %v2345 = vand.u32 %v2344, 4294901760
        %v2346 = vsub.f32 %v2344, %v2345
        %v2347 = vand.u32 %v2346, 4294901760
        %2348 = vmatpush1.msra.mxu0 %v2347
        %v2349 = vand.u32 %v582, 4294901760
        %v2350 = vsub.f32 %v582, %v2349
        %v2351 = vand.u32 %v2350, 4294901760
        %v2352 = vsub.f32 %v2350, %v2351
        %v2353 = vand.u32 %v2352, 4294901760
        %2354 = vmatprep.subr.mxu0 %v2353
        %v2355 = vand.u32 %v581, 4294901760
        %v2356 = vsub.f32 %v581, %v2355
        %v2357 = vand.u32 %v2356, 4294901760
        %v2358 = vsub.f32 %v2356, %v2357
        %v2359 = vand.u32 %v2358, 4294901760
        %2360 = vmatpush1.msra.mxu0 %v2359
        %v2361 = vand.u32 %v584, 4294901760
        %v2362 = vsub.f32 %v584, %v2361
        %v2363 = vand.u32 %v2362, 4294901760
        %v2364 = vsub.f32 %v2362, %v2363
        %v2365 = vand.u32 %v2364, 4294901760
        %2366 = vmatprep.subr.mxu0 %v2365
        %v2367 = vand.u32 %v583, 4294901760
        %v2368 = vsub.f32 %v583, %v2367
        %v2369 = vand.u32 %v2368, 4294901760
        %v2370 = vsub.f32 %v2368, %v2369
        %v2371 = vand.u32 %v2370, 4294901760
        %2372 = vmatpush1.msra.mxu0 %v2371
        %v2373 = vand.u32 %v586, 4294901760
        %v2374 = vsub.f32 %v586, %v2373
        %v2375 = vand.u32 %v2374, 4294901760
        %v2376 = vsub.f32 %v2374, %v2375
        %v2377 = vand.u32 %v2376, 4294901760
        %2378 = vmatprep.subr.mxu0 %v2377
        %v2379 = vand.u32 %v585, 4294901760
        %v2380 = vsub.f32 %v585, %v2379
        %v2381 = vand.u32 %v2380, 4294901760
        %v2382 = vsub.f32 %v2380, %v2381
        %v2383 = vand.u32 %v2382, 4294901760
        %2384 = vmatpush1.msra.mxu0 %v2383
        %v2385 = vand.u32 %v588, 4294901760
        %v2386 = vsub.f32 %v588, %v2385
        %v2387 = vand.u32 %v2386, 4294901760
        %v2388 = vsub.f32 %v2386, %v2387
        %v2389 = vand.u32 %v2388, 4294901760
        %2390 = vmatprep.subr.mxu0 %v2389
        %v2391 = vand.u32 %v587, 4294901760
        %v2392 = vsub.f32 %v587, %v2391
        %v2393 = vand.u32 %v2392, 4294901760
        %v2394 = vsub.f32 %v2392, %v2393
        %v2395 = vand.u32 %v2394, 4294901760
        %2396 = vmatpush1.msra.mxu0 %v2395
        %v2397 = vand.u32 %v590, 4294901760
        %v2398 = vsub.f32 %v590, %v2397
        %v2399 = vand.u32 %v2398, 4294901760
        %v2400 = vsub.f32 %v2398, %v2399
        %v2401 = vand.u32 %v2400, 4294901760
        %2402 = vmatprep.subr.mxu0 %v2401
        %v2403 = vand.u32 %v589, 4294901760
        %v2404 = vsub.f32 %v589, %v2403
        %v2405 = vand.u32 %v2404, 4294901760
        %v2406 = vsub.f32 %v2404, %v2405
        %v2407 = vand.u32 %v2406, 4294901760
        %2408 = vmatpush1.msra.mxu0 %v2407
        %v2409 = vand.u32 %v592, 4294901760
        %v2410 = vsub.f32 %v592, %v2409
        %v2411 = vand.u32 %v2410, 4294901760
        %v2412 = vsub.f32 %v2410, %v2411
        %v2413 = vand.u32 %v2412, 4294901760
        %2414 = vmatprep.subr.mxu0 %v2413
        %v2415 = vand.u32 %v591, 4294901760
        %v2416 = vsub.f32 %v591, %v2415
        %v2417 = vand.u32 %v2416, 4294901760
        %v2418 = vsub.f32 %v2416, %v2417
        %v2419 = vand.u32 %v2418, 4294901760
        %2420 = vmatpush1.msra.mxu0 %v2419
        %v2421 = vand.u32 %v594, 4294901760
        %v2422 = vsub.f32 %v594, %v2421
        %v2423 = vand.u32 %v2422, 4294901760
        %v2424 = vsub.f32 %v2422, %v2423
        %v2425 = vand.u32 %v2424, 4294901760
        %2426 = vmatprep.subr.mxu0 %v2425
        %v2427 = vand.u32 %v593, 4294901760
        %v2428 = vsub.f32 %v593, %v2427
        %v2429 = vand.u32 %v2428, 4294901760
        %v2430 = vsub.f32 %v2428, %v2429
        %v2431 = vand.u32 %v2430, 4294901760
        %2432 = vmatpush1.msra.mxu0 %v2431
        %v2433 = vand.u32 %v596, 4294901760
        %v2434 = vsub.f32 %v596, %v2433
        %v2435 = vand.u32 %v2434, 4294901760
        %v2436 = vsub.f32 %v2434, %v2435
        %v2437 = vand.u32 %v2436, 4294901760
        %2438 = vmatprep.subr.mxu0 %v2437
        %v2439 = vand.u32 %v595, 4294901760
        %v2440 = vsub.f32 %v595, %v2439
        %v2441 = vand.u32 %v2440, 4294901760
        %v2442 = vsub.f32 %v2440, %v2441
        %v2443 = vand.u32 %v2442, 4294901760
        %2444 = vmatpush1.msra.mxu0 %v2443
        %v2445 = vand.u32 %v598, 4294901760
        %v2446 = vsub.f32 %v598, %v2445
        %v2447 = vand.u32 %v2446, 4294901760
        %v2448 = vsub.f32 %v2446, %v2447
        %v2449 = vand.u32 %v2448, 4294901760
        %2450 = vmatprep.subr.mxu0 %v2449
        %v2451 = vand.u32 %v597, 4294901760
        %v2452 = vsub.f32 %v597, %v2451
        %v2453 = vand.u32 %v2452, 4294901760
        %v2454 = vsub.f32 %v2452, %v2453
        %v2455 = vand.u32 %v2454, 4294901760
        %2456 = vmatpush1.msra.mxu0 %v2455
        %v2457 = vand.u32 %v600, 4294901760
        %v2458 = vsub.f32 %v600, %v2457
        %v2459 = vand.u32 %v2458, 4294901760
        %v2460 = vsub.f32 %v2458, %v2459
        %v2461 = vand.u32 %v2460, 4294901760
        %2462 = vmatprep.subr.mxu0 %v2461
        %v2463 = vand.u32 %v599, 4294901760
        %v2464 = vsub.f32 %v599, %v2463
        %v2465 = vand.u32 %v2464, 4294901760
        %v2466 = vsub.f32 %v2464, %v2465
        %v2467 = vand.u32 %v2466, 4294901760
        %2468 = vmatpush1.msra.mxu0 %v2467
        %v2469 = vand.u32 %v602, 4294901760
        %v2470 = vsub.f32 %v602, %v2469
        %v2471 = vand.u32 %v2470, 4294901760
        %v2472 = vsub.f32 %v2470, %v2471
        %v2473 = vand.u32 %v2472, 4294901760
        %2474 = vmatprep.subr.mxu0 %v2473
        %v2475 = vand.u32 %v601, 4294901760
        %v2476 = vsub.f32 %v601, %v2475
        %v2477 = vand.u32 %v2476, 4294901760
        %v2478 = vsub.f32 %v2476, %v2477
        %v2479 = vand.u32 %v2478, 4294901760
        %2480 = vmatpush1.msra.mxu0 %v2479
        %v2481 = vand.u32 %v524, 4294901760
        %2482 = vmatprep.mubr.f32.mxu0 %v2481
        %v2483 = vand.u32 %v523, 4294901760
        %2484 = vmatmul.mubr.f32.gmra.mrb[0].mxu0 %v2483
        %v2485 = vpop.f32.mrb[0].mxu0
        %v2486 = vadd.f32 %v2093, %v2485
        %v2487 = vpop.f32.mrb[0].mxu0
        %v2488 = vadd.f32 %v2095, %v2487
        %2489 = vdwg.mxu0
        %v2490 = vand.u32 %v540, 4294901760
        %v2491 = vsub.f32 %v540, %v2490
        %2492 = vmatprep.subr.mxu0 %v2491
        %v2493 = vand.u32 %v539, 4294901760
        %v2494 = vsub.f32 %v539, %v2493
        %2495 = vmatpush1.msra.mxu0 %v2494
        %v2496 = vand.u32 %v542, 4294901760
        %v2497 = vsub.f32 %v542, %v2496
        %2498 = vmatprep.subr.mxu0 %v2497
        %v2499 = vand.u32 %v541, 4294901760
        %v2500 = vsub.f32 %v541, %v2499
        %2501 = vmatpush1.msra.mxu0 %v2500
        %v2502 = vand.u32 %v544, 4294901760
        %v2503 = vsub.f32 %v544, %v2502
        %2504 = vmatprep.subr.mxu0 %v2503
        %v2505 = vand.u32 %v543, 4294901760
        %v2506 = vsub.f32 %v543, %v2505
        %2507 = vmatpush1.msra.mxu0 %v2506
        %v2508 = vand.u32 %v546, 4294901760
        %v2509 = vsub.f32 %v546, %v2508
        %2510 = vmatprep.subr.mxu0 %v2509
        %v2511 = vand.u32 %v545, 4294901760
        %v2512 = vsub.f32 %v545, %v2511
        %2513 = vmatpush1.msra.mxu0 %v2512
        %v2514 = vand.u32 %v548, 4294901760
        %v2515 = vsub.f32 %v548, %v2514
        %2516 = vmatprep.subr.mxu0 %v2515
        %v2517 = vand.u32 %v547, 4294901760
        %v2518 = vsub.f32 %v547, %v2517
        %2519 = vmatpush1.msra.mxu0 %v2518
        %v2520 = vand.u32 %v550, 4294901760
        %v2521 = vsub.f32 %v550, %v2520
        %2522 = vmatprep.subr.mxu0 %v2521
        %v2523 = vand.u32 %v549, 4294901760
        %v2524 = vsub.f32 %v549, %v2523
        %2525 = vmatpush1.msra.mxu0 %v2524
        %v2526 = vand.u32 %v552, 4294901760
        %v2527 = vsub.f32 %v552, %v2526
        %2528 = vmatprep.subr.mxu0 %v2527
        %v2529 = vand.u32 %v551, 4294901760
        %v2530 = vsub.f32 %v551, %v2529
        %2531 = vmatpush1.msra.mxu0 %v2530
        %v2532 = vand.u32 %v554, 4294901760
        %v2533 = vsub.f32 %v554, %v2532
        %2534 = vmatprep.subr.mxu0 %v2533
        %v2535 = vand.u32 %v553, 4294901760
        %v2536 = vsub.f32 %v553, %v2535
        %2537 = vmatpush1.msra.mxu0 %v2536
        %v2538 = vand.u32 %v556, 4294901760
        %v2539 = vsub.f32 %v556, %v2538
        %2540 = vmatprep.subr.mxu0 %v2539
        %v2541 = vand.u32 %v555, 4294901760
        %v2542 = vsub.f32 %v555, %v2541
        %2543 = vmatpush1.msra.mxu0 %v2542
        %v2544 = vand.u32 %v558, 4294901760
        %v2545 = vsub.f32 %v558, %v2544
        %2546 = vmatprep.subr.mxu0 %v2545
        %v2547 = vand.u32 %v557, 4294901760
        %v2548 = vsub.f32 %v557, %v2547
        %2549 = vmatpush1.msra.mxu0 %v2548
        %v2550 = vand.u32 %v560, 4294901760
        %v2551 = vsub.f32 %v560, %v2550
        %2552 = vmatprep.subr.mxu0 %v2551
        %v2553 = vand.u32 %v559, 4294901760
        %v2554 = vsub.f32 %v559, %v2553
        %2555 = vmatpush1.msra.mxu0 %v2554
        %v2556 = vand.u32 %v562, 4294901760
        %v2557 = vsub.f32 %v562, %v2556
        %2558 = vmatprep.subr.mxu0 %v2557
        %v2559 = vand.u32 %v561, 4294901760
        %v2560 = vsub.f32 %v561, %v2559
        %2561 = vmatpush1.msra.mxu0 %v2560
        %v2562 = vand.u32 %v564, 4294901760
        %v2563 = vsub.f32 %v564, %v2562
        %2564 = vmatprep.subr.mxu0 %v2563
        %v2565 = vand.u32 %v563, 4294901760
        %v2566 = vsub.f32 %v563, %v2565
        %2567 = vmatpush1.msra.mxu0 %v2566
        %v2568 = vand.u32 %v566, 4294901760
        %v2569 = vsub.f32 %v566, %v2568
        %2570 = vmatprep.subr.mxu0 %v2569
        %v2571 = vand.u32 %v565, 4294901760
        %v2572 = vsub.f32 %v565, %v2571
        %2573 = vmatpush1.msra.mxu0 %v2572
        %v2574 = vand.u32 %v568, 4294901760
        %v2575 = vsub.f32 %v568, %v2574
        %2576 = vmatprep.subr.mxu0 %v2575
        %v2577 = vand.u32 %v567, 4294901760
        %v2578 = vsub.f32 %v567, %v2577
        %2579 = vmatpush1.msra.mxu0 %v2578
        %v2580 = vand.u32 %v570, 4294901760
        %v2581 = vsub.f32 %v570, %v2580
        %2582 = vmatprep.subr.mxu0 %v2581
        %v2583 = vand.u32 %v569, 4294901760
        %v2584 = vsub.f32 %v569, %v2583
        %2585 = vmatpush1.msra.mxu0 %v2584
        %v2586 = vand.u32 %v572, 4294901760
        %v2587 = vsub.f32 %v572, %v2586
        %2588 = vmatprep.subr.mxu0 %v2587
        %v2589 = vand.u32 %v571, 4294901760
        %v2590 = vsub.f32 %v571, %v2589
        %2591 = vmatpush1.msra.mxu0 %v2590
        %v2592 = vand.u32 %v574, 4294901760
        %v2593 = vsub.f32 %v574, %v2592
        %2594 = vmatprep.subr.mxu0 %v2593
        %v2595 = vand.u32 %v573, 4294901760
        %v2596 = vsub.f32 %v573, %v2595
        %2597 = vmatpush1.msra.mxu0 %v2596
        %v2598 = vand.u32 %v576, 4294901760
        %v2599 = vsub.f32 %v576, %v2598
        %2600 = vmatprep.subr.mxu0 %v2599
        %v2601 = vand.u32 %v575, 4294901760
        %v2602 = vsub.f32 %v575, %v2601
        %2603 = vmatpush1.msra.mxu0 %v2602
        %v2604 = vand.u32 %v578, 4294901760
        %v2605 = vsub.f32 %v578, %v2604
        %2606 = vmatprep.subr.mxu0 %v2605
        %v2607 = vand.u32 %v577, 4294901760
        %v2608 = vsub.f32 %v577, %v2607
        %2609 = vmatpush1.msra.mxu0 %v2608
        %v2610 = vand.u32 %v580, 4294901760
        %v2611 = vsub.f32 %v580, %v2610
        %2612 = vmatprep.subr.mxu0 %v2611
        %v2613 = vand.u32 %v579, 4294901760
        %v2614 = vsub.f32 %v579, %v2613
        %2615 = vmatpush1.msra.mxu0 %v2614
        %v2616 = vand.u32 %v582, 4294901760
        %v2617 = vsub.f32 %v582, %v2616
        %2618 = vmatprep.subr.mxu0 %v2617
        %v2619 = vand.u32 %v581, 4294901760
        %v2620 = vsub.f32 %v581, %v2619
        %2621 = vmatpush1.msra.mxu0 %v2620
        %v2622 = vand.u32 %v584, 4294901760
        %v2623 = vsub.f32 %v584, %v2622
        %2624 = vmatprep.subr.mxu0 %v2623
        %v2625 = vand.u32 %v583, 4294901760
        %v2626 = vsub.f32 %v583, %v2625
        %2627 = vmatpush1.msra.mxu0 %v2626
        %v2628 = vand.u32 %v586, 4294901760
        %v2629 = vsub.f32 %v586, %v2628
        %2630 = vmatprep.subr.mxu0 %v2629
        %v2631 = vand.u32 %v585, 4294901760
        %v2632 = vsub.f32 %v585, %v2631
        %2633 = vmatpush1.msra.mxu0 %v2632
        %v2634 = vand.u32 %v588, 4294901760
        %v2635 = vsub.f32 %v588, %v2634
        %2636 = vmatprep.subr.mxu0 %v2635
        %v2637 = vand.u32 %v587, 4294901760
        %v2638 = vsub.f32 %v587, %v2637
        %2639 = vmatpush1.msra.mxu0 %v2638
        %v2640 = vand.u32 %v590, 4294901760
        %v2641 = vsub.f32 %v590, %v2640
        %2642 = vmatprep.subr.mxu0 %v2641
        %v2643 = vand.u32 %v589, 4294901760
        %v2644 = vsub.f32 %v589, %v2643
        %2645 = vmatpush1.msra.mxu0 %v2644
        %v2646 = vand.u32 %v592, 4294901760
        %v2647 = vsub.f32 %v592, %v2646
        %2648 = vmatprep.subr.mxu0 %v2647
        %v2649 = vand.u32 %v591, 4294901760
        %v2650 = vsub.f32 %v591, %v2649
        %2651 = vmatpush1.msra.mxu0 %v2650
        %v2652 = vand.u32 %v594, 4294901760
        %v2653 = vsub.f32 %v594, %v2652
        %2654 = vmatprep.subr.mxu0 %v2653
        %v2655 = vand.u32 %v593, 4294901760
        %v2656 = vsub.f32 %v593, %v2655
        %2657 = vmatpush1.msra.mxu0 %v2656
        %v2658 = vand.u32 %v596, 4294901760
        %v2659 = vsub.f32 %v596, %v2658
        %2660 = vmatprep.subr.mxu0 %v2659
        %v2661 = vand.u32 %v595, 4294901760
        %v2662 = vsub.f32 %v595, %v2661
        %2663 = vmatpush1.msra.mxu0 %v2662
        %v2664 = vand.u32 %v598, 4294901760
        %v2665 = vsub.f32 %v598, %v2664
        %2666 = vmatprep.subr.mxu0 %v2665
        %v2667 = vand.u32 %v597, 4294901760
        %v2668 = vsub.f32 %v597, %v2667
        %2669 = vmatpush1.msra.mxu0 %v2668
        %v2670 = vand.u32 %v600, 4294901760
        %v2671 = vsub.f32 %v600, %v2670
        %2672 = vmatprep.subr.mxu0 %v2671
        %v2673 = vand.u32 %v599, 4294901760
        %v2674 = vsub.f32 %v599, %v2673
        %2675 = vmatpush1.msra.mxu0 %v2674
        %v2676 = vand.u32 %v602, 4294901760
        %v2677 = vsub.f32 %v602, %v2676
        %2678 = vmatprep.subr.mxu0 %v2677
        %v2679 = vand.u32 %v601, 4294901760
        %v2680 = vsub.f32 %v601, %v2679
        %2681 = vmatpush1.msra.mxu0 %v2680
        %v2682 = vand.u32 %v524, 4294901760
        %v2683 = vsub.f32 %v524, %v2682
        %2684 = vmatprep.mubr.f32.mxu0 %v2683
        %v2685 = vand.u32 %v523, 4294901760
        %v2686 = vsub.f32 %v523, %v2685
        %2687 = vmatmul.mubr.f32.gmra.mrb[0].mxu0 %v2686
        %v2688 = vpop.f32.mrb[0].mxu0
        %v2689 = vadd.f32 %v2486, %v2688
        %v2690 = vpop.f32.mrb[0].mxu0
        %v2691 = vadd.f32 %v2488, %v2690
        %2692 = vdwg.mxu0
        %v2693 = vand.u32 %v540, 4294901760
        %2694 = vmatprep.subr.mxu0 %v2693
        %v2695 = vand.u32 %v539, 4294901760
        %2696 = vmatpush1.msra.mxu0 %v2695
        %v2697 = vand.u32 %v542, 4294901760
        %2698 = vmatprep.subr.mxu0 %v2697
        %v2699 = vand.u32 %v541, 4294901760
        %2700 = vmatpush1.msra.mxu0 %v2699
        %v2701 = vand.u32 %v544, 4294901760
        %2702 = vmatprep.subr.mxu0 %v2701
        %v2703 = vand.u32 %v543, 4294901760
        %2704 = vmatpush1.msra.mxu0 %v2703
        %v2705 = vand.u32 %v546, 4294901760
        %2706 = vmatprep.subr.mxu0 %v2705
        %v2707 = vand.u32 %v545, 4294901760
        %2708 = vmatpush1.msra.mxu0 %v2707
        %v2709 = vand.u32 %v548, 4294901760
        %2710 = vmatprep.subr.mxu0 %v2709
        %v2711 = vand.u32 %v547, 4294901760
        %2712 = vmatpush1.msra.mxu0 %v2711
        %v2713 = vand.u32 %v550, 4294901760
        %2714 = vmatprep.subr.mxu0 %v2713
        %v2715 = vand.u32 %v549, 4294901760
        %2716 = vmatpush1.msra.mxu0 %v2715
        %v2717 = vand.u32 %v552, 4294901760
        %2718 = vmatprep.subr.mxu0 %v2717
        %v2719 = vand.u32 %v551, 4294901760
        %2720 = vmatpush1.msra.mxu0 %v2719
        %v2721 = vand.u32 %v554, 4294901760
        %2722 = vmatprep.subr.mxu0 %v2721
        %v2723 = vand.u32 %v553, 4294901760
        %2724 = vmatpush1.msra.mxu0 %v2723
        %v2725 = vand.u32 %v556, 4294901760
        %2726 = vmatprep.subr.mxu0 %v2725
        %v2727 = vand.u32 %v555, 4294901760
        %2728 = vmatpush1.msra.mxu0 %v2727
        %v2729 = vand.u32 %v558, 4294901760
        %2730 = vmatprep.subr.mxu0 %v2729
        %v2731 = vand.u32 %v557, 4294901760
        %2732 = vmatpush1.msra.mxu0 %v2731
        %v2733 = vand.u32 %v560, 4294901760
        %2734 = vmatprep.subr.mxu0 %v2733
        %v2735 = vand.u32 %v559, 4294901760
        %2736 = vmatpush1.msra.mxu0 %v2735
        %v2737 = vand.u32 %v562, 4294901760
        %2738 = vmatprep.subr.mxu0 %v2737
        %v2739 = vand.u32 %v561, 4294901760
        %2740 = vmatpush1.msra.mxu0 %v2739
        %v2741 = vand.u32 %v564, 4294901760
        %2742 = vmatprep.subr.mxu0 %v2741
        %v2743 = vand.u32 %v563, 4294901760
        %2744 = vmatpush1.msra.mxu0 %v2743
        %v2745 = vand.u32 %v566, 4294901760
        %2746 = vmatprep.subr.mxu0 %v2745
        %v2747 = vand.u32 %v565, 4294901760
        %2748 = vmatpush1.msra.mxu0 %v2747
        %v2749 = vand.u32 %v568, 4294901760
        %2750 = vmatprep.subr.mxu0 %v2749
        %v2751 = vand.u32 %v567, 4294901760
        %2752 = vmatpush1.msra.mxu0 %v2751
        %v2753 = vand.u32 %v570, 4294901760
        %2754 = vmatprep.subr.mxu0 %v2753
        %v2755 = vand.u32 %v569, 4294901760
        %2756 = vmatpush1.msra.mxu0 %v2755
        %v2757 = vand.u32 %v572, 4294901760
        %2758 = vmatprep.subr.mxu0 %v2757
        %v2759 = vand.u32 %v571, 4294901760
        %2760 = vmatpush1.msra.mxu0 %v2759
        %v2761 = vand.u32 %v574, 4294901760
        %2762 = vmatprep.subr.mxu0 %v2761
        %v2763 = vand.u32 %v573, 4294901760
        %2764 = vmatpush1.msra.mxu0 %v2763
        %v2765 = vand.u32 %v576, 4294901760
        %2766 = vmatprep.subr.mxu0 %v2765
        %v2767 = vand.u32 %v575, 4294901760
        %2768 = vmatpush1.msra.mxu0 %v2767
        %v2769 = vand.u32 %v578, 4294901760
        %2770 = vmatprep.subr.mxu0 %v2769
        %v2771 = vand.u32 %v577, 4294901760
        %2772 = vmatpush1.msra.mxu0 %v2771
        %v2773 = vand.u32 %v580, 4294901760
        %2774 = vmatprep.subr.mxu0 %v2773
        %v2775 = vand.u32 %v579, 4294901760
        %2776 = vmatpush1.msra.mxu0 %v2775
        %v2777 = vand.u32 %v582, 4294901760
        %2778 = vmatprep.subr.mxu0 %v2777
        %v2779 = vand.u32 %v581, 4294901760
        %2780 = vmatpush1.msra.mxu0 %v2779
        %v2781 = vand.u32 %v584, 4294901760
        %2782 = vmatprep.subr.mxu0 %v2781
        %v2783 = vand.u32 %v583, 4294901760
        %2784 = vmatpush1.msra.mxu0 %v2783
        %v2785 = vand.u32 %v586, 4294901760
        %2786 = vmatprep.subr.mxu0 %v2785
        %v2787 = vand.u32 %v585, 4294901760
        %2788 = vmatpush1.msra.mxu0 %v2787
        %v2789 = vand.u32 %v588, 4294901760
        %2790 = vmatprep.subr.mxu0 %v2789
        %v2791 = vand.u32 %v587, 4294901760
        %2792 = vmatpush1.msra.mxu0 %v2791
        %v2793 = vand.u32 %v590, 4294901760
        %2794 = vmatprep.subr.mxu0 %v2793
        %v2795 = vand.u32 %v589, 4294901760
        %2796 = vmatpush1.msra.mxu0 %v2795
        %v2797 = vand.u32 %v592, 4294901760
        %2798 = vmatprep.subr.mxu0 %v2797
        %v2799 = vand.u32 %v591, 4294901760
        %2800 = vmatpush1.msra.mxu0 %v2799
        %v2801 = vand.u32 %v594, 4294901760
        %2802 = vmatprep.subr.mxu0 %v2801
        %v2803 = vand.u32 %v593, 4294901760
        %2804 = vmatpush1.msra.mxu0 %v2803
        %v2805 = vand.u32 %v596, 4294901760
        %2806 = vmatprep.subr.mxu0 %v2805
        %v2807 = vand.u32 %v595, 4294901760
        %2808 = vmatpush1.msra.mxu0 %v2807
        %v2809 = vand.u32 %v598, 4294901760
        %2810 = vmatprep.subr.mxu0 %v2809
        %v2811 = vand.u32 %v597, 4294901760
        %2812 = vmatpush1.msra.mxu0 %v2811
        %v2813 = vand.u32 %v600, 4294901760
        %2814 = vmatprep.subr.mxu0 %v2813
        %v2815 = vand.u32 %v599, 4294901760
        %2816 = vmatpush1.msra.mxu0 %v2815
        %v2817 = vand.u32 %v602, 4294901760
        %2818 = vmatprep.subr.mxu0 %v2817
        %v2819 = vand.u32 %v601, 4294901760
        %2820 = vmatpush1.msra.mxu0 %v2819
        %v2821 = vand.u32 %v524, 4294901760
        %v2822 = vsub.f32 %v524, %v2821
        %v2823 = vand.u32 %v2822, 4294901760
        %2824 = vmatprep.mubr.f32.mxu0 %v2823
        %v2825 = vand.u32 %v523, 4294901760
        %v2826 = vsub.f32 %v523, %v2825
        %v2827 = vand.u32 %v2826, 4294901760
        %2828 = vmatmul.mubr.f32.gmra.mrb[0].mxu0 %v2827
        %v2829 = vpop.f32.mrb[0].mxu0
        %v2830 = vadd.f32 %v2689, %v2829
        %v2831 = vpop.f32.mrb[0].mxu0
        %v2832 = vadd.f32 %v2691, %v2831
        %2833 = vdwg.mxu0
        %v2834 = vand.u32 %v540, 4294901760
        %v2835 = vsub.f32 %v540, %v2834
        %v2836 = vand.u32 %v2835, 4294901760
        %2837 = vmatprep.subr.mxu0 %v2836
        %v2838 = vand.u32 %v539, 4294901760
        %v2839 = vsub.f32 %v539, %v2838
        %v2840 = vand.u32 %v2839, 4294901760
        %2841 = vmatpush1.msra.mxu0 %v2840
        %v2842 = vand.u32 %v542, 4294901760
        %v2843 = vsub.f32 %v542, %v2842
        %v2844 = vand.u32 %v2843, 4294901760
        %2845 = vmatprep.subr.mxu0 %v2844
        %v2846 = vand.u32 %v541, 4294901760
        %v2847 = vsub.f32 %v541, %v2846
        %v2848 = vand.u32 %v2847, 4294901760
        %2849 = vmatpush1.msra.mxu0 %v2848
        %v2850 = vand.u32 %v544, 4294901760
        %v2851 = vsub.f32 %v544, %v2850
        %v2852 = vand.u32 %v2851, 4294901760
        %2853 = vmatprep.subr.mxu0 %v2852
        %v2854 = vand.u32 %v543, 4294901760
        %v2855 = vsub.f32 %v543, %v2854
        %v2856 = vand.u32 %v2855, 4294901760
        %2857 = vmatpush1.msra.mxu0 %v2856
        %v2858 = vand.u32 %v546, 4294901760
        %v2859 = vsub.f32 %v546, %v2858
        %v2860 = vand.u32 %v2859, 4294901760
        %2861 = vmatprep.subr.mxu0 %v2860
        %v2862 = vand.u32 %v545, 4294901760
        %v2863 = vsub.f32 %v545, %v2862
        %v2864 = vand.u32 %v2863, 4294901760
        %2865 = vmatpush1.msra.mxu0 %v2864
        %v2866 = vand.u32 %v548, 4294901760
        %v2867 = vsub.f32 %v548, %v2866
        %v2868 = vand.u32 %v2867, 4294901760
        %2869 = vmatprep.subr.mxu0 %v2868
        %v2870 = vand.u32 %v547, 4294901760
        %v2871 = vsub.f32 %v547, %v2870
        %v2872 = vand.u32 %v2871, 4294901760
        %2873 = vmatpush1.msra.mxu0 %v2872
        %v2874 = vand.u32 %v550, 4294901760
        %v2875 = vsub.f32 %v550, %v2874
        %v2876 = vand.u32 %v2875, 4294901760
        %2877 = vmatprep.subr.mxu0 %v2876
        %v2878 = vand.u32 %v549, 4294901760
        %v2879 = vsub.f32 %v549, %v2878
        %v2880 = vand.u32 %v2879, 4294901760
        %2881 = vmatpush1.msra.mxu0 %v2880
        %v2882 = vand.u32 %v552, 4294901760
        %v2883 = vsub.f32 %v552, %v2882
        %v2884 = vand.u32 %v2883, 4294901760
        %2885 = vmatprep.subr.mxu0 %v2884
        %v2886 = vand.u32 %v551, 4294901760
        %v2887 = vsub.f32 %v551, %v2886
        %v2888 = vand.u32 %v2887, 4294901760
        %2889 = vmatpush1.msra.mxu0 %v2888
        %v2890 = vand.u32 %v554, 4294901760
        %v2891 = vsub.f32 %v554, %v2890
        %v2892 = vand.u32 %v2891, 4294901760
        %2893 = vmatprep.subr.mxu0 %v2892
        %v2894 = vand.u32 %v553, 4294901760
        %v2895 = vsub.f32 %v553, %v2894
        %v2896 = vand.u32 %v2895, 4294901760
        %2897 = vmatpush1.msra.mxu0 %v2896
        %v2898 = vand.u32 %v556, 4294901760
        %v2899 = vsub.f32 %v556, %v2898
        %v2900 = vand.u32 %v2899, 4294901760
        %2901 = vmatprep.subr.mxu0 %v2900
        %v2902 = vand.u32 %v555, 4294901760
        %v2903 = vsub.f32 %v555, %v2902
        %v2904 = vand.u32 %v2903, 4294901760
        %2905 = vmatpush1.msra.mxu0 %v2904
        %v2906 = vand.u32 %v558, 4294901760
        %v2907 = vsub.f32 %v558, %v2906
        %v2908 = vand.u32 %v2907, 4294901760
        %2909 = vmatprep.subr.mxu0 %v2908
        %v2910 = vand.u32 %v557, 4294901760
        %v2911 = vsub.f32 %v557, %v2910
        %v2912 = vand.u32 %v2911, 4294901760
        %2913 = vmatpush1.msra.mxu0 %v2912
        %v2914 = vand.u32 %v560, 4294901760
        %v2915 = vsub.f32 %v560, %v2914
        %v2916 = vand.u32 %v2915, 4294901760
        %2917 = vmatprep.subr.mxu0 %v2916
        %v2918 = vand.u32 %v559, 4294901760
        %v2919 = vsub.f32 %v559, %v2918
        %v2920 = vand.u32 %v2919, 4294901760
        %2921 = vmatpush1.msra.mxu0 %v2920
        %v2922 = vand.u32 %v562, 4294901760
        %v2923 = vsub.f32 %v562, %v2922
        %v2924 = vand.u32 %v2923, 4294901760
        %2925 = vmatprep.subr.mxu0 %v2924
        %v2926 = vand.u32 %v561, 4294901760
        %v2927 = vsub.f32 %v561, %v2926
        %v2928 = vand.u32 %v2927, 4294901760
        %2929 = vmatpush1.msra.mxu0 %v2928
        %v2930 = vand.u32 %v564, 4294901760
        %v2931 = vsub.f32 %v564, %v2930
        %v2932 = vand.u32 %v2931, 4294901760
        %2933 = vmatprep.subr.mxu0 %v2932
        %v2934 = vand.u32 %v563, 4294901760
        %v2935 = vsub.f32 %v563, %v2934
        %v2936 = vand.u32 %v2935, 4294901760
        %2937 = vmatpush1.msra.mxu0 %v2936
        %v2938 = vand.u32 %v566, 4294901760
        %v2939 = vsub.f32 %v566, %v2938
        %v2940 = vand.u32 %v2939, 4294901760
        %2941 = vmatprep.subr.mxu0 %v2940
        %v2942 = vand.u32 %v565, 4294901760
        %v2943 = vsub.f32 %v565, %v2942
        %v2944 = vand.u32 %v2943, 4294901760
        %2945 = vmatpush1.msra.mxu0 %v2944
        %v2946 = vand.u32 %v568, 4294901760
        %v2947 = vsub.f32 %v568, %v2946
        %v2948 = vand.u32 %v2947, 4294901760
        %2949 = vmatprep.subr.mxu0 %v2948
        %v2950 = vand.u32 %v567, 4294901760
        %v2951 = vsub.f32 %v567, %v2950
        %v2952 = vand.u32 %v2951, 4294901760
        %2953 = vmatpush1.msra.mxu0 %v2952
        %v2954 = vand.u32 %v570, 4294901760
        %v2955 = vsub.f32 %v570, %v2954
        %v2956 = vand.u32 %v2955, 4294901760
        %2957 = vmatprep.subr.mxu0 %v2956
        %v2958 = vand.u32 %v569, 4294901760
        %v2959 = vsub.f32 %v569, %v2958
        %v2960 = vand.u32 %v2959, 4294901760
        %2961 = vmatpush1.msra.mxu0 %v2960
        %v2962 = vand.u32 %v572, 4294901760
        %v2963 = vsub.f32 %v572, %v2962
        %v2964 = vand.u32 %v2963, 4294901760
        %2965 = vmatprep.subr.mxu0 %v2964
        %v2966 = vand.u32 %v571, 4294901760
        %v2967 = vsub.f32 %v571, %v2966
        %v2968 = vand.u32 %v2967, 4294901760
        %2969 = vmatpush1.msra.mxu0 %v2968
        %v2970 = vand.u32 %v574, 4294901760
        %v2971 = vsub.f32 %v574, %v2970
        %v2972 = vand.u32 %v2971, 4294901760
        %2973 = vmatprep.subr.mxu0 %v2972
        %v2974 = vand.u32 %v573, 4294901760
        %v2975 = vsub.f32 %v573, %v2974
        %v2976 = vand.u32 %v2975, 4294901760
        %2977 = vmatpush1.msra.mxu0 %v2976
        %v2978 = vand.u32 %v576, 4294901760
        %v2979 = vsub.f32 %v576, %v2978
        %v2980 = vand.u32 %v2979, 4294901760
        %2981 = vmatprep.subr.mxu0 %v2980
        %v2982 = vand.u32 %v575, 4294901760
        %v2983 = vsub.f32 %v575, %v2982
        %v2984 = vand.u32 %v2983, 4294901760
        %2985 = vmatpush1.msra.mxu0 %v2984
        %v2986 = vand.u32 %v578, 4294901760
        %v2987 = vsub.f32 %v578, %v2986
        %v2988 = vand.u32 %v2987, 4294901760
        %2989 = vmatprep.subr.mxu0 %v2988
        %v2990 = vand.u32 %v577, 4294901760
        %v2991 = vsub.f32 %v577, %v2990
        %v2992 = vand.u32 %v2991, 4294901760
        %2993 = vmatpush1.msra.mxu0 %v2992
        %v2994 = vand.u32 %v580, 4294901760
        %v2995 = vsub.f32 %v580, %v2994
        %v2996 = vand.u32 %v2995, 4294901760
        %2997 = vmatprep.subr.mxu0 %v2996
        %v2998 = vand.u32 %v579, 4294901760
        %v2999 = vsub.f32 %v579, %v2998
        %v3000 = vand.u32 %v2999, 4294901760
        %3001 = vmatpush1.msra.mxu0 %v3000
        %v3002 = vand.u32 %v582, 4294901760
        %v3003 = vsub.f32 %v582, %v3002
        %v3004 = vand.u32 %v3003, 4294901760
        %3005 = vmatprep.subr.mxu0 %v3004
        %v3006 = vand.u32 %v581, 4294901760
        %v3007 = vsub.f32 %v581, %v3006
        %v3008 = vand.u32 %v3007, 4294901760
        %3009 = vmatpush1.msra.mxu0 %v3008
        %v3010 = vand.u32 %v584, 4294901760
        %v3011 = vsub.f32 %v584, %v3010
        %v3012 = vand.u32 %v3011, 4294901760
        %3013 = vmatprep.subr.mxu0 %v3012
        %v3014 = vand.u32 %v583, 4294901760
        %v3015 = vsub.f32 %v583, %v3014
        %v3016 = vand.u32 %v3015, 4294901760
        %3017 = vmatpush1.msra.mxu0 %v3016
        %v3018 = vand.u32 %v586, 4294901760
        %v3019 = vsub.f32 %v586, %v3018
        %v3020 = vand.u32 %v3019, 4294901760
        %3021 = vmatprep.subr.mxu0 %v3020
        %v3022 = vand.u32 %v585, 4294901760
        %v3023 = vsub.f32 %v585, %v3022
        %v3024 = vand.u32 %v3023, 4294901760
        %3025 = vmatpush1.msra.mxu0 %v3024
        %v3026 = vand.u32 %v588, 4294901760
        %v3027 = vsub.f32 %v588, %v3026
        %v3028 = vand.u32 %v3027, 4294901760
        %3029 = vmatprep.subr.mxu0 %v3028
        %v3030 = vand.u32 %v587, 4294901760
        %v3031 = vsub.f32 %v587, %v3030
        %v3032 = vand.u32 %v3031, 4294901760
        %3033 = vmatpush1.msra.mxu0 %v3032
        %v3034 = vand.u32 %v590, 4294901760
        %v3035 = vsub.f32 %v590, %v3034
        %v3036 = vand.u32 %v3035, 4294901760
        %3037 = vmatprep.subr.mxu0 %v3036
        %v3038 = vand.u32 %v589, 4294901760
        %v3039 = vsub.f32 %v589, %v3038
        %v3040 = vand.u32 %v3039, 4294901760
        %3041 = vmatpush1.msra.mxu0 %v3040
        %v3042 = vand.u32 %v592, 4294901760
        %v3043 = vsub.f32 %v592, %v3042
        %v3044 = vand.u32 %v3043, 4294901760
        %3045 = vmatprep.subr.mxu0 %v3044
        %v3046 = vand.u32 %v591, 4294901760
        %v3047 = vsub.f32 %v591, %v3046
        %v3048 = vand.u32 %v3047, 4294901760
        %3049 = vmatpush1.msra.mxu0 %v3048
        %v3050 = vand.u32 %v594, 4294901760
        %v3051 = vsub.f32 %v594, %v3050
        %v3052 = vand.u32 %v3051, 4294901760
        %3053 = vmatprep.subr.mxu0 %v3052
        %v3054 = vand.u32 %v593, 4294901760
        %v3055 = vsub.f32 %v593, %v3054
        %v3056 = vand.u32 %v3055, 4294901760
        %3057 = vmatpush1.msra.mxu0 %v3056
        %v3058 = vand.u32 %v596, 4294901760
        %v3059 = vsub.f32 %v596, %v3058
        %v3060 = vand.u32 %v3059, 4294901760
        %3061 = vmatprep.subr.mxu0 %v3060
        %v3062 = vand.u32 %v595, 4294901760
        %v3063 = vsub.f32 %v595, %v3062
        %v3064 = vand.u32 %v3063, 4294901760
        %3065 = vmatpush1.msra.mxu0 %v3064
        %v3066 = vand.u32 %v598, 4294901760
        %v3067 = vsub.f32 %v598, %v3066
        %v3068 = vand.u32 %v3067, 4294901760
        %3069 = vmatprep.subr.mxu0 %v3068
        %v3070 = vand.u32 %v597, 4294901760
        %v3071 = vsub.f32 %v597, %v3070
        %v3072 = vand.u32 %v3071, 4294901760
        %3073 = vmatpush1.msra.mxu0 %v3072
        %v3074 = vand.u32 %v600, 4294901760
        %v3075 = vsub.f32 %v600, %v3074
        %v3076 = vand.u32 %v3075, 4294901760
        %3077 = vmatprep.subr.mxu0 %v3076
        %v3078 = vand.u32 %v599, 4294901760
        %v3079 = vsub.f32 %v599, %v3078
        %v3080 = vand.u32 %v3079, 4294901760
        %3081 = vmatpush1.msra.mxu0 %v3080
        %v3082 = vand.u32 %v602, 4294901760
        %v3083 = vsub.f32 %v602, %v3082
        %v3084 = vand.u32 %v3083, 4294901760
        %3085 = vmatprep.subr.mxu0 %v3084
        %v3086 = vand.u32 %v601, 4294901760
        %v3087 = vsub.f32 %v601, %v3086
        %v3088 = vand.u32 %v3087, 4294901760
        %3089 = vmatpush1.msra.mxu0 %v3088
        %v3090 = vand.u32 %v524, 4294901760
        %3091 = vmatprep.mubr.f32.mxu0 %v3090
        %v3092 = vand.u32 %v523, 4294901760
        %3093 = vmatmul.mubr.f32.gmra.mrb[0].mxu0 %v3092
        %v3094 = vpop.f32.mrb[0].mxu0
        %v3095 = vadd.f32 %v2830, %v3094
        %v3096 = vpop.f32.mrb[0].mxu0
        %v3097 = vadd.f32 %v2832, %v3096
        %3098 = vdwg.mxu0
        %v3099 = vand.u32 %v540, 4294901760
        %3100 = vmatprep.subr.mxu0 %v3099
        %v3101 = vand.u32 %v539, 4294901760
        %3102 = vmatpush1.msra.mxu0 %v3101
        %v3103 = vand.u32 %v542, 4294901760
        %3104 = vmatprep.subr.mxu0 %v3103
        %v3105 = vand.u32 %v541, 4294901760
        %3106 = vmatpush1.msra.mxu0 %v3105
        %v3107 = vand.u32 %v544, 4294901760
        %3108 = vmatprep.subr.mxu0 %v3107
        %v3109 = vand.u32 %v543, 4294901760
        %3110 = vmatpush1.msra.mxu0 %v3109
        %v3111 = vand.u32 %v546, 4294901760
        %3112 = vmatprep.subr.mxu0 %v3111
        %v3113 = vand.u32 %v545, 4294901760
        %3114 = vmatpush1.msra.mxu0 %v3113
        %v3115 = vand.u32 %v548, 4294901760
        %3116 = vmatprep.subr.mxu0 %v3115
        %v3117 = vand.u32 %v547, 4294901760
        %3118 = vmatpush1.msra.mxu0 %v3117
        %v3119 = vand.u32 %v550, 4294901760
        %3120 = vmatprep.subr.mxu0 %v3119
        %v3121 = vand.u32 %v549, 4294901760
        %3122 = vmatpush1.msra.mxu0 %v3121
        %v3123 = vand.u32 %v552, 4294901760
        %3124 = vmatprep.subr.mxu0 %v3123
        %v3125 = vand.u32 %v551, 4294901760
        %3126 = vmatpush1.msra.mxu0 %v3125
        %v3127 = vand.u32 %v554, 4294901760
        %3128 = vmatprep.subr.mxu0 %v3127
        %v3129 = vand.u32 %v553, 4294901760
        %3130 = vmatpush1.msra.mxu0 %v3129
        %v3131 = vand.u32 %v556, 4294901760
        %3132 = vmatprep.subr.mxu0 %v3131
        %v3133 = vand.u32 %v555, 4294901760
        %3134 = vmatpush1.msra.mxu0 %v3133
        %v3135 = vand.u32 %v558, 4294901760
        %3136 = vmatprep.subr.mxu0 %v3135
        %v3137 = vand.u32 %v557, 4294901760
        %3138 = vmatpush1.msra.mxu0 %v3137
        %v3139 = vand.u32 %v560, 4294901760
        %3140 = vmatprep.subr.mxu0 %v3139
        %v3141 = vand.u32 %v559, 4294901760
        %3142 = vmatpush1.msra.mxu0 %v3141
        %v3143 = vand.u32 %v562, 4294901760
        %3144 = vmatprep.subr.mxu0 %v3143
        %v3145 = vand.u32 %v561, 4294901760
        %3146 = vmatpush1.msra.mxu0 %v3145
        %v3147 = vand.u32 %v564, 4294901760
        %3148 = vmatprep.subr.mxu0 %v3147
        %v3149 = vand.u32 %v563, 4294901760
        %3150 = vmatpush1.msra.mxu0 %v3149
        %v3151 = vand.u32 %v566, 4294901760
        %3152 = vmatprep.subr.mxu0 %v3151
        %v3153 = vand.u32 %v565, 4294901760
        %3154 = vmatpush1.msra.mxu0 %v3153
        %v3155 = vand.u32 %v568, 4294901760
        %3156 = vmatprep.subr.mxu0 %v3155
        %v3157 = vand.u32 %v567, 4294901760
        %3158 = vmatpush1.msra.mxu0 %v3157
        %v3159 = vand.u32 %v570, 4294901760
        %3160 = vmatprep.subr.mxu0 %v3159
        %v3161 = vand.u32 %v569, 4294901760
        %3162 = vmatpush1.msra.mxu0 %v3161
        %v3163 = vand.u32 %v572, 4294901760
        %3164 = vmatprep.subr.mxu0 %v3163
        %v3165 = vand.u32 %v571, 4294901760
        %3166 = vmatpush1.msra.mxu0 %v3165
        %v3167 = vand.u32 %v574, 4294901760
        %3168 = vmatprep.subr.mxu0 %v3167
        %v3169 = vand.u32 %v573, 4294901760
        %3170 = vmatpush1.msra.mxu0 %v3169
        %v3171 = vand.u32 %v576, 4294901760
        %3172 = vmatprep.subr.mxu0 %v3171
        %v3173 = vand.u32 %v575, 4294901760
        %3174 = vmatpush1.msra.mxu0 %v3173
        %v3175 = vand.u32 %v578, 4294901760
        %3176 = vmatprep.subr.mxu0 %v3175
        %v3177 = vand.u32 %v577, 4294901760
        %3178 = vmatpush1.msra.mxu0 %v3177
        %v3179 = vand.u32 %v580, 4294901760
        %3180 = vmatprep.subr.mxu0 %v3179
        %v3181 = vand.u32 %v579, 4294901760
        %3182 = vmatpush1.msra.mxu0 %v3181
        %v3183 = vand.u32 %v582, 4294901760
        %3184 = vmatprep.subr.mxu0 %v3183
        %v3185 = vand.u32 %v581, 4294901760
        %3186 = vmatpush1.msra.mxu0 %v3185
        %v3187 = vand.u32 %v584, 4294901760
        %3188 = vmatprep.subr.mxu0 %v3187
        %v3189 = vand.u32 %v583, 4294901760
        %3190 = vmatpush1.msra.mxu0 %v3189
        %v3191 = vand.u32 %v586, 4294901760
        %3192 = vmatprep.subr.mxu0 %v3191
        %v3193 = vand.u32 %v585, 4294901760
        %3194 = vmatpush1.msra.mxu0 %v3193
        %v3195 = vand.u32 %v588, 4294901760
        %3196 = vmatprep.subr.mxu0 %v3195
        %v3197 = vand.u32 %v587, 4294901760
        %3198 = vmatpush1.msra.mxu0 %v3197
        %v3199 = vand.u32 %v590, 4294901760
        %3200 = vmatprep.subr.mxu0 %v3199
        %v3201 = vand.u32 %v589, 4294901760
        %3202 = vmatpush1.msra.mxu0 %v3201
        %v3203 = vand.u32 %v592, 4294901760
        %3204 = vmatprep.subr.mxu0 %v3203
        %v3205 = vand.u32 %v591, 4294901760
        %3206 = vmatpush1.msra.mxu0 %v3205
        %v3207 = vand.u32 %v594, 4294901760
        %3208 = vmatprep.subr.mxu0 %v3207
        %v3209 = vand.u32 %v593, 4294901760
        %3210 = vmatpush1.msra.mxu0 %v3209
        %v3211 = vand.u32 %v596, 4294901760
        %3212 = vmatprep.subr.mxu0 %v3211
        %v3213 = vand.u32 %v595, 4294901760
        %3214 = vmatpush1.msra.mxu0 %v3213
        %v3215 = vand.u32 %v598, 4294901760
        %3216 = vmatprep.subr.mxu0 %v3215
        %v3217 = vand.u32 %v597, 4294901760
        %3218 = vmatpush1.msra.mxu0 %v3217
        %v3219 = vand.u32 %v600, 4294901760
        %3220 = vmatprep.subr.mxu0 %v3219
        %v3221 = vand.u32 %v599, 4294901760
        %3222 = vmatpush1.msra.mxu0 %v3221
        %v3223 = vand.u32 %v602, 4294901760
        %3224 = vmatprep.subr.mxu0 %v3223
        %v3225 = vand.u32 %v601, 4294901760
        %3226 = vmatpush1.msra.mxu0 %v3225
        %v3227 = vand.u32 %v524, 4294901760
        %3228 = vmatprep.mubr.f32.mxu0 %v3227
        %v3229 = vand.u32 %v523, 4294901760
        %3230 = vmatmul.mubr.f32.gmra.mrb[0].mxu0 %v3229
        %v3231 = vpop.f32.mrb[0].mxu0
        %v3232 = vadd.f32 %v3095, %v3231
        %v3233 = vpop.f32.mrb[0].mxu0
        %v3234 = vadd.f32 %v3097, %v3233
        %3235 = vdwg.mxu0
        %s3236 = sld [smem:[#allocation2]]
        %v3237 = vstv %s3236
        %v3238 = vadd.f32 %v3232, %v3237
        %v3239 = vadd.f32 %v3234, %v3237
        %v3240 = vxor.u32 %v3238, 2147483648
        %v3241 = vxor.u32 %v3239, 2147483648
        %v3242 = vmul.f32 %v3240, 1.442695
        %v3243 = vpow.pop %v3242
        %v3244 = vmul.f32 %v3241, 1.442695
        %v3245 = vpow.pop %v3244
        %v3246 = vadd.f32 %v3243, 1.0
        %v3247 = vadd.f32 %v3245, 1.0
        %v3248 = vrcp.pop %v3246
        %v3249 = vmul.f32 1.0, %v3248
        %v3250 = vrcp.pop %v3247
        %v3251 = vmul.f32 1.0, %v3250
        %v3252 = vlaneseq
        %v3253 = vshrl.u32 %v3252, 7
        %v3254 = vsub.s32 0, %v3253
        %v3255 = vrot.slane %v3249, %v3254
        %v3256 = vlaneseq
        %v3257 = vshrl.u32 %v3256, 7
        %v3258 = vsub.s32 0, %v3257
        %v3259 = vrot.slane %v3251, %v3258
        %v3262 = vcombine.low %v3255, %v3259
        %v3264 = vmul.f32 %v503, %v3262
        %v3266 = vcombine.high %v3264, %v3264
        %v3268 = vsel %vm507, %v3264, 0.0
        %v3269 = vsel %vm507, %v3266, 0.0
        %v3270 = vadd.f32 %v3268, %v3269
        %3271 = vadd.xlane.f32.xlu0 %v3270
        %v3272 = vpop.xlane.xlu0 %3271
        %v3273 = vrcp.pop 256.0
        %v3274 = vmul.f32 %v3272, %v3273
        %v3275 = vsel %vm507, %v3264, -inf
        %v3276 = vsel %vm507, %v3266, -inf
        %v3277 = vmax.f32 %v3275, %v3276
        %3278 = vmax.xlane.f32.xlu0 %v3277
        %v3279 = vpop.xlane.xlu0 %3278
        %v3280 = vld [vmem:[%s5] sm:$0xf]
        %v3281 = vmul.f32 %v3280, %v3274
        %s3282 = scalar_lea.vmem %s5, 4
        %v3283 = vld [vmem:[%s3282] sm:$0xf]
        %v3284 = vmul.f32 %v3283, %v3279
        %v3285 = vadd.f32 %v3281, %v3284
        %vm3286 = vcmask 11264
        %v3287 = vsel %vm3286, %v3285, 0.0
        %v3288 = vrot.slane %v3287, 4
        %v3289 = vadd.f32 %v3287, %v3288
        %v3290 = vrot.slane %v3289, 2
        %v3291 = vadd.f32 %v3289, %v3290
        %v3292 = vrot.slane %v3291, 1
        %v3293 = vadd.f32 %v3291, %v3292
        %v3294 = vld [vmem:[%s6] sm:$0x1]
        %v3295 = vadd.f32 %v3293, %v3294
        %v3296 = vmax.f32 %v3295, 0.0
        %v3297 = vld [vmem:[%s7] sm:$0xf]
        %v3298 = vlaneseq
        %v3299 = vshrl.u32 %v3298, 7
        %v3300 = vsub.s32 0, %v3299
        %v3301 = vrot.slane %v3296, %v3300
        %v3302 = vmul.f32 %v3297, %v3301
        %v3303 = vsel %vm3286, %v3302, 0.0
        %3304 = vadd.xlane.f32.xlu0 %v3303
        %v3305 = vpop.xlane.xlu0 %3304
        %v3306 = vld [vmem:[%s8] sm:$0xf]
        %v3307 = vadd.f32 %v3305, %v3306
        %v3308 = vxor.u32 %v3307, 2147483648
        %v3309 = vmul.f32 %v3308, 1.442695
        %v3310 = vpow.pop %v3309
        %v3311 = vadd.f32 %v3310, 1.0
        %v3312 = vrcp.pop %v3311
        %v3313 = vmul.f32 1.0, %v3312
        %3315 = vset.pattern.permute.xlu0 0
        %3316 = vperm.xlu0 %3315, %v3313
        %v3317 = vpop.permute.xlu0 %3316
        %v3319 = vunpack.c.l.s4 839922192
        %v3320 = vunpack.c.0.s8 %v3319
        %v3321 = vlaneseq
        %v3322 = vshrl.u32 %v3321, 7
        %v3323 = vsub.s32 %v3320, %v3322
        %v3324 = vrot.slane %v3317, %v3323
        %v3326 = vmul.f32 %v3264, %v3324
        %3327 = vst [vmem:[%s356] sm:$0xff] %v3326
        %s3328 = sand.u32 %s228, 1
        %s3329 = scalar_lea.sflag [#allocation5], %s3328
        %s3330 = sand.u32 %s228, 1
        %s3331 = smul.addr %s3330, 8
        %s3332 = scalar_lea.vmem [#allocation8], %s3331
        // Predicated region
        $region65: #{tpu_custom_call.1} parent=55 // pred_check
          %p3333 = pneg %p238
        $region66: #{tpu_custom_call.1} parent=55 // pred_check_branch
          %3335 = sbr.rel (%p3333) target = $region68
        $region67: #{tpu_custom_call.1} parent=55 // pred_region
          %s3337 = ssub.s32 128, 128
          %3338 = vsyncadd %s3329, %s3337
          %s3339 = smul.addr %s26, 2
          %s3340 = smul.addr %s3339, 64
          %s3341 = scalar_lea.hbm %s9, %s3340
          %s3343 = sshll.u32 %s3332, 4
          %s3344 = int_to_ptr.vmem [resolvable:$true] %s3343
          %3346 = dma.vmem_to_hbm [thread:$0]  %s3344, 128, %s3341, %s3329
        $region68: #{tpu_custom_call.1} parent=55 // pred_fallthru
          _
      $region56: #{tpu_custom_call.1} parent=5 // pred_fallthru
        _
      %p3347 = scmp.le.s32.totalorder 2, %s21
      // Predicated region
      $region69: #{tpu_custom_call.1} parent=5 // pred_check
        %p3348 = pneg %p3347
      $region70: #{tpu_custom_call.1} parent=5 // pred_check_branch
        %3350 = sbr.rel (%p3348) target = $region72
      $region71: #{tpu_custom_call.1} parent=5 // pred_region
        %s3351 = ssub.s32 %s21, 2
        // Predicated region
        $region73: #{tpu_custom_call.1} parent=71 // pred_check
          %p3352 = pneg %p244
        $region74: #{tpu_custom_call.1} parent=71 // pred_check_branch
          %3354 = sbr.rel (%p3352) target = $region76
        $region75: #{tpu_custom_call.1} parent=71 // pred_region
          %s3355 = sand.u32 %s229, 1
          %s3356 = scalar_lea.sflag [#allocation5], %s3355
          %s3357 = sand.u32 %s229, 1
          %s3358 = smul.addr %s3357, 8
          %s3359 = scalar_lea.vmem [#allocation8], %s3358
          %3360 = dma.done %s3356, 128
        $region76: #{tpu_custom_call.1} parent=71 // pred_fallthru
          _
      $region72: #{tpu_custom_call.1} parent=5 // pred_fallthru
        _
    $region6: #{tpu_custom_call.1} parent=1 // loop_footer
      %s25 = sadd.s32 1, %s21
    $region7: #{tpu_custom_call.1} parent=1 // loop_footer_branch
      %20 = sbr.rel target = $region3
    $region8: #{tpu_custom_call.1} parent=1 // loop_exit
      _
    %3361 = vsyncpa [#allocation4], 1
    %s3362 = scalar_lea.sflag [#allocation4], 1
    %3363 = vsyncpa %s3362, 1
    %3364 = vsyncpa [#allocation7], 1
    %3365 = vsyncpa [#allocation5], 1
    %s3366 = scalar_lea.sflag [#allocation5], 1
    %3367 = vsyncpa %s3366, 1

</llo_original>
